<compile_context>
chip_gen: v7x
topology: tpu7x:2x2x1
jax: 0.10.0
libtpu: 0.0.40
codegen_flags: <defaults>
</compile_context>

<pallas_src>
import functools

import jax
import jax.numpy as jnp
from jax.experimental import pallas as pl
from jax.experimental.pallas import tpu as pltpu

HIGHEST = jax.lax.Precision.HIGHEST
_NEG_INF = -1e30            # additive mask value (equivalent to -inf after softmax)
_LN_EPS = 1e-5              # PyTorch nn.LayerNorm default eps
_INV_SQRT2 = 0.7071067811865476
_VMEM_LIMIT = 48 * 1024 * 1024   # explicit: > v5e default (16 MiB), <= v7x budget (~48 MiB)


# ----------------------------------------------------------------------------- helpers
def _cparams(*semantics):
    return pltpu.CompilerParams(
        dimension_semantics=semantics,
        vmem_limit_bytes=_VMEM_LIMIT,
    )


def _row_tile(m, cap=512):
    """Largest tile (multiple of 8) <= cap dividing m, else m."""
    for t in (2048, 1024, 512, 256, 128, 64, 32, 16, 8):
        if t <= cap and m % t == 0:
            return t
    return m


def _seq_tile(n, cap=128):
    for t in (256, 128, 64, 32, 16, 8):
        if t <= cap and n % t == 0:
            return t
    return n   # TODO(synk): pad N when large and not a multiple of 8 (fine for small N)


def _hidden_tile(dh):
    for t in (512, 256, 128):
        if dh % t == 0:
            return t
    return dh


def _pad_rows(x, mult=8):
    m = x.shape[0]
    pad = (-m) % mult
    if pad:
        x = jnp.pad(x, ((0, pad), (0, 0)))
    return x, m


def _erf_f32(x):
    # Abramowitz & Stegun 7.1.26, |err| <= 1.5e-7 (matches PyTorch's erf-based GELU closely).
    a1, a2, a3, a4, a5 = (0.254829592, -0.284496736, 1.421413741,
                          -1.453152027, 1.061405429)
    p = 0.3275911
    sign = jnp.where(x < 0.0, -1.0, 1.0)
    ax = jnp.abs(x)
    t = 1.0 / (1.0 + p * ax)
    poly = ((((a5 * t + a4) * t + a3) * t + a2) * t + a1) * t
    return sign * (1.0 - poly * jnp.exp(-ax * ax))


def _gelu_exact(x):
    return 0.5 * x * (1.0 + _erf_f32(x * _INV_SQRT2))


def _coord_features(coords):
    # Used only by the pure-JAX reference.
    ci = coords[:, :, None, :]
    cj = coords[:, None, :, :]
    dpos = ci - cj
    if coords.shape[-1] > 1:
        dist = jnp.sqrt(jnp.sum(dpos * dpos, axis=-1, keepdims=True))
        dpos = jnp.concatenate([dpos, dist], axis=-1)
    return dpos


# ----------------------------------------------------------------------------- kernels
def _qkv_split_kernel(x_ref, w_ref, q_ref, k_ref, v_ref, *, nhead, dh):
    # x: (tn, d)   w: (d, 3d)   q/k/v out: (H, tn, dh)  -- heads split in-kernel (VMEM),
    # removing the three XLA relayout passes over the activations.
    y = jnp.dot(x_ref[...], w_ref[...], preferred_element_type=jnp.float32)
    d = nhead * dh
    for h in range(nhead):
        q_ref[h, :, :] = y[:, h * dh:(h + 1) * dh].astype(q_ref.dtype)
        k_ref[h, :, :] = y[:, d + h * dh:d + (h + 1) * dh].astype(k_ref.dtype)
        v_ref[h, :, :] = y[:, 2 * d + h * dh:2 * d + (h + 1) * dh].astype(v_ref.dtype)


def _attention_kernel(alpha_ref, b2_ref, q_ref, k_ref, v_ref, ci_ref, cjt_ref,
                      w1t_ref, b1_ref, w2_ref, mask_ref, o_ref,
                      m_sc, l_sc, acc_sc, *, scale, ns):
    # Per (batch, q-tile, kv-tile), all heads at once:
    #   q: (H, tq, dh)  k/v: (H, tk, dh)  ci: (tq, nd)  cjt: (nd, tk)  mask: (1, tk)
    H, tq, dh = q_ref.shape
    tk = k_ref.shape[1]
    qi = pl.program_id(1)
    ki = pl.program_id(2)

    @pl.when(ki == 0)
    def _init():
        m_sc[...] = jnp.full(m_sc.shape, -jnp.inf, m_sc.dtype)
        l_sc[...] = jnp.zeros(l_sc.shape, l_sc.dtype)
        acc_sc[...] = jnp.zeros(acc_sc.shape, acc_sc.dtype)

    q = q_ref[...]
    k = k_ref[...]
    v = v_ref[...]
    # Batched q k^T on the MXU, native operand dtype, f32 accumulation.
    s = jnp.einsum("hqd,hkd->hqk", q, k, preferred_element_type=jnp.float32) * scale

    # ---- fused relative-position bias MLP (hidden computed once, shared across heads) ----
    ci = ci_ref[...].astype(jnp.float32)      # (tq, nd)
    cjt = cjt_ref[...].astype(jnp.float32)    # (nd, tk)
    w1t = w1t_ref[...].astype(jnp.float32)    # (C, Df)
    b1 = b1_ref[...].astype(jnp.float32)      # (C, 1)
    w2 = w2_ref[...].astype(jnp.float32)      # (C, H)
    nd = ci.shape[-1]

    feats = [ci[:, f:f + 1] - cjt[f:f + 1, :] for f in range(nd)]   # (tq, tk) each
    if nd > 1:
        sq = feats[0] * feats[0]
        for f in range(1, nd):
            sq = sq + feats[f] * feats[f]
        feats.append(jnp.sqrt(sq))

    hidden = feats[0][:, None, :] * w1t[:, 0:1][None, :, :]         # (tq, C, tk)
    for f in range(1, len(feats)):
        hidden = hidden + feats[f][:, None, :] * w1t[:, f:f + 1][None, :, :]
    hidden = _gelu_exact(hidden + b1[None, :, :])

    bias_heads = []
    for h in range(H):
        bh = jnp.sum(hidden * w2[:, h:h + 1][None, :, :], axis=1) + b2_ref[h]
        bias_heads.append(bh)                                       # (tq, tk)
    bias = jnp.stack(bias_heads, axis=0)                            # (H, tq, tk)

    # zero bias at special-token rows/cols (fused keep-mask)
    row = qi * tq + jax.lax.broadcasted_iota(jnp.int32, (tq, tk), 0)
    col = ki * tk + jax.lax.broadcasted_iota(jnp.int32, (tq, tk), 1)
    keep = jnp.logical_and(row >= ns, col >= ns)
    bias = jnp.where(keep[None, :, :], bias, 0.0)

    logits = s + alpha_ref[0] * bias + mask_ref[...].astype(jnp.float32)[None, :, :]

    # ---- online softmax (flash-style) ----
    m_prev = m_sc[...]
    m_new = jnp.maximum(m_prev, jnp.max(logits, axis=-1, keepdims=True))
    corr = jnp.exp(m_prev - m_new)
    p = jnp.exp(logits - m_new)
    l_sc[...] = corr * l_sc[...] + jnp.sum(p, axis=-1, keepdims=True)
    acc_sc[...] = corr * acc_sc[...] + jnp.einsum(
        "hqk,hkd->hqd", p.astype(v.dtype), v, preferred_element_type=jnp.float32)
    m_sc[...] = m_new

    @pl.when(ki == pl.num_programs(2) - 1)
    def _finalize():
        inv = pl.reciprocal(l_sc[...], approx=True)     # EUP vrcp, free bundle slot
        o_ref[...] = (acc_sc[...] * inv).astype(o_ref.dtype)


def _out_proj_kernel(x_ref, w_ref, b_ref, o_ref, acc_ref):
    # Head-merging projection: accumulate (tn, dh) @ (dh, d) over heads into a lane-dense
    # (tn, d) output -> no (B,H,N,dh)->(B,N,d) HBM relayout.
    h = pl.program_id(2)

    @pl.when(h == 0)
    def _init():
        acc_ref[...] = jnp.zeros(acc_ref.shape, acc_ref.dtype)

    acc_ref[...] += jnp.dot(x_ref[...], w_ref[...], preferred_element_type=jnp.float32)

    @pl.when(h == pl.num_programs(2) - 1)
    def _finalize():
        o_ref[...] = (acc_ref[...] + b_ref[...].astype(jnp.float32)).astype(o_ref.dtype)


def _ffn_kernel(x_ref, w1_ref, b1_ref, w2_ref, b2_ref, o_ref, acc_ref):
    # FFN with the 4*d hidden dim tiled as a reduction axis (weights never fully resident).
    j = pl.program_id(1)

    @pl.when(j == 0)
    def _init():
        acc_ref[...] = jnp.zeros(acc_ref.shape, acc_ref.dtype)

    h = jnp.dot(x_ref[...], w1_ref[...], preferred_element_type=jnp.float32)
    h = _gelu_exact(h + b1_ref[...].astype(jnp.float32))
    acc_ref[...] += jnp.dot(h.astype(w2_ref.dtype), w2_ref[...],
                            preferred_element_type=jnp.float32)

    @pl.when(j == pl.num_programs(1) - 1)
    def _finalize():
        o_ref[...] = (acc_ref[...] + b2_ref[...].astype(jnp.float32)).astype(o_ref.dtype)


def _add_layernorm_kernel(x_ref, r_ref, g_ref, b_ref, o_ref):
    z = x_ref[...].astype(jnp.float32) + r_ref[...].astype(jnp.float32)
    mu = jnp.mean(z, axis=-1, keepdims=True)
    zc = z - mu
    var = jnp.mean(zc * zc, axis=-1, keepdims=True)
    inv = jax.lax.rsqrt(var + _LN_EPS)
    y = zc * inv * g_ref[...].astype(jnp.float32) + b_ref[...].astype(jnp.float32)
    o_ref[...] = y.astype(o_ref.dtype)


# ----------------------------------------------------------------------------- pallas wrappers
def qkv_proj_pallas(x, w_qkv, nhead):
    B, N, d = x.shape
    dh = d // nhead
    tn = _seq_tile(N, cap=256)
    kernel = functools.partial(_qkv_split_kernel, nhead=nhead, dh=dh)
    out_shapes = tuple(jax.ShapeDtypeStruct((B, nhead, N, dh), x.dtype) for _ in range(3))
    out_specs = tuple(pl.BlockSpec((None, nhead, tn, dh), lambda b, i: (b, 0, i, 0))
                      for _ in range(3))
    return pl.pallas_call(
        kernel,
        out_shape=out_shapes,
        grid_spec=pltpu.PrefetchScalarGridSpec(
            num_scalar_prefetch=0,
            grid=(B, N // tn),
            in_specs=[
                pl.BlockSpec((None, tn, d), lambda b, i: (b, i, 0)),
                pl.BlockSpec((d, 3 * d), lambda b, i: (0, 0)),
            ],
            out_specs=out_specs,
        ),
        compiler_params=_cparams("parallel", "parallel"),
    )(x, w_qkv)


def attention_pallas(q, k, v, coords, coords_t, w1t, b1c, w2, b2, alpha, add_mask,
                     *, scale, ns):
    B, H, N, dh = q.shape
    nd = coords.shape[-1]
    C, Df = w1t.shape
    tq = _seq_tile(N)
    tk = _seq_tile(N)
    kernel = functools.partial(_attention_kernel, scale=scale, ns=ns)
    return pl.pallas_call(
        kernel,
        out_shape=jax.ShapeDtypeStruct((B, H, N, dh), q.dtype),
        grid_spec=pltpu.PrefetchScalarGridSpec(
            num_scalar_prefetch=0,
            grid=(B, N // tq, N // tk),
            in_specs=[
                pl.BlockSpec(memory_space=pltpu.MemorySpace.SMEM),              # alpha (1,)
                pl.BlockSpec(memory_space=pltpu.MemorySpace.SMEM),              # bias b2 (H,)
                pl.BlockSpec((None, H, tq, dh), lambda b, i, j: (b, 0, i, 0)),  # q
                pl.BlockSpec((None, H, tk, dh), lambda b, i, j: (b, 0, j, 0)),  # k
                pl.BlockSpec((None, H, tk, dh), lambda b, i, j: (b, 0, j, 0)),  # v
                pl.BlockSpec((None, tq, nd), lambda b, i, j: (b, i, 0)),        # coords rows
                pl.BlockSpec((None, nd, tk), lambda b, i, j: (b, 0, j)),        # coords^T cols
                pl.BlockSpec((C, Df), lambda b, i, j: (0, 0)),                  # bias W1^T
                pl.BlockSpec((C, 1), lambda b, i, j: (0, 0)),                   # bias b1
                pl.BlockSpec((C, H), lambda b, i, j: (0, 0)),                   # bias W2
                pl.BlockSpec((None, 1, tk), lambda b, i, j: (b, 0, j)),         # key padding mask
            ],
            out_specs=pl.BlockSpec((None, H, tq, dh), lambda b, i, j: (b, 0, i, 0)),
            scratch_shapes=[
                pltpu.VMEM((H, tq, 1), jnp.float32),
                pltpu.VMEM((H, tq, 1), jnp.float32),
                pltpu.VMEM((H, tq, dh), jnp.float32),
            ],
        ),
        compiler_params=_cparams("parallel", "parallel", "arbitrary"),
    )(alpha, b2, q, k, v, coords, coords_t, w1t, b1c, w2, add_mask)


def out_proj_pallas(attn, w_out, b_out):
    B, H, N, dh = attn.shape
    d = H * dh
    tn = _seq_tile(N, cap=256)
    return pl.pallas_call(
        _out_proj_kernel,
        out_shape=jax.ShapeDtypeStruct((B, N, d), attn.dtype),
        grid_spec=pltpu.PrefetchScalarGridSpec(
            num_scalar_prefetch=0,
            grid=(B, N // tn, H),
            in_specs=[
                pl.BlockSpec((None, None, tn, dh), lambda b, i, h: (b, h, i, 0)),
                pl.BlockSpec((dh, d), lambda b, i, h: (h, 0)),
                pl.BlockSpec((1, d), lambda b, i, h: (0, 0)),
            ],
            out_specs=pl.BlockSpec((None, tn, d), lambda b, i, h: (b, i, 0)),
            scratch_shapes=[pltpu.VMEM((tn, d), jnp.float32)],
        ),
        compiler_params=_cparams("parallel", "parallel", "arbitrary"),
    )(attn, w_out, b_out.reshape(1, d))


def ffn_pallas(x, w1, b1, w2, b2):
    M0, d = x.shape
    Dh = w1.shape[1]
    x, _ = _pad_rows(x)
    M = x.shape[0]
    tm = _row_tile(M, cap=256)
    th = _hidden_tile(Dh)
    out = pl.pallas_call(
        _ffn_kernel,
        out_shape=jax.ShapeDtypeStruct((M, d), x.dtype),
        grid_spec=pltpu.PrefetchScalarGridSpec(
            num_scalar_prefetch=0,
            grid=(M // tm, Dh // th),
            in_specs=[
                pl.BlockSpec((tm, d), lambda i, j: (i, 0)),
                pl.BlockSpec((d, th), lambda i, j: (0, j)),
                pl.BlockSpec((1, th), lambda i, j: (0, j)),
                pl.BlockSpec((th, d), lambda i, j: (j, 0)),
                pl.BlockSpec((1, d), lambda i, j: (0, 0)),
            ],
            out_specs=pl.BlockSpec((tm, d), lambda i, j: (i, 0)),
            scratch_shapes=[pltpu.VMEM((tm, d), jnp.float32)],
        ),
        compiler_params=_cparams("parallel", "arbitrary"),
    )(x, w1, b1.reshape(1, Dh), w2, b2.reshape(1, d))
    return out[:M0]


def add_layernorm_pallas(x, res, gamma, beta):
    M0, D = x.shape
    x, _ = _pad_rows(x)
    res, _ = _pad_rows(res)
    M = x.shape[0]
    cap = max(8, (1024 * 1024) // max(D, 1))
    tm = _row_tile(M, cap=cap)
    out = pl.pallas_call(
        _add_layernorm_kernel,
        out_shape=jax.ShapeDtypeStruct((M, D), x.dtype),
        grid_spec=pltpu.PrefetchScalarGridSpec(
            num_scalar_prefetch=0,
            grid=(M // tm,),
            in_specs=[
                pl.BlockSpec((tm, D), lambda i: (i, 0)),
                pl.BlockSpec((tm, D), lambda i: (i, 0)),
                pl.BlockSpec((1, D), lambda i: (0, 0)),
                pl.BlockSpec((1, D), lambda i: (0, 0)),
            ],
            out_specs=pl.BlockSpec((tm, D), lambda i: (i, 0)),
        ),
        compiler_params=_cparams("parallel"),
    )(x, res, gamma.reshape(1, D), beta.reshape(1, D))
    return out[:M0]


# ----------------------------------------------------------------------------- model (Pallas path)
def relpos_encoder_layer(x, coords, coords_t, add_mask, p, *, nhead, num_special_tokens):
    B, N, d = x.shape
    dh = d // nhead
    scale = float(dh) ** (-0.5)

    q, k, v = qkv_proj_pallas(x, p["w_qkv"], nhead)                       # (B, H, N, dh) x3

    C = p["bias_w1"].shape[1]
    w1t = p["bias_w1"].T                                                   # (C, Df), tiny
    b1c = p["bias_b1"].reshape(C, 1)
    attn = attention_pallas(q, k, v, coords, coords_t, w1t, b1c,
                            p["bias_w2"], p["bias_b2"], p["bias_alpha"], add_mask,
                            scale=scale, ns=num_special_tokens)

    proj = out_proj_pallas(attn, p["w_out"], p["b_out"])                   # (B, N, d)

    xf = x.reshape(B * N, d)
    y1 = add_layernorm_pallas(xf, proj.reshape(B * N, d), p["ln1_g"], p["ln1_b"])
    ffn = ffn_pallas(y1, p["ffn_w1"], p["ffn_b1"], p["ffn_w2"], p["ffn_b2"])
    y2 = add_layernorm_pallas(y1, ffn, p["ln2_g"], p["ln2_b"])
    return y2.reshape(B, N, d)


def relpos_transformer(x, coords, key_padding_mask, layer_params, *, nhead, num_special_tokens):
    B, N, _ = x.shape
    coords_t = jnp.swapaxes(coords, 1, 2)   # (B, num_dims, N), tiny one-off relayout
    if key_padding_mask is None:
        add_mask = jnp.zeros((B, 1, N), jnp.float32)
    else:
        add_mask = jnp.where(key_padding_mask, _NEG_INF, 0.0).astype(jnp.float32)[:, None, :]
    for p in layer_params:
        x = relpos_encoder_layer(x, coords, coords_t, add_mask, p,
                                 nhead=nhead, num_special_tokens=num_special_tokens)
    return x


# ----------------------------------------------------------------------------- pure-JAX reference
def _mm(a, b):
    return jnp.dot(a, b, precision=HIGHEST)


def _ln_ref(z, g, b):
    mu = jnp.mean(z, axis=-1, keepdims=True)
    var = jnp.mean(jnp.square(z - mu), axis=-1, keepdims=True)
    return (z - mu) / jnp.sqrt(var + _LN_EPS) * g + b


def relpos_transformer_ref(x, coords, key_padding_mask, layer_params, *, nhead, num_special_tokens):
    B, N, d = x.shape
    dh = d // nhead
    scale = float(dh) ** (-0.5)
    coord_feat = _coord_features(coords)
    Df = coord_feat.shape[-1]
    if key_padding_mask is None:
        kadd = jnp.zeros((B, N), jnp.float32)
    else:
        kadd = jnp.where(key_padding_mask, _NEG_INF, 0.0).astype(jnp.float32)
    keep = (jnp.arange(N) >= num_special_tokens).astype(jnp.float32)

    for p in layer_params:
        qkv = _mm(x.reshape(B * N, d), p["w_qkv"]).reshape(B, N, 3, nhead, dh)
        q = jnp.transpose(qkv[:, :, 0], (0, 2, 1, 3))
        k = jnp.transpose(qkv[:, :, 1], (0, 2, 1, 3))
        v = jnp.transpose(qkv[:, :, 2], (0, 2, 1, 3))

        h = jax.nn.gelu(_mm(coord_feat.reshape(B * N * N, Df), p["bias_w1"]) + p["bias_b1"],
                        approximate=False)
        bias = (_mm(h, p["bias_w2"]) + p["bias_b2"]).reshape(B, N, N, nhead)
        bias = jnp.transpose(bias, (0, 3, 1, 2))
        bias = bias * keep[None, None, :, None] * keep[None, None, None, :]

        dots = jnp.einsum("bhid,bhjd->bhij", q, k, precision=HIGHEST) * scale
        logits = dots + p["bias_alpha"][0] * bias + kadd[:, None, None, :]
        attn = jax.nn.softmax(logits, axis=-1)
        o = jnp.einsum("bhij,bhjd->bhid", attn, v, precision=HIGHEST)
        o = jnp.transpose(o, (0, 2, 1, 3)).reshape(B * N, d)
        o = _mm(o, p["w_out"]) + p["b_out"]

        src = x + o.reshape(B, N, d)
        src = _ln_ref(src, p["ln1_g"], p["ln1_b"])
        hf = jax.nn.gelu(_mm(src.reshape(B * N, d), p["ffn_w1"]) + p["ffn_b1"], approximate=False)
        ffn = _mm(hf, p["ffn_w2"]) + p["ffn_b2"]
        src = src + ffn.reshape(B, N, d)
        x = _ln_ref(src, p["ln2_g"], p["ln2_b"])
    return x


# ----------------------------------------------------------------------------- params
def _init_layer(key, d_model, nhead, bias_in_dim):
    ks = jax.random.split(key, 12)

    def w(k, shape):
        return (jax.random.normal(k, shape, jnp.float32) / jnp.sqrt(shape[0])).astype(jnp.float32)

    hidden = nhead * 4
    return dict(
        w_qkv=w(ks[0], (d_model, 3 * d_model)),
        w_out=w(ks[1], (d_model, d_model)),
        b_out=0.02 * jax.random.normal(ks[2], (d_model,), jnp.float32),
        # PyTorch inits bias_alpha to 0; use a nonzero value so the rel-pos bias path is exercised.
        bias_alpha=jnp.full((1,), 0.5, jnp.float32),
        bias_w1=w(ks[3], (bias_in_dim, hidden)),
        bias_b1=0.02 * jax.random.normal(ks[4], (hidden,), jnp.float32),
        bias_w2=w(ks[5], (hidden, nhead)),
        bias_b2=0.02 * jax.random.normal(ks[6], (nhead,), jnp.float32),
        ffn_w1=w(ks[7], (d_model, 4 * d_model)),
        ffn_b1=0.02 * jax.random.normal(ks[8], (4 * d_model,), jnp.float32),
        ffn_w2=w(ks[9], (4 * d_model, d_model)),
        ffn_b2=0.02 * jax.random.normal(ks[10], (d_model,), jnp.float32),
        ln1_g=jnp.ones((d_model,), jnp.float32),
        ln1_b=jnp.zeros((d_model,), jnp.float32),
        ln2_g=jnp.ones((d_model,), jnp.float32),
        ln2_b=jnp.zeros((d_model,), jnp.float32),
    )


# ----------------------------------------------------------------------------- test
if __name__ == "__main__":
    key = jax.random.PRNGKey(0)
    kx, kc, kp = jax.random.split(key, 3)

    B, N, d_model, nhead = 2, 8, 32, 4
    num_dims, num_special_tokens, num_layers = 3, 1, 2

    x = jax.random.normal(kx, (B, N, d_model), dtype=jnp.float32)
    coords = jax.random.normal(kc, (B, N, num_dims), dtype=jnp.float32)
    # Pad out the last two tokens of batch 1 to exercise key_padding_mask.
    key_padding_mask = jnp.zeros((B, N), dtype=jnp.bool_).at[1, -2:].set(True)

    bias_in_dim = num_dims + 1 if num_dims > 1 else num_dims
    layer_keys = jax.random.split(kp, num_layers)
    layer_params = [_init_layer(k, d_model, nhead, bias_in_dim) for k in layer_keys]

    fwd = jax.jit(functools.partial(relpos_transformer, nhead=nhead,
                                    num_special_tokens=num_special_tokens))
    out = fwd(x, coords, key_padding_mask, layer_params)
    out = jax.block_until_ready(out)

    ref = relpos_transformer_ref(x, coords, key_padding_mask, layer_params,
                                 nhead=nhead, num_special_tokens=num_special_tokens)

    assert out.shape == (B, N, d_model)
    assert bool(jnp.all(jnp.isfinite(out)))
    # Tolerance slightly looser than before: the EUP approx reciprocal (pl.reciprocal
    # approx=True) and the online-softmax reassociation introduce ~1e-4-level deviations.
    assert jnp.allclose(out, ref, atol=5e-3, rtol=5e-3)
    print("KERNEL_OK")
</pallas_src>

<mosaic_0001>
module attributes {stable_mosaic.version = 11 : i64} {
  func.func @_qkv_split_kernel(%arg0: i32, %arg1: i32, %arg2: memref<1x8x32xf32, #tpu.memory_space<vmem>>, %arg3: memref<32x96xf32, #tpu.memory_space<vmem>>, %arg4: memref<1x4x8x8xf32, #tpu.memory_space<vmem>>, %arg5: memref<1x4x8x8xf32, #tpu.memory_space<vmem>>, %arg6: memref<1x4x8x8xf32, #tpu.memory_space<vmem>>) attributes {dimension_semantics = [#tpu.dimension_semantics<parallel>, #tpu.dimension_semantics<parallel>], iteration_bounds = array<i64: 2, 1>, scalar_prefetch = 0 : i64, scratch_operands = 0 : i64, tpu.core_type = #tpu.core_type<tc>, window_params = [{transform_indices = @transform_0, window_bounds = array<i64: 1, 8, 32>}, {pipeline_mode = #tpu.pipeline_mode<synchronous>, transform_indices = @transform_1, window_bounds = array<i64: 32, 96>}, {transform_indices = @transform_2, window_bounds = array<i64: 1, 4, 8, 8>}, {transform_indices = @transform_3, window_bounds = array<i64: 1, 4, 8, 8>}, {transform_indices = @transform_4, window_bounds = array<i64: 1, 4, 8, 8>}]} {
    %c0 = arith.constant 0 : index
    %c0_0 = arith.constant 0 : index
    %c0_1 = arith.constant 0 : index
    %0 = vector.load %arg2[%c0, %c0_0, %c0_1] : memref<1x8x32xf32, #tpu.memory_space<vmem>>, vector<1x8x32xf32>
    %1 = vector.shape_cast %0 : vector<1x8x32xf32> to vector<8x32xf32>
    %c0_2 = arith.constant 0 : index
    %c0_3 = arith.constant 0 : index
    %2 = vector.load %arg3[%c0_2, %c0_3] : memref<32x96xf32, #tpu.memory_space<vmem>>, vector<32x96xf32>
    %cst = arith.constant dense<0.000000e+00> : vector<8x96xf32>
    %3 = tpu.matmul %1, %2, %cst {dimension_numbers = #tpu.dot_dimension_numbers<[1], [0], [0], [1], [0, 0, 1, 1], [], []>} : vector<8x32xf32>, vector<32x96xf32>, vector<8x96xf32> -> vector<8x96xf32>
    %4 = vector.extract_strided_slice %3 {offsets = [0, 0], sizes = [8, 8], strides = [1, 1]} : vector<8x96xf32> to vector<8x8xf32>
    %c0_4 = arith.constant 0 : index
    %c0_5 = arith.constant 0 : index
    %c0_6 = arith.constant 0 : index
    %c0_7 = arith.constant 0 : index
    %5 = vector.load %arg4[%c0_4, %c0_5, %c0_6, %c0_7] : memref<1x4x8x8xf32, #tpu.memory_space<vmem>>, vector<1x1x8x8xf32>
    %6 = vector.shape_cast %5 : vector<1x1x8x8xf32> to vector<8x8xf32>
    %7 = vector.shape_cast %4 : vector<8x8xf32> to vector<1x1x8x8xf32>
    tpu.vector_store %arg4[%c0_4, %c0_5, %c0_6, %c0_7], %7 {strides = array<i32>} : memref<1x4x8x8xf32, #tpu.memory_space<vmem>>, vector<1x1x8x8xf32>,
    %8 = vector.extract_strided_slice %3 {offsets = [0, 32], sizes = [8, 8], strides = [1, 1]} : vector<8x96xf32> to vector<8x8xf32>
    %c0_8 = arith.constant 0 : index
    %c0_9 = arith.constant 0 : index
    %c0_10 = arith.constant 0 : index
    %c0_11 = arith.constant 0 : index
    %9 = vector.load %arg5[%c0_8, %c0_9, %c0_10, %c0_11] : memref<1x4x8x8xf32, #tpu.memory_space<vmem>>, vector<1x1x8x8xf32>
    %10 = vector.shape_cast %9 : vector<1x1x8x8xf32> to vector<8x8xf32>
    %11 = vector.shape_cast %8 : vector<8x8xf32> to vector<1x1x8x8xf32>
    tpu.vector_store %arg5[%c0_8, %c0_9, %c0_10, %c0_11], %11 {strides = array<i32>} : memref<1x4x8x8xf32, #tpu.memory_space<vmem>>, vector<1x1x8x8xf32>,
    %12 = vector.extract_strided_slice %3 {offsets = [0, 64], sizes = [8, 8], strides = [1, 1]} : vector<8x96xf32> to vector<8x8xf32>
    %c0_12 = arith.constant 0 : index
    %c0_13 = arith.constant 0 : index
    %c0_14 = arith.constant 0 : index
    %c0_15 = arith.constant 0 : index
    %13 = vector.load %arg6[%c0_12, %c0_13, %c0_14, %c0_15] : memref<1x4x8x8xf32, #tpu.memory_space<vmem>>, vector<1x1x8x8xf32>
    %14 = vector.shape_cast %13 : vector<1x1x8x8xf32> to vector<8x8xf32>
    %15 = vector.shape_cast %12 : vector<8x8xf32> to vector<1x1x8x8xf32>
    tpu.vector_store %arg6[%c0_12, %c0_13, %c0_14, %c0_15], %15 {strides = array<i32>} : memref<1x4x8x8xf32, #tpu.memory_space<vmem>>, vector<1x1x8x8xf32>,
    %16 = vector.extract_strided_slice %3 {offsets = [0, 8], sizes = [8, 8], strides = [1, 1]} : vector<8x96xf32> to vector<8x8xf32>
    %c0_16 = arith.constant 0 : index
    %c1 = arith.constant 1 : index
    %c0_17 = arith.constant 0 : index
    %c0_18 = arith.constant 0 : index
    %17 = vector.load %arg4[%c0_16, %c1, %c0_17, %c0_18] : memref<1x4x8x8xf32, #tpu.memory_space<vmem>>, vector<1x1x8x8xf32>
    %18 = vector.shape_cast %17 : vector<1x1x8x8xf32> to vector<8x8xf32>
    %19 = vector.shape_cast %16 : vector<8x8xf32> to vector<1x1x8x8xf32>
    tpu.vector_store %arg4[%c0_16, %c1, %c0_17, %c0_18], %19 {strides = array<i32>} : memref<1x4x8x8xf32, #tpu.memory_space<vmem>>, vector<1x1x8x8xf32>,
    %20 = vector.extract_strided_slice %3 {offsets = [0, 40], sizes = [8, 8], strides = [1, 1]} : vector<8x96xf32> to vector<8x8xf32>
    %c0_19 = arith.constant 0 : index
    %c1_20 = arith.constant 1 : index
    %c0_21 = arith.constant 0 : index
    %c0_22 = arith.constant 0 : index
    %21 = vector.load %arg5[%c0_19, %c1_20, %c0_21, %c0_22] : memref<1x4x8x8xf32, #tpu.memory_space<vmem>>, vector<1x1x8x8xf32>
    %22 = vector.shape_cast %21 : vector<1x1x8x8xf32> to vector<8x8xf32>
    %23 = vector.shape_cast %20 : vector<8x8xf32> to vector<1x1x8x8xf32>
    tpu.vector_store %arg5[%c0_19, %c1_20, %c0_21, %c0_22], %23 {strides = array<i32>} : memref<1x4x8x8xf32, #tpu.memory_space<vmem>>, vector<1x1x8x8xf32>,
    %24 = vector.extract_strided_slice %3 {offsets = [0, 72], sizes = [8, 8], strides = [1, 1]} : vector<8x96xf32> to vector<8x8xf32>
    %c0_23 = arith.constant 0 : index
    %c1_24 = arith.constant 1 : index
    %c0_25 = arith.constant 0 : index
    %c0_26 = arith.constant 0 : index
    %25 = vector.load %arg6[%c0_23, %c1_24, %c0_25, %c0_26] : memref<1x4x8x8xf32, #tpu.memory_space<vmem>>, vector<1x1x8x8xf32>
    %26 = vector.shape_cast %25 : vector<1x1x8x8xf32> to vector<8x8xf32>
    %27 = vector.shape_cast %24 : vector<8x8xf32> to vector<1x1x8x8xf32>
    tpu.vector_store %arg6[%c0_23, %c1_24, %c0_25, %c0_26], %27 {strides = array<i32>} : memref<1x4x8x8xf32, #tpu.memory_space<vmem>>, vector<1x1x8x8xf32>,
    %28 = vector.extract_strided_slice %3 {offsets = [0, 16], sizes = [8, 8], strides = [1, 1]} : vector<8x96xf32> to vector<8x8xf32>
    %c0_27 = arith.constant 0 : index
    %c2 = arith.constant 2 : index
    %c0_28 = arith.constant 0 : index
    %c0_29 = arith.constant 0 : index
    %29 = vector.load %arg4[%c0_27, %c2, %c0_28, %c0_29] : memref<1x4x8x8xf32, #tpu.memory_space<vmem>>, vector<1x1x8x8xf32>
    %30 = vector.shape_cast %29 : vector<1x1x8x8xf32> to vector<8x8xf32>
    %31 = vector.shape_cast %28 : vector<8x8xf32> to vector<1x1x8x8xf32>
    tpu.vector_store %arg4[%c0_27, %c2, %c0_28, %c0_29], %31 {strides = array<i32>} : memref<1x4x8x8xf32, #tpu.memory_space<vmem>>, vector<1x1x8x8xf32>,
    %32 = vector.extract_strided_slice %3 {offsets = [0, 48], sizes = [8, 8], strides = [1, 1]} : vector<8x96xf32> to vector<8x8xf32>
    %c0_30 = arith.constant 0 : index
    %c2_31 = arith.constant 2 : index
    %c0_32 = arith.constant 0 : index
    %c0_33 = arith.constant 0 : index
    %33 = vector.load %arg5[%c0_30, %c2_31, %c0_32, %c0_33] : memref<1x4x8x8xf32, #tpu.memory_space<vmem>>, vector<1x1x8x8xf32>
    %34 = vector.shape_cast %33 : vector<1x1x8x8xf32> to vector<8x8xf32>
    %35 = vector.shape_cast %32 : vector<8x8xf32> to vector<1x1x8x8xf32>
    tpu.vector_store %arg5[%c0_30, %c2_31, %c0_32, %c0_33], %35 {strides = array<i32>} : memref<1x4x8x8xf32, #tpu.memory_space<vmem>>, vector<1x1x8x8xf32>,
    %36 = vector.extract_strided_slice %3 {offsets = [0, 80], sizes = [8, 8], strides = [1, 1]} : vector<8x96xf32> to vector<8x8xf32>
    %c0_34 = arith.constant 0 : index
    %c2_35 = arith.constant 2 : index
    %c0_36 = arith.constant 0 : index
    %c0_37 = arith.constant 0 : index
    %37 = vector.load %arg6[%c0_34, %c2_35, %c0_36, %c0_37] : memref<1x4x8x8xf32, #tpu.memory_space<vmem>>, vector<1x1x8x8xf32>
    %38 = vector.shape_cast %37 : vector<1x1x8x8xf32> to vector<8x8xf32>
    %39 = vector.shape_cast %36 : vector<8x8xf32> to vector<1x1x8x8xf32>
    tpu.vector_store %arg6[%c0_34, %c2_35, %c0_36, %c0_37], %39 {strides = array<i32>} : memref<1x4x8x8xf32, #tpu.memory_space<vmem>>, vector<1x1x8x8xf32>,
    %40 = vector.extract_strided_slice %3 {offsets = [0, 24], sizes = [8, 8], strides = [1, 1]} : vector<8x96xf32> to vector<8x8xf32>
    %c0_38 = arith.constant 0 : index
    %c3 = arith.constant 3 : index
    %c0_39 = arith.constant 0 : index
    %c0_40 = arith.constant 0 : index
    %41 = vector.load %arg4[%c0_38, %c3, %c0_39, %c0_40] : memref<1x4x8x8xf32, #tpu.memory_space<vmem>>, vector<1x1x8x8xf32>
    %42 = vector.shape_cast %41 : vector<1x1x8x8xf32> to vector<8x8xf32>
    %43 = vector.shape_cast %40 : vector<8x8xf32> to vector<1x1x8x8xf32>
    tpu.vector_store %arg4[%c0_38, %c3, %c0_39, %c0_40], %43 {strides = array<i32>} : memref<1x4x8x8xf32, #tpu.memory_space<vmem>>, vector<1x1x8x8xf32>,
    %44 = vector.extract_strided_slice %3 {offsets = [0, 56], sizes = [8, 8], strides = [1, 1]} : vector<8x96xf32> to vector<8x8xf32>
    %c0_41 = arith.constant 0 : index
    %c3_42 = arith.constant 3 : index
    %c0_43 = arith.constant 0 : index
    %c0_44 = arith.constant 0 : index
    %45 = vector.load %arg5[%c0_41, %c3_42, %c0_43, %c0_44] : memref<1x4x8x8xf32, #tpu.memory_space<vmem>>, vector<1x1x8x8xf32>
    %46 = vector.shape_cast %45 : vector<1x1x8x8xf32> to vector<8x8xf32>
    %47 = vector.shape_cast %44 : vector<8x8xf32> to vector<1x1x8x8xf32>
    tpu.vector_store %arg5[%c0_41, %c3_42, %c0_43, %c0_44], %47 {strides = array<i32>} : memref<1x4x8x8xf32, #tpu.memory_space<vmem>>, vector<1x1x8x8xf32>,
    %48 = vector.extract_strided_slice %3 {offsets = [0, 88], sizes = [8, 8], strides = [1, 1]} : vector<8x96xf32> to vector<8x8xf32>
    %c0_45 = arith.constant 0 : index
    %c3_46 = arith.constant 3 : index
    %c0_47 = arith.constant 0 : index
    %c0_48 = arith.constant 0 : index
    %49 = vector.load %arg6[%c0_45, %c3_46, %c0_47, %c0_48] : memref<1x4x8x8xf32, #tpu.memory_space<vmem>>, vector<1x1x8x8xf32>
    %50 = vector.shape_cast %49 : vector<1x1x8x8xf32> to vector<8x8xf32>
    %51 = vector.shape_cast %48 : vector<8x8xf32> to vector<1x1x8x8xf32>
    tpu.vector_store %arg6[%c0_45, %c3_46, %c0_47, %c0_48], %51 {strides = array<i32>} : memref<1x4x8x8xf32, #tpu.memory_space<vmem>>, vector<1x1x8x8xf32>,
    return
  }
  func.func @transform_0(%arg0: i32, %arg1: i32) -> (i32, i32, i32) {
    %c0_i32 = arith.constant 0 : i32
    %c0_i32_0 = arith.constant 0 : i32
    return %arg0, %arg1, %c0_i32 : i32, i32, i32
  }
  func.func @transform_1(%arg0: i32, %arg1: i32) -> (i32, i32) {
    %c0_i32 = arith.constant 0 : i32
    %c0_i32_0 = arith.constant 0 : i32
    %c0_i32_1 = arith.constant 0 : i32
    return %c0_i32, %c0_i32_0 : i32, i32
  }
  func.func @transform_2(%arg0: i32, %arg1: i32) -> (i32, i32, i32, i32) {
    %c0_i32 = arith.constant 0 : i32
    %c0_i32_0 = arith.constant 0 : i32
    %c0_i32_1 = arith.constant 0 : i32
    return %arg0, %c0_i32, %arg1, %c0_i32_0 : i32, i32, i32, i32
  }
  func.func @transform_3(%arg0: i32, %arg1: i32) -> (i32, i32, i32, i32) {
    %c0_i32 = arith.constant 0 : i32
    %c0_i32_0 = arith.constant 0 : i32
    %c0_i32_1 = arith.constant 0 : i32
    return %arg0, %c0_i32, %arg1, %c0_i32_0 : i32, i32, i32, i32
  }
  func.func @transform_4(%arg0: i32, %arg1: i32) -> (i32, i32, i32, i32) {
    %c0_i32 = arith.constant 0 : i32
    %c0_i32_0 = arith.constant 0 : i32
    %c0_i32_1 = arith.constant 0 : i32
    return %arg0, %c0_i32, %arg1, %c0_i32_0 : i32, i32, i32, i32
  }
}

module attributes {stable_mosaic.version = 11 : i64} {
  func.func @_add_layernorm_kernel(%arg0: i32, %arg1: memref<16x32xf32, #tpu.memory_space<vmem>>, %arg2: memref<16x32xf32, #tpu.memory_space<vmem>>, %arg3: memref<1x32xf32, #tpu.memory_space<vmem>>, %arg4: memref<1x32xf32, #tpu.memory_space<vmem>>, %arg5: memref<16x32xf32, #tpu.memory_space<vmem>>) attributes {dimension_semantics = [#tpu.dimension_semantics<parallel>], iteration_bounds = array<i64: 1>, scalar_prefetch = 0 : i64, scratch_operands = 0 : i64, tpu.core_type = #tpu.core_type<tc>, window_params = [{transform_indices = @transform_0, window_bounds = array<i64: 16, 32>}, {transform_indices = @transform_1, window_bounds = array<i64: 16, 32>}, {pipeline_mode = #tpu.pipeline_mode<synchronous>, transform_indices = @transform_2, window_bounds = array<i64: 1, 32>}, {pipeline_mode = #tpu.pipeline_mode<synchronous>, transform_indices = @transform_3, window_bounds = array<i64: 1, 32>}, {transform_indices = @transform_4, window_bounds = array<i64: 16, 32>}]} {
    %c0 = arith.constant 0 : index
    %c0_0 = arith.constant 0 : index
    %0 = vector.load %arg1[%c0, %c0_0] : memref<16x32xf32, #tpu.memory_space<vmem>>, vector<16x32xf32>
    %c0_1 = arith.constant 0 : index
    %c0_2 = arith.constant 0 : index
    %1 = vector.load %arg2[%c0_1, %c0_2] : memref<16x32xf32, #tpu.memory_space<vmem>>, vector<16x32xf32>
    %2 = arith.addf %0, %1 : vector<16x32xf32>
    %cst = arith.constant dense<0.000000e+00> : vector<16xf32>
    %3 = vector.multi_reduction <add>, %2, %cst [1] : vector<16x32xf32> to vector<16xf32>
    %4 = vector.shape_cast %3 : vector<16xf32> to vector<16x1xf32>
    %cst_3 = arith.constant 3.200000e+01 : f32
    %5 = vector.broadcast %cst_3 : f32 to vector<16x1xf32>
    %6 = arith.divf %4, %5 : vector<16x1xf32>
    %7 = vector.broadcast %6 : vector<16x1xf32> to vector<16x32xf32>
    %8 = arith.subf %2, %7 : vector<16x32xf32>
    %9 = arith.mulf %8, %8 : vector<16x32xf32>
    %cst_4 = arith.constant dense<0.000000e+00> : vector<16xf32>
    %10 = vector.multi_reduction <add>, %9, %cst_4 [1] : vector<16x32xf32> to vector<16xf32>
    %11 = vector.shape_cast %10 : vector<16xf32> to vector<16x1xf32>
    %cst_5 = arith.constant 3.200000e+01 : f32
    %12 = vector.broadcast %cst_5 : f32 to vector<16x1xf32>
    %13 = arith.divf %11, %12 : vector<16x1xf32>
    %cst_6 = arith.constant 9.99999974E-6 : f32
    %14 = vector.broadcast %cst_6 : f32 to vector<16x1xf32>
    %15 = arith.addf %13, %14 : vector<16x1xf32>
    %16 = math.rsqrt %15 : vector<16x1xf32>
    %17 = vector.broadcast %16 : vector<16x1xf32> to vector<16x32xf32>
    %18 = arith.mulf %8, %17 : vector<16x32xf32>
    %c0_7 = arith.constant 0 : index
    %c0_8 = arith.constant 0 : index
    %19 = vector.load %arg3[%c0_7, %c0_8] : memref<1x32xf32, #tpu.memory_space<vmem>>, vector<1x32xf32>
    %20 = vector.broadcast %19 : vector<1x32xf32> to vector<16x32xf32>
    %21 = arith.mulf %18, %20 : vector<16x32xf32>
    %c0_9 = arith.constant 0 : index
    %c0_10 = arith.constant 0 : index
    %22 = vector.load %arg4[%c0_9, %c0_10] : memref<1x32xf32, #tpu.memory_space<vmem>>, vector<1x32xf32>
    %23 = vector.broadcast %22 : vector<1x32xf32> to vector<16x32xf32>
    %24 = arith.addf %21, %23 : vector<16x32xf32>
    %c0_11 = arith.constant 0 : index
    %c0_12 = arith.constant 0 : index
    %25 = vector.load %arg5[%c0_11, %c0_12] : memref<16x32xf32, #tpu.memory_space<vmem>>, vector<16x32xf32>
    tpu.vector_store %arg5[%c0_11, %c0_12], %24 {strides = array<i32>} : memref<16x32xf32, #tpu.memory_space<vmem>>, vector<16x32xf32>,
    return
  }
  func.func @transform_0(%arg0: i32) -> (i32, i32) {
    %c0_i32 = arith.constant 0 : i32
    %c0_i32_0 = arith.constant 0 : i32
    return %arg0, %c0_i32 : i32, i32
  }
  func.func @transform_1(%arg0: i32) -> (i32, i32) {
    %c0_i32 = arith.constant 0 : i32
    %c0_i32_0 = arith.constant 0 : i32
    return %arg0, %c0_i32 : i32, i32
  }
  func.func @transform_2(%arg0: i32) -> (i32, i32) {
    %c0_i32 = arith.constant 0 : i32
    %c0_i32_0 = arith.constant 0 : i32
    %c0_i32_1 = arith.constant 0 : i32
    return %c0_i32, %c0_i32_0 : i32, i32
  }
  func.func @transform_3(%arg0: i32) -> (i32, i32) {
    %c0_i32 = arith.constant 0 : i32
    %c0_i32_0 = arith.constant 0 : i32
    %c0_i32_1 = arith.constant 0 : i32
    return %c0_i32, %c0_i32_0 : i32, i32
  }
  func.func @transform_4(%arg0: i32) -> (i32, i32) {
    %c0_i32 = arith.constant 0 : i32
    %c0_i32_0 = arith.constant 0 : i32
    return %arg0, %c0_i32 : i32, i32
  }
}

module attributes {stable_mosaic.version = 11 : i64} {
  func.func @_out_proj_kernel(%arg0: i32, %arg1: i32, %arg2: i32, %arg3: memref<1x1x8x8xf32, #tpu.memory_space<vmem>>, %arg4: memref<8x32xf32, #tpu.memory_space<vmem>>, %arg5: memref<1x32xf32, #tpu.memory_space<vmem>>, %arg6: memref<1x8x32xf32, #tpu.memory_space<vmem>>, %arg7: memref<8x32xf32, #tpu.memory_space<vmem>>) attributes {dimension_semantics = [#tpu.dimension_semantics<parallel>, #tpu.dimension_semantics<parallel>, #tpu.dimension_semantics<arbitrary>], iteration_bounds = array<i64: 2, 1, 4>, scalar_prefetch = 0 : i64, scratch_operands = 1 : i64, tpu.core_type = #tpu.core_type<tc>, window_params = [{transform_indices = @transform_0, window_bounds = array<i64: 1, 1, 8, 8>}, {transform_indices = @transform_1, window_bounds = array<i64: 8, 32>}, {pipeline_mode = #tpu.pipeline_mode<synchronous>, transform_indices = @transform_2, window_bounds = array<i64: 1, 32>}, {transform_indices = @transform_3, window_bounds = array<i64: 1, 8, 32>}]} {
    %c0_i32 = arith.constant 0 : i32
    %0 = arith.cmpi eq, %arg2, %c0_i32 : i32
    %1 = arith.extui %0 : i1 to i32
    %c0_i32_0 = arith.constant 0 : i32
    %2 = arith.cmpi ne, %1, %c0_i32_0 : i32
    scf.if %2 {
      %cst_11 = arith.constant 0.000000e+00 : f32
      %13 = vector.broadcast %cst_11 : f32 to vector<8x32xf32>
      %c0_12 = arith.constant 0 : index
      %c0_13 = arith.constant 0 : index
      %14 = vector.load %arg7[%c0_12, %c0_13] : memref<8x32xf32, #tpu.memory_space<vmem>>, vector<8x32xf32>
      tpu.vector_store %arg7[%c0_12, %c0_13], %13 {strides = array<i32>} : memref<8x32xf32, #tpu.memory_space<vmem>>, vector<8x32xf32>,
    } else {
    }
    %c0 = arith.constant 0 : index
    %c0_1 = arith.constant 0 : index
    %3 = vector.load %arg7[%c0, %c0_1] : memref<8x32xf32, #tpu.memory_space<vmem>>, vector<8x32xf32>
    %c0_2 = arith.constant 0 : index
    %c0_3 = arith.constant 0 : index
    %c0_4 = arith.constant 0 : index
    %c0_5 = arith.constant 0 : index
    %4 = vector.load %arg3[%c0_2, %c0_3, %c0_4, %c0_5] : memref<1x1x8x8xf32, #tpu.memory_space<vmem>>, vector<1x1x8x8xf32>
    %5 = vector.shape_cast %4 : vector<1x1x8x8xf32> to vector<8x8xf32>
    %c0_6 = arith.constant 0 : index
    %c0_7 = arith.constant 0 : index
    %6 = vector.load %arg4[%c0_6, %c0_7] : memref<8x32xf32, #tpu.memory_space<vmem>>, vector<8x32xf32>
    %cst = arith.constant dense<0.000000e+00> : vector<8x32xf32>
    %7 = tpu.matmul %5, %6, %cst {dimension_numbers = #tpu.dot_dimension_numbers<[1], [0], [0], [1], [0, 0, 1, 1], [], []>} : vector<8x8xf32>, vector<8x32xf32>, vector<8x32xf32> -> vector<8x32xf32>
    %8 = arith.addf %3, %7 : vector<8x32xf32>
    %c0_8 = arith.constant 0 : index
    %c0_9 = arith.constant 0 : index
    %9 = vector.load %arg7[%c0_8, %c0_9] : memref<8x32xf32, #tpu.memory_space<vmem>>, vector<8x32xf32>
    tpu.vector_store %arg7[%c0_8, %c0_9], %8 {strides = array<i32>} : memref<8x32xf32, #tpu.memory_space<vmem>>, vector<8x32xf32>,
    %c3_i32 = arith.constant 3 : i32
    %10 = arith.cmpi eq, %arg2, %c3_i32 : i32
    %11 = arith.extui %10 : i1 to i32
    %c0_i32_10 = arith.constant 0 : i32
    %12 = arith.cmpi ne, %11, %c0_i32_10 : i32
    scf.if %12 {
      %c0_11 = arith.constant 0 : index
      %c0_12 = arith.constant 0 : index
      %13 = vector.load %arg7[%c0_11, %c0_12] : memref<8x32xf32, #tpu.memory_space<vmem>>, vector<8x32xf32>
      %c0_13 = arith.constant 0 : index
      %c0_14 = arith.constant 0 : index
      %14 = vector.load %arg5[%c0_13, %c0_14] : memref<1x32xf32, #tpu.memory_space<vmem>>, vector<1x32xf32>
      %15 = vector.broadcast %14 : vector<1x32xf32> to vector<8x32xf32>
      %16 = arith.addf %13, %15 : vector<8x32xf32>
      %c0_15 = arith.constant 0 : index
      %c0_16 = arith.constant 0 : index
      %c0_17 = arith.constant 0 : index
      %17 = vector.load %arg6[%c0_15, %c0_16, %c0_17] : memref<1x8x32xf32, #tpu.memory_space<vmem>>, vector<1x8x32xf32>
      %18 = vector.shape_cast %17 : vector<1x8x32xf32> to vector<8x32xf32>
      %19 = vector.shape_cast %16 : vector<8x32xf32> to vector<1x8x32xf32>
      tpu.vector_store %arg6[%c0_15, %c0_16, %c0_17], %19 {strides = array<i32>} : memref<1x8x32xf32, #tpu.memory_space<vmem>>, vector<1x8x32xf32>,
    } else {
    }
    return
  }
  func.func @transform_0(%arg0: i32, %arg1: i32, %arg2: i32) -> (i32, i32, i32, i32) {
    %c0_i32 = arith.constant 0 : i32
    %c0_i32_0 = arith.constant 0 : i32
    return %arg0, %arg2, %arg1, %c0_i32 : i32, i32, i32, i32
  }
  func.func @transform_1(%arg0: i32, %arg1: i32, %arg2: i32) -> (i32, i32) {
    %c0_i32 = arith.constant 0 : i32
    %c0_i32_0 = arith.constant 0 : i32
    return %arg2, %c0_i32 : i32, i32
  }
  func.func @transform_2(%arg0: i32, %arg1: i32, %arg2: i32) -> (i32, i32) {
    %c0_i32 = arith.constant 0 : i32
    %c0_i32_0 = arith.constant 0 : i32
    %c0_i32_1 = arith.constant 0 : i32
    return %c0_i32, %c0_i32_0 : i32, i32
  }
  func.func @transform_3(%arg0: i32, %arg1: i32, %arg2: i32) -> (i32, i32, i32) {
    %c0_i32 = arith.constant 0 : i32
    %c0_i32_0 = arith.constant 0 : i32
    return %arg0, %arg1, %c0_i32 : i32, i32, i32
  }
}

module attributes {stable_mosaic.version = 11 : i64} {
  func.func @_attention_kernel(%arg0: i32, %arg1: i32, %arg2: i32, %arg3: memref<1xf32, #tpu.memory_space<smem>>, %arg4: memref<4xf32, #tpu.memory_space<smem>>, %arg5: memref<1x4x8x8xf32, #tpu.memory_space<vmem>>, %arg6: memref<1x4x8x8xf32, #tpu.memory_space<vmem>>, %arg7: memref<1x4x8x8xf32, #tpu.memory_space<vmem>>, %arg8: memref<1x8x3xf32, #tpu.memory_space<vmem>>, %arg9: memref<1x3x8xf32, #tpu.memory_space<vmem>>, %arg10: memref<16x4xf32, #tpu.memory_space<vmem>>, %arg11: memref<16x1xf32, #tpu.memory_space<vmem>>, %arg12: memref<16x4xf32, #tpu.memory_space<vmem>>, %arg13: memref<1x1x8xf32, #tpu.memory_space<vmem>>, %arg14: memref<1x4x8x8xf32, #tpu.memory_space<vmem>>, %arg15: memref<4x8x1xf32, #tpu.memory_space<vmem>>, %arg16: memref<4x8x1xf32, #tpu.memory_space<vmem>>, %arg17: memref<4x8x8xf32, #tpu.memory_space<vmem>>) attributes {dimension_semantics = [#tpu.dimension_semantics<parallel>, #tpu.dimension_semantics<parallel>, #tpu.dimension_semantics<arbitrary>], iteration_bounds = array<i64: 2, 1, 1>, scalar_prefetch = 0 : i64, scratch_operands = 3 : i64, tpu.core_type = #tpu.core_type<tc>, window_params = [{transform_indices = @transform_0, window_bounds = array<i64: 1>}, {transform_indices = @transform_1, window_bounds = array<i64: 4>}, {transform_indices = @transform_2, window_bounds = array<i64: 1, 4, 8, 8>}, {transform_indices = @transform_3, window_bounds = array<i64: 1, 4, 8, 8>}, {transform_indices = @transform_4, window_bounds = array<i64: 1, 4, 8, 8>}, {transform_indices = @transform_5, window_bounds = array<i64: 1, 8, 3>}, {transform_indices = @transform_6, window_bounds = array<i64: 1, 3, 8>}, {pipeline_mode = #tpu.pipeline_mode<synchronous>, transform_indices = @transform_7, window_bounds = array<i64: 16, 4>}, {pipeline_mode = #tpu.pipeline_mode<synchronous>, transform_indices = @transform_8, window_bounds = array<i64: 16, 1>}, {pipeline_mode = #tpu.pipeline_mode<synchronous>, transform_indices = @transform_9, window_bounds = array<i64: 16, 4>}, {transform_indices = @transform_10, window_bounds = array<i64: 1, 1, 8>}, {transform_indices = @transform_11, window_bounds = array<i64: 1, 4, 8, 8>}]} {
    %c0_i32 = arith.constant 0 : i32
    %0 = arith.cmpi eq, %arg2, %c0_i32 : i32
    %1 = arith.extui %0 : i1 to i32
    %c0_i32_0 = arith.constant 0 : i32
    %2 = arith.cmpi ne, %1, %c0_i32_0 : i32
    scf.if %2 {
      %cst_76 = arith.constant 0xFF800000 : f32
      %200 = vector.broadcast %cst_76 : f32 to vector<4x8x1xf32>
      %c0_77 = arith.constant 0 : index
      %c0_78 = arith.constant 0 : index
      %c0_79 = arith.constant 0 : index
      %201 = vector.load %arg15[%c0_77, %c0_78, %c0_79] : memref<4x8x1xf32, #tpu.memory_space<vmem>>, vector<4x8x1xf32>
      tpu.vector_store %arg15[%c0_77, %c0_78, %c0_79], %200 {strides = array<i32>} : memref<4x8x1xf32, #tpu.memory_space<vmem>>, vector<4x8x1xf32>,
      %cst_80 = arith.constant 0.000000e+00 : f32
      %202 = vector.broadcast %cst_80 : f32 to vector<4x8x1xf32>
      %c0_81 = arith.constant 0 : index
      %c0_82 = arith.constant 0 : index
      %c0_83 = arith.constant 0 : index
      %203 = vector.load %arg16[%c0_81, %c0_82, %c0_83] : memref<4x8x1xf32, #tpu.memory_space<vmem>>, vector<4x8x1xf32>
      tpu.vector_store %arg16[%c0_81, %c0_82, %c0_83], %202 {strides = array<i32>} : memref<4x8x1xf32, #tpu.memory_space<vmem>>, vector<4x8x1xf32>,
      %cst_84 = arith.constant 0.000000e+00 : f32
      %204 = vector.broadcast %cst_84 : f32 to vector<4x8x8xf32>
      %c0_85 = arith.constant 0 : index
      %c0_86 = arith.constant 0 : index
      %c0_87 = arith.constant 0 : index
      %205 = vector.load %arg17[%c0_85, %c0_86, %c0_87] : memref<4x8x8xf32, #tpu.memory_space<vmem>>, vector<4x8x8xf32>
      tpu.vector_store %arg17[%c0_85, %c0_86, %c0_87], %204 {strides = array<i32>} : memref<4x8x8xf32, #tpu.memory_space<vmem>>, vector<4x8x8xf32>,
    } else {
    }
    %c0 = arith.constant 0 : index
    %c0_1 = arith.constant 0 : index
    %c0_2 = arith.constant 0 : index
    %c0_3 = arith.constant 0 : index
    %3 = vector.load %arg5[%c0, %c0_1, %c0_2, %c0_3] : memref<1x4x8x8xf32, #tpu.memory_space<vmem>>, vector<1x4x8x8xf32>
    %4 = vector.shape_cast %3 : vector<1x4x8x8xf32> to vector<4x8x8xf32>
    %c0_4 = arith.constant 0 : index
    %c0_5 = arith.constant 0 : index
    %c0_6 = arith.constant 0 : index
    %c0_7 = arith.constant 0 : index
    %5 = vector.load %arg6[%c0_4, %c0_5, %c0_6, %c0_7] : memref<1x4x8x8xf32, #tpu.memory_space<vmem>>, vector<1x4x8x8xf32>
    %6 = vector.shape_cast %5 : vector<1x4x8x8xf32> to vector<4x8x8xf32>
    %c0_8 = arith.constant 0 : index
    %c0_9 = arith.constant 0 : index
    %c0_10 = arith.constant 0 : index
    %c0_11 = arith.constant 0 : index
    %7 = vector.load %arg7[%c0_8, %c0_9, %c0_10, %c0_11] : memref<1x4x8x8xf32, #tpu.memory_space<vmem>>, vector<1x4x8x8xf32>
    %8 = vector.shape_cast %7 : vector<1x4x8x8xf32> to vector<4x8x8xf32>
    "tpu.trace_start"() <{level = 10 : i32, message = "hqd,hkd->hqk"}> : () -> ()
    %cst = arith.constant dense<0.000000e+00> : vector<4x8x8xf32>
    %9 = tpu.matmul %4, %6, %cst {dimension_numbers = #tpu.dot_dimension_numbers<[2], [2], [1], [1], [0, 0, 0, 1, 1, 1], [0], [0]>} : vector<4x8x8xf32>, vector<4x8x8xf32>, vector<4x8x8xf32> -> vector<4x8x8xf32>
    "tpu.trace_stop"() : () -> ()
    %cst_12 = arith.constant 0.353553385 : f32
    %10 = vector.broadcast %cst_12 : f32 to vector<4x8x8xf32>
    %11 = arith.mulf %9, %10 : vector<4x8x8xf32>
    %c0_13 = arith.constant 0 : index
    %c0_14 = arith.constant 0 : index
    %c0_15 = arith.constant 0 : index
    %12 = vector.load %arg8[%c0_13, %c0_14, %c0_15] : memref<1x8x3xf32, #tpu.memory_space<vmem>>, vector<1x8x3xf32>
    %13 = vector.shape_cast %12 : vector<1x8x3xf32> to vector<8x3xf32>
    %c0_16 = arith.constant 0 : index
    %c0_17 = arith.constant 0 : index
    %c0_18 = arith.constant 0 : index
    %14 = vector.load %arg9[%c0_16, %c0_17, %c0_18] : memref<1x3x8xf32, #tpu.memory_space<vmem>>, vector<1x3x8xf32>
    %15 = vector.shape_cast %14 : vector<1x3x8xf32> to vector<3x8xf32>
    %c0_19 = arith.constant 0 : index
    %c0_20 = arith.constant 0 : index
    %16 = vector.load %arg10[%c0_19, %c0_20] : memref<16x4xf32, #tpu.memory_space<vmem>>, vector<16x4xf32>
    %c0_21 = arith.constant 0 : index
    %c0_22 = arith.constant 0 : index
    %17 = vector.load %arg11[%c0_21, %c0_22] : memref<16x1xf32, #tpu.memory_space<vmem>>, vector<16x1xf32>
    %c0_23 = arith.constant 0 : index
    %c0_24 = arith.constant 0 : index
    %18 = vector.load %arg12[%c0_23, %c0_24] : memref<16x4xf32, #tpu.memory_space<vmem>>, vector<16x4xf32>
    %19 = vector.extract_strided_slice %13 {offsets = [0, 0], sizes = [8, 1], strides = [1, 1]} : vector<8x3xf32> to vector<8x1xf32>
    %20 = vector.extract_strided_slice %15 {offsets = [0, 0], sizes = [1, 8], strides = [1, 1]} : vector<3x8xf32> to vector<1x8xf32>
    %21 = vector.broadcast %19 : vector<8x1xf32> to vector<8x8xf32>
    %22 = vector.broadcast %20 : vector<1x8xf32> to vector<8x8xf32>
    %23 = arith.subf %21, %22 : vector<8x8xf32>
    %24 = vector.extract_strided_slice %13 {offsets = [0, 1], sizes = [8, 1], strides = [1, 1]} : vector<8x3xf32> to vector<8x1xf32>
    %25 = vector.extract_strided_slice %15 {offsets = [1, 0], sizes = [1, 8], strides = [1, 1]} : vector<3x8xf32> to vector<1x8xf32>
    %26 = vector.broadcast %24 : vector<8x1xf32> to vector<8x8xf32>
    %27 = vector.broadcast %25 : vector<1x8xf32> to vector<8x8xf32>
    %28 = arith.subf %26, %27 : vector<8x8xf32>
    %29 = vector.extract_strided_slice %13 {offsets = [0, 2], sizes = [8, 1], strides = [1, 1]} : vector<8x3xf32> to vector<8x1xf32>
    %30 = vector.extract_strided_slice %15 {offsets = [2, 0], sizes = [1, 8], strides = [1, 1]} : vector<3x8xf32> to vector<1x8xf32>
    %31 = vector.broadcast %29 : vector<8x1xf32> to vector<8x8xf32>
    %32 = vector.broadcast %30 : vector<1x8xf32> to vector<8x8xf32>
    %33 = arith.subf %31, %32 : vector<8x8xf32>
    %34 = arith.mulf %23, %23 : vector<8x8xf32>
    %35 = arith.mulf %28, %28 : vector<8x8xf32>
    %36 = arith.addf %34, %35 : vector<8x8xf32>
    %37 = arith.mulf %33, %33 : vector<8x8xf32>
    %38 = arith.addf %36, %37 : vector<8x8xf32>
    %39 = math.sqrt %38 : vector<8x8xf32>
    %40 = vector.shape_cast %23 : vector<8x8xf32> to vector<8x1x8xf32>
    %41 = vector.extract_strided_slice %16 {offsets = [0, 0], sizes = [16, 1], strides = [1, 1]} : vector<16x4xf32> to vector<16x1xf32>
    %42 = vector.shape_cast %41 : vector<16x1xf32> to vector<1x16x1xf32>
    %43 = vector.broadcast %40 : vector<8x1x8xf32> to vector<8x16x8xf32>
    %44 = vector.broadcast %42 : vector<1x16x1xf32> to vector<8x16x8xf32>
    %45 = arith.mulf %43, %44 : vector<8x16x8xf32>
    %46 = vector.shape_cast %28 : vector<8x8xf32> to vector<8x1x8xf32>
    %47 = vector.extract_strided_slice %16 {offsets = [0, 1], sizes = [16, 1], strides = [1, 1]} : vector<16x4xf32> to vector<16x1xf32>
    %48 = vector.shape_cast %47 : vector<16x1xf32> to vector<1x16x1xf32>
    %49 = vector.broadcast %46 : vector<8x1x8xf32> to vector<8x16x8xf32>
    %50 = vector.broadcast %48 : vector<1x16x1xf32> to vector<8x16x8xf32>
    %51 = arith.mulf %49, %50 : vector<8x16x8xf32>
    %52 = arith.addf %45, %51 : vector<8x16x8xf32>
    %53 = vector.shape_cast %33 : vector<8x8xf32> to vector<8x1x8xf32>
    %54 = vector.extract_strided_slice %16 {offsets = [0, 2], sizes = [16, 1], strides = [1, 1]} : vector<16x4xf32> to vector<16x1xf32>
    %55 = vector.shape_cast %54 : vector<16x1xf32> to vector<1x16x1xf32>
    %56 = vector.broadcast %53 : vector<8x1x8xf32> to vector<8x16x8xf32>
    %57 = vector.broadcast %55 : vector<1x16x1xf32> to vector<8x16x8xf32>
    %58 = arith.mulf %56, %57 : vector<8x16x8xf32>
    %59 = arith.addf %52, %58 : vector<8x16x8xf32>
    %60 = vector.shape_cast %39 : vector<8x8xf32> to vector<8x1x8xf32>
    %61 = vector.extract_strided_slice %16 {offsets = [0, 3], sizes = [16, 1], strides = [1, 1]} : vector<16x4xf32> to vector<16x1xf32>
    %62 = vector.shape_cast %61 : vector<16x1xf32> to vector<1x16x1xf32>
    %63 = vector.broadcast %60 : vector<8x1x8xf32> to vector<8x16x8xf32>
    %64 = vector.broadcast %62 : vector<1x16x1xf32> to vector<8x16x8xf32>
    %65 = arith.mulf %63, %64 : vector<8x16x8xf32>
    %66 = arith.addf %59, %65 : vector<8x16x8xf32>
    %67 = vector.shape_cast %17 : vector<16x1xf32> to vector<1x16x1xf32>
    %68 = vector.broadcast %67 : vector<1x16x1xf32> to vector<8x16x8xf32>
    %69 = arith.addf %66, %68 : vector<8x16x8xf32>
    %cst_25 = arith.constant 5.000000e-01 : f32
    %70 = vector.broadcast %cst_25 : f32 to vector<8x16x8xf32>
    %71 = arith.mulf %70, %69 : vector<8x16x8xf32>
    %cst_26 = arith.constant 0.707106769 : f32
    %72 = vector.broadcast %cst_26 : f32 to vector<8x16x8xf32>
    %73 = arith.mulf %69, %72 : vector<8x16x8xf32>
    %cst_27 = arith.constant 0.000000e+00 : f32
    %74 = vector.broadcast %cst_27 : f32 to vector<8x16x8xf32>
    %75 = arith.cmpf olt, %73, %74 : vector<8x16x8xf32>
    %cst_28 = arith.constant -1.000000e+00 : f32
    %cst_29 = arith.constant 1.000000e+00 : f32
    %76 = vector.broadcast %cst_28 : f32 to vector<8x16x8xf32>
    %77 = vector.broadcast %cst_29 : f32 to vector<8x16x8xf32>
    %78 = arith.select %75, %76, %77 : vector<8x16x8xi1>, vector<8x16x8xf32>
    %79 = math.absf %73 : vector<8x16x8xf32>
    %cst_30 = arith.constant 0.327591091 : f32
    %80 = vector.broadcast %cst_30 : f32 to vector<8x16x8xf32>
    %81 = arith.mulf %80, %79 : vector<8x16x8xf32>
    %cst_31 = arith.constant 1.000000e+00 : f32
    %82 = vector.broadcast %cst_31 : f32 to vector<8x16x8xf32>
    %83 = arith.addf %82, %81 : vector<8x16x8xf32>
    %cst_32 = arith.constant 1.000000e+00 : f32
    %84 = vector.broadcast %cst_32 : f32 to vector<8x16x8xf32>
    %85 = arith.divf %84, %83 : vector<8x16x8xf32>
    %cst_33 = arith.constant 1.06140542 : f32
    %86 = vector.broadcast %cst_33 : f32 to vector<8x16x8xf32>
    %87 = arith.mulf %86, %85 : vector<8x16x8xf32>
    %cst_34 = arith.constant -1.45315206 : f32
    %88 = vector.broadcast %cst_34 : f32 to vector<8x16x8xf32>
    %89 = arith.addf %87, %88 : vector<8x16x8xf32>
    %90 = arith.mulf %89, %85 : vector<8x16x8xf32>
    %cst_35 = arith.constant 1.42141378 : f32
    %91 = vector.broadcast %cst_35 : f32 to vector<8x16x8xf32>
    %92 = arith.addf %90, %91 : vector<8x16x8xf32>
    %93 = arith.mulf %92, %85 : vector<8x16x8xf32>
    %cst_36 = arith.constant -0.284496725 : f32
    %94 = vector.broadcast %cst_36 : f32 to vector<8x16x8xf32>
    %95 = arith.addf %93, %94 : vector<8x16x8xf32>
    %96 = arith.mulf %95, %85 : vector<8x16x8xf32>
    %cst_37 = arith.constant 0.254829586 : f32
    %97 = vector.broadcast %cst_37 : f32 to vector<8x16x8xf32>
    %98 = arith.addf %96, %97 : vector<8x16x8xf32>
    %99 = arith.mulf %98, %85 : vector<8x16x8xf32>
    %cst_38 = arith.constant 0.000000e+00 : f32
    %100 = vector.broadcast %cst_38 : f32 to vector<8x16x8xf32>
    %101 = arith.subf %100, %79 : vector<8x16x8xf32>
    %102 = arith.mulf %101, %79 : vector<8x16x8xf32>
    %103 = math.exp %102 : vector<8x16x8xf32>
    %104 = arith.mulf %99, %103 : vector<8x16x8xf32>
    %cst_39 = arith.constant 1.000000e+00 : f32
    %105 = vector.broadcast %cst_39 : f32 to vector<8x16x8xf32>
    %106 = arith.subf %105, %104 : vector<8x16x8xf32>
    %107 = arith.mulf %78, %106 : vector<8x16x8xf32>
    %cst_40 = arith.constant 1.000000e+00 : f32
    %108 = vector.broadcast %cst_40 : f32 to vector<8x16x8xf32>
    %109 = arith.addf %108, %107 : vector<8x16x8xf32>
    %110 = arith.mulf %71, %109 : vector<8x16x8xf32>
    %111 = vector.extract_strided_slice %18 {offsets = [0, 0], sizes = [16, 1], strides = [1, 1]} : vector<16x4xf32> to vector<16x1xf32>
    %112 = vector.shape_cast %111 : vector<16x1xf32> to vector<1x16x1xf32>
    %113 = vector.broadcast %112 : vector<1x16x1xf32> to vector<8x16x8xf32>
    %114 = arith.mulf %110, %113 : vector<8x16x8xf32>
    %cst_41 = arith.constant dense<0.000000e+00> : vector<8x8xf32>
    %115 = vector.multi_reduction <add>, %114, %cst_41 [1] : vector<8x16x8xf32> to vector<8x8xf32>
    %c0_42 = arith.constant 0 : index
    %116 = memref.load %arg4[%c0_42] : memref<4xf32, #tpu.memory_space<smem>>
    %117 = vector.broadcast %116 : f32 to vector<8x8xf32>
    %118 = arith.addf %115, %117 : vector<8x8xf32>
    %119 = vector.extract_strided_slice %18 {offsets = [0, 1], sizes = [16, 1], strides = [1, 1]} : vector<16x4xf32> to vector<16x1xf32>
    %120 = vector.shape_cast %119 : vector<16x1xf32> to vector<1x16x1xf32>
    %121 = vector.broadcast %120 : vector<1x16x1xf32> to vector<8x16x8xf32>
    %122 = arith.mulf %110, %121 : vector<8x16x8xf32>
    %cst_43 = arith.constant dense<0.000000e+00> : vector<8x8xf32>
    %123 = vector.multi_reduction <add>, %122, %cst_43 [1] : vector<8x16x8xf32> to vector<8x8xf32>
    %c1 = arith.constant 1 : index
    %124 = memref.load %arg4[%c1] : memref<4xf32, #tpu.memory_space<smem>>
    %125 = vector.broadcast %124 : f32 to vector<8x8xf32>
    %126 = arith.addf %123, %125 : vector<8x8xf32>
    %127 = vector.extract_strided_slice %18 {offsets = [0, 2], sizes = [16, 1], strides = [1, 1]} : vector<16x4xf32> to vector<16x1xf32>
    %128 = vector.shape_cast %127 : vector<16x1xf32> to vector<1x16x1xf32>
    %129 = vector.broadcast %128 : vector<1x16x1xf32> to vector<8x16x8xf32>
    %130 = arith.mulf %110, %129 : vector<8x16x8xf32>
    %cst_44 = arith.constant dense<0.000000e+00> : vector<8x8xf32>
    %131 = vector.multi_reduction <add>, %130, %cst_44 [1] : vector<8x16x8xf32> to vector<8x8xf32>
    %c2 = arith.constant 2 : index
    %132 = memref.load %arg4[%c2] : memref<4xf32, #tpu.memory_space<smem>>
    %133 = vector.broadcast %132 : f32 to vector<8x8xf32>
    %134 = arith.addf %131, %133 : vector<8x8xf32>
    %135 = vector.extract_strided_slice %18 {offsets = [0, 3], sizes = [16, 1], strides = [1, 1]} : vector<16x4xf32> to vector<16x1xf32>
    %136 = vector.shape_cast %135 : vector<16x1xf32> to vector<1x16x1xf32>
    %137 = vector.broadcast %136 : vector<1x16x1xf32> to vector<8x16x8xf32>
    %138 = arith.mulf %110, %137 : vector<8x16x8xf32>
    %cst_45 = arith.constant dense<0.000000e+00> : vector<8x8xf32>
    %139 = vector.multi_reduction <add>, %138, %cst_45 [1] : vector<8x16x8xf32> to vector<8x8xf32>
    %c3 = arith.constant 3 : index
    %140 = memref.load %arg4[%c3] : memref<4xf32, #tpu.memory_space<smem>>
    %141 = vector.broadcast %140 : f32 to vector<8x8xf32>
    %142 = arith.addf %139, %141 : vector<8x8xf32>
    %143 = vector.shape_cast %118 : vector<8x8xf32> to vector<1x8x8xf32>
    %144 = vector.shape_cast %126 : vector<8x8xf32> to vector<1x8x8xf32>
    %145 = vector.shape_cast %134 : vector<8x8xf32> to vector<1x8x8xf32>
    %146 = vector.shape_cast %142 : vector<8x8xf32> to vector<1x8x8xf32>
    %147 = tpu.concatenate %143, %144, %145, %146 in 0 : vector<1x8x8xf32>, vector<1x8x8xf32>, vector<1x8x8xf32>, vector<1x8x8xf32> -> vector<4x8x8xf32>
    %c8_i32 = arith.constant 8 : i32
    %148 = arith.muli %arg1, %c8_i32 : i32
    %149 = tpu.iota {dimensions = array<i32: 0>} : vector<8x8xi32>
    %150 = vector.broadcast %148 : i32 to vector<8x8xi32>
    %151 = arith.addi %150, %149 : vector<8x8xi32>
    %c8_i32_46 = arith.constant 8 : i32
    %152 = arith.muli %arg2, %c8_i32_46 : i32
    %153 = tpu.iota {dimensions = array<i32: 1>} : vector<8x8xi32>
    %154 = vector.broadcast %152 : i32 to vector<8x8xi32>
    %155 = arith.addi %154, %153 : vector<8x8xi32>
    %c1_i32 = arith.constant 1 : i32
    %156 = vector.broadcast %c1_i32 : i32 to vector<8x8xi32>
    %157 = arith.cmpi sge, %151, %156 : vector<8x8xi32>
    %c1_i32_47 = arith.constant 1 : i32
    %158 = vector.broadcast %c1_i32_47 : i32 to vector<8x8xi32>
    %159 = arith.cmpi sge, %155, %158 : vector<8x8xi32>
    %160 = arith.andi %157, %159 : vector<8x8xi1>
    %161 = vector.shape_cast %160 : vector<8x8xi1> to vector<1x8x8xi1>
    %cst_48 = arith.constant 0.000000e+00 : f32
    %162 = vector.shape_cast %161 : vector<1x8x8xi1> to vector<1x8x8xi1>
    %163 = vector.broadcast %162 : vector<1x8x8xi1> to vector<4x8x8xi1>
    %164 = vector.broadcast %cst_48 : f32 to vector<4x8x8xf32>
    %165 = arith.select %163, %147, %164 : vector<4x8x8xi1>, vector<4x8x8xf32>
    %c0_49 = arith.constant 0 : index
    %166 = memref.load %arg3[%c0_49] : memref<1xf32, #tpu.memory_space<smem>>
    %167 = vector.broadcast %166 : f32 to vector<4x8x8xf32>
    %168 = arith.mulf %167, %165 : vector<4x8x8xf32>
    %169 = arith.addf %11, %168 : vector<4x8x8xf32>
    %c0_50 = arith.constant 0 : index
    %c0_51 = arith.constant 0 : index
    %c0_52 = arith.constant 0 : index
    %170 = vector.load %arg13[%c0_50, %c0_51, %c0_52] : memref<1x1x8xf32, #tpu.memory_space<vmem>>, vector<1x1x8xf32>
    %171 = vector.shape_cast %170 : vector<1x1x8xf32> to vector<1x8xf32>
    %172 = vector.shape_cast %171 : vector<1x8xf32> to vector<1x1x8xf32>
    %173 = vector.broadcast %172 : vector<1x1x8xf32> to vector<4x8x8xf32>
    %174 = arith.addf %169, %173 : vector<4x8x8xf32>
    %c0_53 = arith.constant 0 : index
    %c0_54 = arith.constant 0 : index
    %c0_55 = arith.constant 0 : index
    %175 = vector.load %arg15[%c0_53, %c0_54, %c0_55] : memref<4x8x1xf32, #tpu.memory_space<vmem>>, vector<4x8x1xf32>
    %cst_56 = arith.constant dense<0xFF800000> : vector<4x8xf32>
    %176 = vector.multi_reduction <maximumf>, %174, %cst_56 [2] : vector<4x8x8xf32> to vector<4x8xf32>
    %177 = vector.shape_cast %176 : vector<4x8xf32> to vector<4x8x1xf32>
    %178 = arith.maximumf %175, %177 : vector<4x8x1xf32>
    %179 = arith.subf %175, %178 : vector<4x8x1xf32>
    %180 = math.exp %179 : vector<4x8x1xf32>
    %181 = vector.broadcast %178 : vector<4x8x1xf32> to vector<4x8x8xf32>
    %182 = arith.subf %174, %181 : vector<4x8x8xf32>
    %183 = math.exp %182 : vector<4x8x8xf32>
    %c0_57 = arith.constant 0 : index
    %c0_58 = arith.constant 0 : index
    %c0_59 = arith.constant 0 : index
    %184 = vector.load %arg16[%c0_57, %c0_58, %c0_59] : memref<4x8x1xf32, #tpu.memory_space<vmem>>, vector<4x8x1xf32>
    %185 = arith.mulf %180, %184 : vector<4x8x1xf32>
    %cst_60 = arith.constant dense<0.000000e+00> : vector<4x8xf32>
    %186 = vector.multi_reduction <add>, %183, %cst_60 [2] : vector<4x8x8xf32> to vector<4x8xf32>
    %187 = vector.shape_cast %186 : vector<4x8xf32> to vector<4x8x1xf32>
    %188 = arith.addf %185, %187 : vector<4x8x1xf32>
    %c0_61 = arith.constant 0 : index
    %c0_62 = arith.constant 0 : index
    %c0_63 = arith.constant 0 : index
    %189 = vector.load %arg16[%c0_61, %c0_62, %c0_63] : memref<4x8x1xf32, #tpu.memory_space<vmem>>, vector<4x8x1xf32>
    tpu.vector_store %arg16[%c0_61, %c0_62, %c0_63], %188 {strides = array<i32>} : memref<4x8x1xf32, #tpu.memory_space<vmem>>, vector<4x8x1xf32>,
    %c0_64 = arith.constant 0 : index
    %c0_65 = arith.constant 0 : index
    %c0_66 = arith.constant 0 : index
    %190 = vector.load %arg17[%c0_64, %c0_65, %c0_66] : memref<4x8x8xf32, #tpu.memory_space<vmem>>, vector<4x8x8xf32>
    %191 = vector.broadcast %180 : vector<4x8x1xf32> to vector<4x8x8xf32>
    %192 = arith.mulf %191, %190 : vector<4x8x8xf32>
    "tpu.trace_start"() <{level = 10 : i32, message = "hqk,hkd->hqd"}> : () -> ()
    %cst_67 = arith.constant dense<0.000000e+00> : vector<4x8x8xf32>
    %193 = tpu.matmul %183, %8, %cst_67 {dimension_numbers = #tpu.dot_dimension_numbers<[2], [1], [1], [2], [0, 0, 0, 1, 1, 2], [0], [0]>} : vector<4x8x8xf32>, vector<4x8x8xf32>, vector<4x8x8xf32> -> vector<4x8x8xf32>
    "tpu.trace_stop"() : () -> ()
    %194 = arith.addf %192, %193 : vector<4x8x8xf32>
    %c0_68 = arith.constant 0 : index
    %c0_69 = arith.constant 0 : index
    %c0_70 = arith.constant 0 : index
    %195 = vector.load %arg17[%c0_68, %c0_69, %c0_70] : memref<4x8x8xf32, #tpu.memory_space<vmem>>, vector<4x8x8xf32>
    tpu.vector_store %arg17[%c0_68, %c0_69, %c0_70], %194 {strides = array<i32>} : memref<4x8x8xf32, #tpu.memory_space<vmem>>, vector<4x8x8xf32>,
    %c0_71 = arith.constant 0 : index
    %c0_72 = arith.constant 0 : index
    %c0_73 = arith.constant 0 : index
    %196 = vector.load %arg15[%c0_71, %c0_72, %c0_73] : memref<4x8x1xf32, #tpu.memory_space<vmem>>, vector<4x8x1xf32>
    tpu.vector_store %arg15[%c0_71, %c0_72, %c0_73], %178 {strides = array<i32>} : memref<4x8x1xf32, #tpu.memory_space<vmem>>, vector<4x8x1xf32>,
    %c0_i32_74 = arith.constant 0 : i32
    %197 = arith.cmpi eq, %arg2, %c0_i32_74 : i32
    %198 = arith.extui %197 : i1 to i32
    %c0_i32_75 = arith.constant 0 : i32
    %199 = arith.cmpi ne, %198, %c0_i32_75 : i32
    scf.if %199 {
      %c0_76 = arith.constant 0 : index
      %c0_77 = arith.constant 0 : index
      %c0_78 = arith.constant 0 : index
      %200 = vector.load %arg16[%c0_76, %c0_77, %c0_78] : memref<4x8x1xf32, #tpu.memory_space<vmem>>, vector<4x8x1xf32>
      %201 = tpu.reciprocal %200 {approx = true} : vector<4x8x1xf32> -> vector<4x8x1xf32>
      %c0_79 = arith.constant 0 : index
      %c0_80 = arith.constant 0 : index
      %c0_81 = arith.constant 0 : index
      %202 = vector.load %arg17[%c0_79, %c0_80, %c0_81] : memref<4x8x8xf32, #tpu.memory_space<vmem>>, vector<4x8x8xf32>
      %203 = vector.broadcast %201 : vector<4x8x1xf32> to vector<4x8x8xf32>
      %204 = arith.mulf %202, %203 : vector<4x8x8xf32>
      %c0_82 = arith.constant 0 : index
      %c0_83 = arith.constant 0 : index
      %c0_84 = arith.constant 0 : index
      %c0_85 = arith.constant 0 : index
      %205 = vector.load %arg14[%c0_82, %c0_83, %c0_84, %c0_85] : memref<1x4x8x8xf32, #tpu.memory_space<vmem>>, vector<1x4x8x8xf32>
      %206 = vector.shape_cast %205 : vector<1x4x8x8xf32> to vector<4x8x8xf32>
      %207 = vector.shape_cast %204 : vector<4x8x8xf32> to vector<1x4x8x8xf32>
      tpu.vector_store %arg14[%c0_82, %c0_83, %c0_84, %c0_85], %207 {strides = array<i32>} : memref<1x4x8x8xf32, #tpu.memory_space<vmem>>, vector<1x4x8x8xf32>,
    } else {
    }
    return
  }
  func.func @transform_0(%arg0: i32, %arg1: i32, %arg2: i32) -> i32 {
    %c0_i32 = arith.constant 0 : i32
    %c0_i32_0 = arith.constant 0 : i32
    return %c0_i32 : i32
  }
  func.func @transform_1(%arg0: i32, %arg1: i32, %arg2: i32) -> i32 {
    %c0_i32 = arith.constant 0 : i32
    %c0_i32_0 = arith.constant 0 : i32
    return %c0_i32 : i32
  }
  func.func @transform_2(%arg0: i32, %arg1: i32, %arg2: i32) -> (i32, i32, i32, i32) {
    %c0_i32 = arith.constant 0 : i32
    %c0_i32_0 = arith.constant 0 : i32
    %c0_i32_1 = arith.constant 0 : i32
    return %arg0, %c0_i32, %arg1, %c0_i32_0 : i32, i32, i32, i32
  }
  func.func @transform_3(%arg0: i32, %arg1: i32, %arg2: i32) -> (i32, i32, i32, i32) {
    %c0_i32 = arith.constant 0 : i32
    %c0_i32_0 = arith.constant 0 : i32
    %c0_i32_1 = arith.constant 0 : i32
    return %arg0, %c0_i32, %arg2, %c0_i32_0 : i32, i32, i32, i32
  }
  func.func @transform_4(%arg0: i32, %arg1: i32, %arg2: i32) -> (i32, i32, i32, i32) {
    %c0_i32 = arith.constant 0 : i32
    %c0_i32_0 = arith.constant 0 : i32
    %c0_i32_1 = arith.constant 0 : i32
    return %arg0, %c0_i32, %arg2, %c0_i32_0 : i32, i32, i32, i32
  }
  func.func @transform_5(%arg0: i32, %arg1: i32, %arg2: i32) -> (i32, i32, i32) {
    %c0_i32 = arith.constant 0 : i32
    %c0_i32_0 = arith.constant 0 : i32
    return %arg0, %arg1, %c0_i32 : i32, i32, i32
  }
  func.func @transform_6(%arg0: i32, %arg1: i32, %arg2: i32) -> (i32, i32, i32) {
    %c0_i32 = arith.constant 0 : i32
    %c0_i32_0 = arith.constant 0 : i32
    return %arg0, %c0_i32, %arg2 : i32, i32, i32
  }
  func.func @transform_7(%arg0: i32, %arg1: i32, %arg2: i32) -> (i32, i32) {
    %c0_i32 = arith.constant 0 : i32
    %c0_i32_0 = arith.constant 0 : i32
    %c0_i32_1 = arith.constant 0 : i32
    return %c0_i32, %c0_i32_0 : i32, i32
  }
  func.func @transform_8(%arg0: i32, %arg1: i32, %arg2: i32) -> (i32, i32) {
    %c0_i32 = arith.constant 0 : i32
    %c0_i32_0 = arith.constant 0 : i32
    %c0_i32_1 = arith.constant 0 : i32
    return %c0_i32, %c0_i32_0 : i32, i32
  }
  func.func @transform_9(%arg0: i32, %arg1: i32, %arg2: i32) -> (i32, i32) {
    %c0_i32 = arith.constant 0 : i32
    %c0_i32_0 = arith.constant 0 : i32
    %c0_i32_1 = arith.constant 0 : i32
    return %c0_i32, %c0_i32_0 : i32, i32
  }
  func.func @transform_10(%arg0: i32, %arg1: i32, %arg2: i32) -> (i32, i32, i32) {
    %c0_i32 = arith.constant 0 : i32
    %c0_i32_0 = arith.constant 0 : i32
    return %arg0, %c0_i32, %arg2 : i32, i32, i32
  }
  func.func @transform_11(%arg0: i32, %arg1: i32, %arg2: i32) -> (i32, i32, i32, i32) {
    %c0_i32 = arith.constant 0 : i32
    %c0_i32_0 = arith.constant 0 : i32
    %c0_i32_1 = arith.constant 0 : i32
    return %arg0, %c0_i32, %arg1, %c0_i32_0 : i32, i32, i32, i32
  }
}

module attributes {stable_mosaic.version = 11 : i64} {
  func.func @_ffn_kernel(%arg0: i32, %arg1: i32, %arg2: memref<16x32xf32, #tpu.memory_space<vmem>>, %arg3: memref<32x128xf32, #tpu.memory_space<vmem>>, %arg4: memref<1x128xf32, #tpu.memory_space<vmem>>, %arg5: memref<128x32xf32, #tpu.memory_space<vmem>>, %arg6: memref<1x32xf32, #tpu.memory_space<vmem>>, %arg7: memref<16x32xf32, #tpu.memory_space<vmem>>, %arg8: memref<16x32xf32, #tpu.memory_space<vmem>>) attributes {dimension_semantics = [#tpu.dimension_semantics<parallel>, #tpu.dimension_semantics<arbitrary>], iteration_bounds = array<i64: 1, 1>, scalar_prefetch = 0 : i64, scratch_operands = 1 : i64, tpu.core_type = #tpu.core_type<tc>, window_params = [{transform_indices = @transform_0, window_bounds = array<i64: 16, 32>}, {transform_indices = @transform_1, window_bounds = array<i64: 32, 128>}, {transform_indices = @transform_2, window_bounds = array<i64: 1, 128>}, {transform_indices = @transform_3, window_bounds = array<i64: 128, 32>}, {pipeline_mode = #tpu.pipeline_mode<synchronous>, transform_indices = @transform_4, window_bounds = array<i64: 1, 32>}, {transform_indices = @transform_5, window_bounds = array<i64: 16, 32>}]} {
    %c0_i32 = arith.constant 0 : i32
    %0 = arith.cmpi eq, %arg1, %c0_i32 : i32
    %1 = arith.extui %0 : i1 to i32
    %c0_i32_0 = arith.constant 0 : i32
    %2 = arith.cmpi ne, %1, %c0_i32_0 : i32
    scf.if %2 {
      %cst_31 = arith.constant 0.000000e+00 : f32
      %58 = vector.broadcast %cst_31 : f32 to vector<16x32xf32>
      %c0_32 = arith.constant 0 : index
      %c0_33 = arith.constant 0 : index
      %59 = vector.load %arg8[%c0_32, %c0_33] : memref<16x32xf32, #tpu.memory_space<vmem>>, vector<16x32xf32>
      tpu.vector_store %arg8[%c0_32, %c0_33], %58 {strides = array<i32>} : memref<16x32xf32, #tpu.memory_space<vmem>>, vector<16x32xf32>,
    } else {
    }
    %c0 = arith.constant 0 : index
    %c0_1 = arith.constant 0 : index
    %3 = vector.load %arg2[%c0, %c0_1] : memref<16x32xf32, #tpu.memory_space<vmem>>, vector<16x32xf32>
    %c0_2 = arith.constant 0 : index
    %c0_3 = arith.constant 0 : index
    %4 = vector.load %arg3[%c0_2, %c0_3] : memref<32x128xf32, #tpu.memory_space<vmem>>, vector<32x128xf32>
    %cst = arith.constant dense<0.000000e+00> : vector<16x128xf32>
    %5 = tpu.matmul %3, %4, %cst {dimension_numbers = #tpu.dot_dimension_numbers<[1], [0], [0], [1], [0, 0, 1, 1], [], []>} : vector<16x32xf32>, vector<32x128xf32>, vector<16x128xf32> -> vector<16x128xf32>
    %c0_4 = arith.constant 0 : index
    %c0_5 = arith.constant 0 : index
    %6 = vector.load %arg4[%c0_4, %c0_5] : memref<1x128xf32, #tpu.memory_space<vmem>>, vector<1x128xf32>
    %7 = vector.broadcast %6 : vector<1x128xf32> to vector<16x128xf32>
    %8 = arith.addf %5, %7 : vector<16x128xf32>
    %cst_6 = arith.constant 5.000000e-01 : f32
    %9 = vector.broadcast %cst_6 : f32 to vector<16x128xf32>
    %10 = arith.mulf %9, %8 : vector<16x128xf32>
    %cst_7 = arith.constant 0.707106769 : f32
    %11 = vector.broadcast %cst_7 : f32 to vector<16x128xf32>
    %12 = arith.mulf %8, %11 : vector<16x128xf32>
    %cst_8 = arith.constant 0.000000e+00 : f32
    %13 = vector.broadcast %cst_8 : f32 to vector<16x128xf32>
    %14 = arith.cmpf olt, %12, %13 : vector<16x128xf32>
    %cst_9 = arith.constant -1.000000e+00 : f32
    %cst_10 = arith.constant 1.000000e+00 : f32
    %15 = vector.broadcast %cst_9 : f32 to vector<16x128xf32>
    %16 = vector.broadcast %cst_10 : f32 to vector<16x128xf32>
    %17 = arith.select %14, %15, %16 : vector<16x128xi1>, vector<16x128xf32>
    %18 = math.absf %12 : vector<16x128xf32>
    %cst_11 = arith.constant 0.327591091 : f32
    %19 = vector.broadcast %cst_11 : f32 to vector<16x128xf32>
    %20 = arith.mulf %19, %18 : vector<16x128xf32>
    %cst_12 = arith.constant 1.000000e+00 : f32
    %21 = vector.broadcast %cst_12 : f32 to vector<16x128xf32>
    %22 = arith.addf %21, %20 : vector<16x128xf32>
    %cst_13 = arith.constant 1.000000e+00 : f32
    %23 = vector.broadcast %cst_13 : f32 to vector<16x128xf32>
    %24 = arith.divf %23, %22 : vector<16x128xf32>
    %cst_14 = arith.constant 1.06140542 : f32
    %25 = vector.broadcast %cst_14 : f32 to vector<16x128xf32>
    %26 = arith.mulf %25, %24 : vector<16x128xf32>
    %cst_15 = arith.constant -1.45315206 : f32
    %27 = vector.broadcast %cst_15 : f32 to vector<16x128xf32>
    %28 = arith.addf %26, %27 : vector<16x128xf32>
    %29 = arith.mulf %28, %24 : vector<16x128xf32>
    %cst_16 = arith.constant 1.42141378 : f32
    %30 = vector.broadcast %cst_16 : f32 to vector<16x128xf32>
    %31 = arith.addf %29, %30 : vector<16x128xf32>
    %32 = arith.mulf %31, %24 : vector<16x128xf32>
    %cst_17 = arith.constant -0.284496725 : f32
    %33 = vector.broadcast %cst_17 : f32 to vector<16x128xf32>
    %34 = arith.addf %32, %33 : vector<16x128xf32>
    %35 = arith.mulf %34, %24 : vector<16x128xf32>
    %cst_18 = arith.constant 0.254829586 : f32
    %36 = vector.broadcast %cst_18 : f32 to vector<16x128xf32>
    %37 = arith.addf %35, %36 : vector<16x128xf32>
    %38 = arith.mulf %37, %24 : vector<16x128xf32>
    %cst_19 = arith.constant 0.000000e+00 : f32
    %39 = vector.broadcast %cst_19 : f32 to vector<16x128xf32>
    %40 = arith.subf %39, %18 : vector<16x128xf32>
    %41 = arith.mulf %40, %18 : vector<16x128xf32>
    %42 = math.exp %41 : vector<16x128xf32>
    %43 = arith.mulf %38, %42 : vector<16x128xf32>
    %cst_20 = arith.constant 1.000000e+00 : f32
    %44 = vector.broadcast %cst_20 : f32 to vector<16x128xf32>
    %45 = arith.subf %44, %43 : vector<16x128xf32>
    %46 = arith.mulf %17, %45 : vector<16x128xf32>
    %cst_21 = arith.constant 1.000000e+00 : f32
    %47 = vector.broadcast %cst_21 : f32 to vector<16x128xf32>
    %48 = arith.addf %47, %46 : vector<16x128xf32>
    %49 = arith.mulf %10, %48 : vector<16x128xf32>
    %c0_22 = arith.constant 0 : index
    %c0_23 = arith.constant 0 : index
    %50 = vector.load %arg8[%c0_22, %c0_23] : memref<16x32xf32, #tpu.memory_space<vmem>>, vector<16x32xf32>
    %c0_24 = arith.constant 0 : index
    %c0_25 = arith.constant 0 : index
    %51 = vector.load %arg5[%c0_24, %c0_25] : memref<128x32xf32, #tpu.memory_space<vmem>>, vector<128x32xf32>
    %cst_26 = arith.constant dense<0.000000e+00> : vector<16x32xf32>
    %52 = tpu.matmul %49, %51, %cst_26 {dimension_numbers = #tpu.dot_dimension_numbers<[1], [0], [0], [1], [0, 0, 1, 1], [], []>} : vector<16x128xf32>, vector<128x32xf32>, vector<16x32xf32> -> vector<16x32xf32>
    %53 = arith.addf %50, %52 : vector<16x32xf32>
    %c0_27 = arith.constant 0 : index
    %c0_28 = arith.constant 0 : index
    %54 = vector.load %arg8[%c0_27, %c0_28] : memref<16x32xf32, #tpu.memory_space<vmem>>, vector<16x32xf32>
    tpu.vector_store %arg8[%c0_27, %c0_28], %53 {strides = array<i32>} : memref<16x32xf32, #tpu.memory_space<vmem>>, vector<16x32xf32>,
    %c0_i32_29 = arith.constant 0 : i32
    %55 = arith.cmpi eq, %arg1, %c0_i32_29 : i32
    %56 = arith.extui %55 : i1 to i32
    %c0_i32_30 = arith.constant 0 : i32
    %57 = arith.cmpi ne, %56, %c0_i32_30 : i32
    scf.if %57 {
      %c0_31 = arith.constant 0 : index
      %c0_32 = arith.constant 0 : index
      %58 = vector.load %arg8[%c0_31, %c0_32] : memref<16x32xf32, #tpu.memory_space<vmem>>, vector<16x32xf32>
      %c0_33 = arith.constant 0 : index
      %c0_34 = arith.constant 0 : index
      %59 = vector.load %arg6[%c0_33, %c0_34] : memref<1x32xf32, #tpu.memory_space<vmem>>, vector<1x32xf32>
      %60 = vector.broadcast %59 : vector<1x32xf32> to vector<16x32xf32>
      %61 = arith.addf %58, %60 : vector<16x32xf32>
      %c0_35 = arith.constant 0 : index
      %c0_36 = arith.constant 0 : index
      %62 = vector.load %arg7[%c0_35, %c0_36] : memref<16x32xf32, #tpu.memory_space<vmem>>, vector<16x32xf32>
      tpu.vector_store %arg7[%c0_35, %c0_36], %61 {strides = array<i32>} : memref<16x32xf32, #tpu.memory_space<vmem>>, vector<16x32xf32>,
    } else {
    }
    return
  }
  func.func @transform_0(%arg0: i32, %arg1: i32) -> (i32, i32) {
    %c0_i32 = arith.constant 0 : i32
    %c0_i32_0 = arith.constant 0 : i32
    return %arg0, %c0_i32 : i32, i32
  }
  func.func @transform_1(%arg0: i32, %arg1: i32) -> (i32, i32) {
    %c0_i32 = arith.constant 0 : i32
    %c0_i32_0 = arith.constant 0 : i32
    return %c0_i32, %arg1 : i32, i32
  }
  func.func @transform_2(%arg0: i32, %arg1: i32) -> (i32, i32) {
    %c0_i32 = arith.constant 0 : i32
    %c0_i32_0 = arith.constant 0 : i32
    return %c0_i32, %arg1 : i32, i32
  }
  func.func @transform_3(%arg0: i32, %arg1: i32) -> (i32, i32) {
    %c0_i32 = arith.constant 0 : i32
    %c0_i32_0 = arith.constant 0 : i32
    return %arg1, %c0_i32 : i32, i32
  }
  func.func @transform_4(%arg0: i32, %arg1: i32) -> (i32, i32) {
    %c0_i32 = arith.constant 0 : i32
    %c0_i32_0 = arith.constant 0 : i32
    %c0_i32_1 = arith.constant 0 : i32
    return %c0_i32, %c0_i32_0 : i32, i32
  }
  func.func @transform_5(%arg0: i32, %arg1: i32) -> (i32, i32) {
    %c0_i32 = arith.constant 0 : i32
    %c0_i32_0 = arith.constant 0 : i32
    return %arg0, %c0_i32 : i32, i32
  }
}

module attributes {stable_mosaic.version = 11 : i64} {
  func.func @_add_layernorm_kernel(%arg0: i32, %arg1: memref<16x32xf32, #tpu.memory_space<vmem>>, %arg2: memref<16x32xf32, #tpu.memory_space<vmem>>, %arg3: memref<1x32xf32, #tpu.memory_space<vmem>>, %arg4: memref<1x32xf32, #tpu.memory_space<vmem>>, %arg5: memref<16x32xf32, #tpu.memory_space<vmem>>) attributes {dimension_semantics = [#tpu.dimension_semantics<parallel>], iteration_bounds = array<i64: 1>, scalar_prefetch = 0 : i64, scratch_operands = 0 : i64, tpu.core_type = #tpu.core_type<tc>, window_params = [{transform_indices = @transform_0, window_bounds = array<i64: 16, 32>}, {transform_indices = @transform_1, window_bounds = array<i64: 16, 32>}, {pipeline_mode = #tpu.pipeline_mode<synchronous>, transform_indices = @transform_2, window_bounds = array<i64: 1, 32>}, {pipeline_mode = #tpu.pipeline_mode<synchronous>, transform_indices = @transform_3, window_bounds = array<i64: 1, 32>}, {transform_indices = @transform_4, window_bounds = array<i64: 16, 32>}]} {
    %c0 = arith.constant 0 : index
    %c0_0 = arith.constant 0 : index
    %0 = vector.load %arg1[%c0, %c0_0] : memref<16x32xf32, #tpu.memory_space<vmem>>, vector<16x32xf32>
    %c0_1 = arith.constant 0 : index
    %c0_2 = arith.constant 0 : index
    %1 = vector.load %arg2[%c0_1, %c0_2] : memref<16x32xf32, #tpu.memory_space<vmem>>, vector<16x32xf32>
    %2 = arith.addf %0, %1 : vector<16x32xf32>
    %cst = arith.constant dense<0.000000e+00> : vector<16xf32>
    %3 = vector.multi_reduction <add>, %2, %cst [1] : vector<16x32xf32> to vector<16xf32>
    %4 = vector.shape_cast %3 : vector<16xf32> to vector<16x1xf32>
    %cst_3 = arith.constant 3.200000e+01 : f32
    %5 = vector.broadcast %cst_3 : f32 to vector<16x1xf32>
    %6 = arith.divf %4, %5 : vector<16x1xf32>
    %7 = vector.broadcast %6 : vector<16x1xf32> to vector<16x32xf32>
    %8 = arith.subf %2, %7 : vector<16x32xf32>
    %9 = arith.mulf %8, %8 : vector<16x32xf32>
    %cst_4 = arith.constant dense<0.000000e+00> : vector<16xf32>
    %10 = vector.multi_reduction <add>, %9, %cst_4 [1] : vector<16x32xf32> to vector<16xf32>
    %11 = vector.shape_cast %10 : vector<16xf32> to vector<16x1xf32>
    %cst_5 = arith.constant 3.200000e+01 : f32
    %12 = vector.broadcast %cst_5 : f32 to vector<16x1xf32>
    %13 = arith.divf %11, %12 : vector<16x1xf32>
    %cst_6 = arith.constant 9.99999974E-6 : f32
    %14 = vector.broadcast %cst_6 : f32 to vector<16x1xf32>
    %15 = arith.addf %13, %14 : vector<16x1xf32>
    %16 = math.rsqrt %15 : vector<16x1xf32>
    %17 = vector.broadcast %16 : vector<16x1xf32> to vector<16x32xf32>
    %18 = arith.mulf %8, %17 : vector<16x32xf32>
    %c0_7 = arith.constant 0 : index
    %c0_8 = arith.constant 0 : index
    %19 = vector.load %arg3[%c0_7, %c0_8] : memref<1x32xf32, #tpu.memory_space<vmem>>, vector<1x32xf32>
    %20 = vector.broadcast %19 : vector<1x32xf32> to vector<16x32xf32>
    %21 = arith.mulf %18, %20 : vector<16x32xf32>
    %c0_9 = arith.constant 0 : index
    %c0_10 = arith.constant 0 : index
    %22 = vector.load %arg4[%c0_9, %c0_10] : memref<1x32xf32, #tpu.memory_space<vmem>>, vector<1x32xf32>
    %23 = vector.broadcast %22 : vector<1x32xf32> to vector<16x32xf32>
    %24 = arith.addf %21, %23 : vector<16x32xf32>
    %c0_11 = arith.constant 0 : index
    %c0_12 = arith.constant 0 : index
    %25 = vector.load %arg5[%c0_11, %c0_12] : memref<16x32xf32, #tpu.memory_space<vmem>>, vector<16x32xf32>
    tpu.vector_store %arg5[%c0_11, %c0_12], %24 {strides = array<i32>} : memref<16x32xf32, #tpu.memory_space<vmem>>, vector<16x32xf32>,
    return
  }
  func.func @transform_0(%arg0: i32) -> (i32, i32) {
    %c0_i32 = arith.constant 0 : i32
    %c0_i32_0 = arith.constant 0 : i32
    return %arg0, %c0_i32 : i32, i32
  }
  func.func @transform_1(%arg0: i32) -> (i32, i32) {
    %c0_i32 = arith.constant 0 : i32
    %c0_i32_0 = arith.constant 0 : i32
    return %arg0, %c0_i32 : i32, i32
  }
  func.func @transform_2(%arg0: i32) -> (i32, i32) {
    %c0_i32 = arith.constant 0 : i32
    %c0_i32_0 = arith.constant 0 : i32
    %c0_i32_1 = arith.constant 0 : i32
    return %c0_i32, %c0_i32_0 : i32, i32
  }
  func.func @transform_3(%arg0: i32) -> (i32, i32) {
    %c0_i32 = arith.constant 0 : i32
    %c0_i32_0 = arith.constant 0 : i32
    %c0_i32_1 = arith.constant 0 : i32
    return %c0_i32, %c0_i32_0 : i32, i32
  }
  func.func @transform_4(%arg0: i32) -> (i32, i32) {
    %c0_i32 = arith.constant 0 : i32
    %c0_i32_0 = arith.constant 0 : i32
    return %arg0, %c0_i32 : i32, i32
  }
}

</mosaic_0001>

<llo_original>
// kernel: relpos_transformer.12
$region0: #{relpos_transformer.12}
  #allocation0 [shape = 'u32[]', space=smem, size = 0x4, offset = 0x4, fixed_abs, tag = 'smem constant byte address 0x4 - core index']
  #allocation1 [shape = 'u32[144,128]{1,0:T(1,128)}', space=vmem, size = 0x12000, scoped, tag = 'internal scratch']
  %s0 = inlined_call_operand.vmem [shape: f32[2,8,32], index: 0, kind: input, shape index: {}]
  %s1 = inlined_call_operand.vmem [shape: f32[32,96], index: 1, kind: input, shape index: {}]
  %s2 = inlined_call_operand.vmem [shape: f32[2,4,8,8], index: 2, kind: output, shape index: {0}]
  %s3 = inlined_call_operand.vmem [shape: f32[2,4,8,8], index: 3, kind: output, shape index: {1}]
  %s4 = inlined_call_operand.vmem [shape: f32[2,4,8,8], index: 4, kind: output, shape index: {2}]
  %5 = xla_tuple %s2, %s3, %s4
  %s6 = sld [smem:[#allocation0]]
  $region57: #{relpos_transformer.12} parent=0
    _
  %s8 = ssub.s32 1, %s6
  %s9 = scalar_select 0, %s8, %s6
  loop: start=0, step=1, limit=4
  $region2: #{relpos_transformer.12} parent=0 // loop_pre_header
    _
  $region3: #{relpos_transformer.12} parent=0 // loop_header
    %s11 = sphi 0, %s15
    %p12 = scmp.ge.s32.totalorder %s11, 4
    %s18 = sphi 0, %s30
    %s19 = sphi 0, %s26
    %s20 = sphi 0, %s18
    %s21 = sphi 0, %s19
    %s22 = sphi 0, %s20
    %s23 = sphi 0, %s21
    %s35 = sphi 0, %s37
    %s38 = sphi 0, %s35
    %s39 = sphi 0, %s38
    %s55 = sphi 0, %s39
    %s59 = sphi 0, %s59
    %s61 = sphi 0, %s59
    %s62 = sphi 0, %s61
    %s76 = sphi 0, %s62
    %s84 = sphi 0, %s86
    %s87 = sphi 0, %s84
    %s88 = sphi 0, %s87
    %s104 = sphi 0, %s88
    %s112 = sphi 0, %s114
    %s115 = sphi 0, %s112
    %s116 = sphi 0, %s115
    %s132 = sphi 0, %s116
    %s140 = sphi 0, %s142
    %s143 = sphi 0, %s140
    %s144 = sphi 0, %s143
    %s160 = sphi 0, %s144
  $region4: #{relpos_transformer.12} parent=0 // loop_header_branch
    %14 = sbr.rel (%p12) target = $region8
  $region5: #{relpos_transformer.12} parent=0 // loop_body
    %s16 = ssub.s32 %s11, 1
    %s17 = ssub.s32 %s11, 2
    %s24 = sadd.s32 1, %s19
    %p25 = scmp.ge.s32.totalorder %s24, 1
    %s26 = scalar_select %p25, 0, %s24
    %s27 = sadd.s32 1, %s18
    %s28 = scalar_select %p25, %s27, %s18
    %p29 = scmp.ge.s32.totalorder %s28, 2
    %s30 = scalar_select %p29, 0, %s28
    %s31 = ssub.s32 %s18, %s30
    %s32 = ssub.s32 %s19, %s26
    %s33 = sor.u32 %s31, %s32
    %p34 = scmp.eq.s32.totalorder %s33, 0
    %s36 = sadd.s32 %s35, 1
    %s37 = scalar_select %p34, %s35, %s36
    %p40 = pneg %p34
    %p41 = scmp.eq.s32.totalorder %s11, 1
    %p42 = por %p40, %p41
    %p43 = scmp.ne.s32.totalorder %s35, %s38
    %p44 = scmp.eq.s32.totalorder %s11, 0
    %p45 = por %p43, %p44
    %p46 = scmp.ne.s32.totalorder %s35, %s38
    %p47 = scmp.eq.s32.totalorder %s16, 1
    %p48 = por %p46, %p47
    %p49 = scmp.ne.s32.totalorder %s38, %s39
    %p50 = scmp.eq.s32.totalorder %s16, 0
    %p51 = por %p49, %p50
    %p52 = scmp.ne.s32.totalorder %s38, %s39
    %p53 = scmp.eq.s32.totalorder %s17, 1
    %p54 = por %p52, %p53
    %p56 = scmp.ne.s32.totalorder %s39, %s55
    %p57 = scmp.eq.s32.totalorder %s17, 0
    %p58 = por %p56, %p57
    %s60 = sadd.s32 %s59, 1
    %p63 = scmp.eq.s32.totalorder %s11, 1
    %p64 = scmp.ne.s32.totalorder %s59, %s61
    %p65 = scmp.eq.s32.totalorder %s11, 0
    %p66 = por %p64, %p65
    %p67 = scmp.ne.s32.totalorder %s59, %s61
    %p68 = scmp.eq.s32.totalorder %s16, 1
    %p69 = por %p67, %p68
    %p70 = scmp.ne.s32.totalorder %s61, %s62
    %p71 = scmp.eq.s32.totalorder %s16, 0
    %p72 = por %p70, %p71
    %p73 = scmp.ne.s32.totalorder %s61, %s62
    %p74 = scmp.eq.s32.totalorder %s17, 1
    %p75 = por %p73, %p74
    %p77 = scmp.ne.s32.totalorder %s62, %s76
    %p78 = scmp.eq.s32.totalorder %s17, 0
    %p79 = por %p77, %p78
    %s80 = ssub.s32 %s18, %s30
    %s81 = ssub.s32 %s19, %s26
    %s82 = sor.u32 %s80, %s81
    %p83 = scmp.eq.s32.totalorder %s82, 0
    %s85 = sadd.s32 %s84, 1
    %s86 = scalar_select %p83, %s84, %s85
    %p89 = pneg %p83
    %p90 = scmp.eq.s32.totalorder %s11, 1
    %p91 = por %p89, %p90
    %p92 = scmp.ne.s32.totalorder %s84, %s87
    %p93 = scmp.eq.s32.totalorder %s11, 0
    %p94 = por %p92, %p93
    %p95 = scmp.ne.s32.totalorder %s84, %s87
    %p96 = scmp.eq.s32.totalorder %s16, 1
    %p97 = por %p95, %p96
    %p98 = scmp.ne.s32.totalorder %s87, %s88
    %p99 = scmp.eq.s32.totalorder %s16, 0
    %p100 = por %p98, %p99
    %p101 = scmp.ne.s32.totalorder %s87, %s88
    %p102 = scmp.eq.s32.totalorder %s17, 1
    %p103 = por %p101, %p102
    %p105 = scmp.ne.s32.totalorder %s88, %s104
    %p106 = scmp.eq.s32.totalorder %s17, 0
    %p107 = por %p105, %p106
    %s108 = ssub.s32 %s18, %s30
    %s109 = ssub.s32 %s19, %s26
    %s110 = sor.u32 %s108, %s109
    %p111 = scmp.eq.s32.totalorder %s110, 0
    %s113 = sadd.s32 %s112, 1
    %s114 = scalar_select %p111, %s112, %s113
    %p117 = pneg %p111
    %p118 = scmp.eq.s32.totalorder %s11, 1
    %p119 = por %p117, %p118
    %p120 = scmp.ne.s32.totalorder %s112, %s115
    %p121 = scmp.eq.s32.totalorder %s11, 0
    %p122 = por %p120, %p121
    %p123 = scmp.ne.s32.totalorder %s112, %s115
    %p124 = scmp.eq.s32.totalorder %s16, 1
    %p125 = por %p123, %p124
    %p126 = scmp.ne.s32.totalorder %s115, %s116
    %p127 = scmp.eq.s32.totalorder %s16, 0
    %p128 = por %p126, %p127
    %p129 = scmp.ne.s32.totalorder %s115, %s116
    %p130 = scmp.eq.s32.totalorder %s17, 1
    %p131 = por %p129, %p130
    %p133 = scmp.ne.s32.totalorder %s116, %s132
    %p134 = scmp.eq.s32.totalorder %s17, 0
    %p135 = por %p133, %p134
    %s136 = ssub.s32 %s18, %s30
    %s137 = ssub.s32 %s19, %s26
    %s138 = sor.u32 %s136, %s137
    %p139 = scmp.eq.s32.totalorder %s138, 0
    %s141 = sadd.s32 %s140, 1
    %s142 = scalar_select %p139, %s140, %s141
    %p145 = pneg %p139
    %p146 = scmp.eq.s32.totalorder %s11, 1
    %p147 = por %p145, %p146
    %p148 = scmp.ne.s32.totalorder %s140, %s143
    %p149 = scmp.eq.s32.totalorder %s11, 0
    %p150 = por %p148, %p149
    %p151 = scmp.ne.s32.totalorder %s140, %s143
    %p152 = scmp.eq.s32.totalorder %s16, 1
    %p153 = por %p151, %p152
    %p154 = scmp.ne.s32.totalorder %s143, %s144
    %p155 = scmp.eq.s32.totalorder %s16, 0
    %p156 = por %p154, %p155
    %p157 = scmp.ne.s32.totalorder %s143, %s144
    %p158 = scmp.eq.s32.totalorder %s17, 1
    %p159 = por %p157, %p158
    %p161 = scmp.ne.s32.totalorder %s144, %s160
    %p162 = scmp.eq.s32.totalorder %s17, 0
    %p163 = por %p161, %p162
    %p164 = scmp.le.s32.totalorder 1, %s11
    %p165 = scmp.lt.s32.totalorder %s11, 3
    %p166 = pnand %p164, %p165
    %p167 = pneg %p166
    // Predicated region
    $region9: #{relpos_transformer.12} parent=5 // pred_check
      _
    $region10: #{relpos_transformer.12} parent=5 // pred_check_branch
      %169 = sbr.rel (%p166) target = $region12
    $region11: #{relpos_transformer.12} parent=5 // pred_region
      %s170 = ssub.s32 %s11, 1
      // Predicated region
      $region13: #{relpos_transformer.12} parent=11 // pred_check
        %p171 = pneg %p72
      $region14: #{relpos_transformer.12} parent=11 // pred_check_branch
        %173 = sbr.rel (%p171) target = $region16
      $region15: #{relpos_transformer.12} parent=11 // pred_region
        _
      $region16: #{relpos_transformer.12} parent=11 // pred_fallthru
        _
    $region12: #{relpos_transformer.12} parent=5 // pred_fallthru
      _
    %p174 = scmp.lt.s32.totalorder %s11, 2
    // Predicated region
    $region17: #{relpos_transformer.12} parent=5 // pred_check
      %p175 = pneg %p174
    $region18: #{relpos_transformer.12} parent=5 // pred_check_branch
      %177 = sbr.rel (%p175) target = $region20
    $region19: #{relpos_transformer.12} parent=5 // pred_region
      // Predicated region
      $region21: #{relpos_transformer.12} parent=19 // pred_check
        %p178 = pneg %p45
      $region22: #{relpos_transformer.12} parent=19 // pred_check_branch
        %180 = sbr.rel (%p178) target = $region24
      $region23: #{relpos_transformer.12} parent=19 // pred_region
        %p181 = scmp.lt.s32.totalorder %s18, 1
        %s182 = scalar_select %p181, %s18, 1
        %p183 = scmp.lt.s32.totalorder %s19, 0
        %s184 = scalar_select %p183, %s19, 0
        %s185 = sadd.s32 %s184, %s182
        %s186 = smul.addr %s185, 8
        %s187 = scalar_lea.vmem %s0, %s186
      $region24: #{relpos_transformer.12} parent=19 // pred_fallthru
        _
    $region20: #{relpos_transformer.12} parent=5 // pred_fallthru
      _
    %p188 = scmp.le.s32.totalorder 1, %s11
    %p189 = scmp.lt.s32.totalorder %s11, 3
    %p190 = pnand %p188, %p189
    %p191 = pneg %p190
    // Predicated region
    $region25: #{relpos_transformer.12} parent=5 // pred_check
      _
    $region26: #{relpos_transformer.12} parent=5 // pred_check_branch
      %193 = sbr.rel (%p190) target = $region28
    $region27: #{relpos_transformer.12} parent=5 // pred_region
      %s194 = ssub.s32 %s11, 1
      %p195 = scmp.lt.s32.totalorder %s20, 1
      %s196 = scalar_select %p195, %s20, 1
      %p197 = scmp.lt.s32.totalorder %s21, 0
      %s198 = scalar_select %p197, %s21, 0
      %s199 = sadd.s32 %s198, %s196
      %s200 = smul.addr %s199, 8
      %s201 = scalar_lea.vmem %s0, %s200
      %p202 = pneg %p51
      %p203 = pneg %p48
      %p204 = pneg %p72
      %p205 = pneg %p69
      %p206 = pneg %p100
      %p207 = pneg %p97
      %p208 = scmp.lt.s32.totalorder %s20, 1
      %s209 = scalar_select %p208, %s20, 1
      %p210 = scmp.lt.s32.totalorder %s21, 0
      %s211 = scalar_select %p210, %s21, 0
      %s212 = smul.addr %s209, 4
      %s213 = sadd.s32 %s211, %s212
      %s214 = smul.addr %s213, 8
      %s215 = scalar_lea.vmem %s2, %s214
      %p216 = pneg %p128
      %p217 = pneg %p125
      %p218 = scmp.lt.s32.totalorder %s20, 1
      %s219 = scalar_select %p218, %s20, 1
      %p220 = scmp.lt.s32.totalorder %s21, 0
      %s221 = scalar_select %p220, %s21, 0
      %s222 = smul.addr %s219, 4
      %s223 = sadd.s32 %s221, %s222
      %s224 = smul.addr %s223, 8
      %s225 = scalar_lea.vmem %s3, %s224
      %p226 = pneg %p156
      %p227 = pneg %p153
      %p228 = scmp.lt.s32.totalorder %s20, 1
      %s229 = scalar_select %p228, %s20, 1
      %p230 = scmp.lt.s32.totalorder %s21, 0
      %s231 = scalar_select %p230, %s21, 0
      %s232 = smul.addr %s229, 4
      %s233 = sadd.s32 %s231, %s232
      %s234 = smul.addr %s233, 8
      %s235 = scalar_lea.vmem %s4, %s234
      %p236 = scmp.lt.s32.totalorder %s20, 1
      %s237 = scalar_select %p236, %s20, 1
      %p238 = scmp.lt.s32.totalorder %s21, 0
      %s239 = scalar_select %p238, %s21, 0
      %s240 = sadd.s32 %s239, %s237
      %s241 = smul.addr %s240, 8
      %s242 = scalar_lea.vmem %s0, %s241
      %p243 = scmp.lt.s32.totalorder %s20, 1
      %s244 = scalar_select %p243, %s20, 1
      %p245 = scmp.lt.s32.totalorder %s21, 0
      %s246 = scalar_select %p245, %s21, 0
      %s247 = smul.addr %s244, 4
      %s248 = sadd.s32 %s246, %s247
      %s249 = smul.addr %s248, 8
      %s250 = scalar_lea.vmem %s2, %s249
      %p251 = scmp.lt.s32.totalorder %s20, 1
      %s252 = scalar_select %p251, %s20, 1
      %p253 = scmp.lt.s32.totalorder %s21, 0
      %s254 = scalar_select %p253, %s21, 0
      %s255 = smul.addr %s252, 4
      %s256 = sadd.s32 %s254, %s255
      %s257 = smul.addr %s256, 8
      %s258 = scalar_lea.vmem %s3, %s257
      %p259 = scmp.lt.s32.totalorder %s20, 1
      %s260 = scalar_select %p259, %s20, 1
      %p261 = scmp.lt.s32.totalorder %s21, 0
      %s262 = scalar_select %p261, %s21, 0
      %s263 = smul.addr %s260, 4
      %s264 = sadd.s32 %s262, %s263
      %s265 = smul.addr %s264, 8
      %s266 = scalar_lea.vmem %s4, %s265
      %v267 = vld [vmem:[%s242] sm:$0xff]
      %v268 = vld [vmem:[%s1] sm:$0xff]
      %v269 = vld [vmem:[%s1 + $0x8] sm:$0xff]
      %v270 = vld [vmem:[%s1 + $0x10] sm:$0xff]
      %v271 = vld [vmem:[%s1 + $0x18] sm:$0xff]
      %vm272 = vcmask 261120
      %v274 = vsel %vm272, %v267, 0
      %276 = vmatprep.subr.mxu0 0.0
      %277 = vmatpush1.msra.mxu0 %v268
      %278 = vmatprep.subr.mxu0 0.0
      %279 = vmatpush1.msra.mxu0 %v269
      %280 = vmatprep.subr.mxu0 0.0
      %281 = vmatpush1.msra.mxu0 %v270
      %282 = vmatprep.subr.mxu0 0.0
      %283 = vmatpush1.msra.mxu0 %v271
      %284 = vmatprep.subr.mxu0 0.0
      %285 = vmatpush1.msra.mxu0 0.0
      %286 = vmatprep.subr.mxu0 0.0
      %287 = vmatpush1.msra.mxu0 0.0
      %288 = vmatprep.subr.mxu0 0.0
      %289 = vmatpush1.msra.mxu0 0.0
      %290 = vmatprep.subr.mxu0 0.0
      %291 = vmatpush1.msra.mxu0 0.0
      %292 = vmatprep.subr.mxu0 0.0
      %293 = vmatpush1.msra.mxu0 0.0
      %294 = vmatprep.subr.mxu0 0.0
      %295 = vmatpush1.msra.mxu0 0.0
      %296 = vmatprep.subr.mxu0 0.0
      %297 = vmatpush1.msra.mxu0 0.0
      %298 = vmatprep.subr.mxu0 0.0
      %299 = vmatpush1.msra.mxu0 0.0
      %300 = vmatprep.subr.mxu0 0.0
      %301 = vmatpush1.msra.mxu0 0.0
      %302 = vmatprep.subr.mxu0 0.0
      %303 = vmatpush1.msra.mxu0 0.0
      %304 = vmatprep.subr.mxu0 0.0
      %305 = vmatpush1.msra.mxu0 0.0
      %306 = vmatprep.subr.mxu0 0.0
      %307 = vmatpush1.msra.mxu0 0.0
      %308 = vmatprep.subr.mxu0 0.0
      %309 = vmatpush1.msra.mxu0 0.0
      %310 = vmatprep.subr.mxu0 0.0
      %311 = vmatpush1.msra.mxu0 0.0
      %312 = vmatprep.subr.mxu0 0.0
      %313 = vmatpush1.msra.mxu0 0.0
      %314 = vmatprep.subr.mxu0 0.0
      %315 = vmatpush1.msra.mxu0 0.0
      %316 = vmatprep.subr.mxu0 0.0
      %317 = vmatpush1.msra.mxu0 0.0
      %318 = vmatprep.subr.mxu0 0.0
      %319 = vmatpush1.msra.mxu0 0.0
      %320 = vmatprep.subr.mxu0 0.0
      %321 = vmatpush1.msra.mxu0 0.0
      %322 = vmatprep.subr.mxu0 0.0
      %323 = vmatpush1.msra.mxu0 0.0
      %324 = vmatprep.subr.mxu0 0.0
      %325 = vmatpush1.msra.mxu0 0.0
      %326 = vmatprep.subr.mxu0 0.0
      %327 = vmatpush1.msra.mxu0 0.0
      %328 = vmatprep.subr.mxu0 0.0
      %329 = vmatpush1.msra.mxu0 0.0
      %330 = vmatprep.subr.mxu0 0.0
      %331 = vmatpush1.msra.mxu0 0.0
      %332 = vmatprep.subr.mxu0 0.0
      %333 = vmatpush1.msra.mxu0 0.0
      %334 = vmatprep.subr.mxu0 0.0
      %335 = vmatpush1.msra.mxu0 0.0
      %336 = vmatprep.subr.mxu0 0.0
      %337 = vmatpush1.msra.mxu0 0.0
      %338 = vmatprep.subr.mxu0 0.0
      %339 = vmatpush1.msra.mxu0 0.0
      %340 = vmatprep.mubr.f32.mxu0 0.0
      %341 = vmatmul.mubr.f32.gmra.mrb[0].mxu0 %v274
      %v342 = vpop.f32.mrb[0].mxu0
      %v343 = vadd.f32 0.0, %v342
      %v344 = vpop.f32.mrb[0].mxu0
      %345 = vdwg.mxu0
      %vm346 = vcmask 64512
      %347 = vst.msk [vmem:[%s250] sm:$0xff] %vm346, %v343
      %349 = vrot.lane.b32.xlu0 %v343, 96
      %v350 = vpop.permute.xlu0 %349
      %352 = vst.msk [vmem:[%s258] sm:$0xff] %vm346, %v350
      %353 = vrot.lane.b32.xlu0 %v343, 64
      %v354 = vpop.permute.xlu0 %353
      %356 = vst.msk [vmem:[%s266] sm:$0xff] %vm346, %v354
      %357 = vrot.lane.b32.xlu0 %v343, 120
      %v358 = vpop.permute.xlu0 %357
      %s360 = scalar_lea.vmem %s250, 8
      %361 = vst.msk [vmem:[%s360] sm:$0xff] %vm346, %v358
      %362 = vrot.lane.b32.xlu0 %v343, 88
      %v363 = vpop.permute.xlu0 %362
      %s365 = scalar_lea.vmem %s258, 8
      %366 = vst.msk [vmem:[%s365] sm:$0xff] %vm346, %v363
      %367 = vrot.lane.b32.xlu0 %v343, 56
      %v368 = vpop.permute.xlu0 %367
      %s370 = scalar_lea.vmem %s266, 8
      %371 = vst.msk [vmem:[%s370] sm:$0xff] %vm346, %v368
      %372 = vrot.lane.b32.xlu0 %v343, 112
      %v373 = vpop.permute.xlu0 %372
      %s375 = scalar_lea.vmem %s250, 16
      %376 = vst.msk [vmem:[%s375] sm:$0xff] %vm346, %v373
      %377 = vrot.lane.b32.xlu0 %v343, 80
      %v378 = vpop.permute.xlu0 %377
      %s380 = scalar_lea.vmem %s258, 16
      %381 = vst.msk [vmem:[%s380] sm:$0xff] %vm346, %v378
      %382 = vrot.lane.b32.xlu0 %v343, 48
      %v383 = vpop.permute.xlu0 %382
      %s385 = scalar_lea.vmem %s266, 16
      %386 = vst.msk [vmem:[%s385] sm:$0xff] %vm346, %v383
      %387 = vrot.lane.b32.xlu0 %v343, 104
      %v388 = vpop.permute.xlu0 %387
      %s390 = scalar_lea.vmem %s250, 24
      %391 = vst.msk [vmem:[%s390] sm:$0xff] %vm346, %v388
      %392 = vrot.lane.b32.xlu0 %v343, 72
      %v393 = vpop.permute.xlu0 %392
      %s395 = scalar_lea.vmem %s258, 24
      %396 = vst.msk [vmem:[%s395] sm:$0xff] %vm346, %v393
      %397 = vrot.lane.b32.xlu0 %v343, 40
      %v398 = vpop.permute.xlu0 %397
      %s400 = scalar_lea.vmem %s266, 24
      %401 = vst.msk [vmem:[%s400] sm:$0xff] %vm346, %v398
      %p402 = scmp.lt.s32.totalorder %s20, 1
      %s403 = scalar_select %p402, %s20, 1
      %p404 = scmp.lt.s32.totalorder %s21, 0
      %s405 = scalar_select %p404, %s21, 0
      %s406 = smul.addr %s403, 4
      %s407 = sadd.s32 %s405, %s406
      %s408 = smul.addr %s407, 8
      %s409 = scalar_lea.vmem %s2, %s408
      %p410 = scmp.lt.s32.totalorder %s20, 1
      %s411 = scalar_select %p410, %s20, 1
      %p412 = scmp.lt.s32.totalorder %s21, 0
      %s413 = scalar_select %p412, %s21, 0
      %s414 = smul.addr %s411, 4
      %s415 = sadd.s32 %s413, %s414
      %s416 = smul.addr %s415, 8
      %s417 = scalar_lea.vmem %s3, %s416
      %p418 = scmp.lt.s32.totalorder %s20, 1
      %s419 = scalar_select %p418, %s20, 1
      %p420 = scmp.lt.s32.totalorder %s21, 0
      %s421 = scalar_select %p420, %s21, 0
      %s422 = smul.addr %s419, 4
      %s423 = sadd.s32 %s421, %s422
      %s424 = smul.addr %s423, 8
      %s425 = scalar_lea.vmem %s4, %s424
      // Predicated region
      $region29: #{relpos_transformer.12} parent=27 // pred_check
        %p426 = pneg %p97
      $region30: #{relpos_transformer.12} parent=27 // pred_check_branch
        %428 = sbr.rel (%p426) target = $region32
      $region31: #{relpos_transformer.12} parent=27 // pred_region
        _
      $region32: #{relpos_transformer.12} parent=27 // pred_fallthru
        _
      // Predicated region
      $region33: #{relpos_transformer.12} parent=27 // pred_check
        %p429 = pneg %p125
      $region34: #{relpos_transformer.12} parent=27 // pred_check_branch
        %431 = sbr.rel (%p429) target = $region36
      $region35: #{relpos_transformer.12} parent=27 // pred_region
        _
      $region36: #{relpos_transformer.12} parent=27 // pred_fallthru
        _
      // Predicated region
      $region37: #{relpos_transformer.12} parent=27 // pred_check
        %p432 = pneg %p153
      $region38: #{relpos_transformer.12} parent=27 // pred_check_branch
        %434 = sbr.rel (%p432) target = $region40
      $region39: #{relpos_transformer.12} parent=27 // pred_region
        _
      $region40: #{relpos_transformer.12} parent=27 // pred_fallthru
        _
    $region28: #{relpos_transformer.12} parent=5 // pred_fallthru
      _
    %p435 = scmp.le.s32.totalorder 2, %s11
    // Predicated region
    $region41: #{relpos_transformer.12} parent=5 // pred_check
      %p436 = pneg %p435
    $region42: #{relpos_transformer.12} parent=5 // pred_check_branch
      %438 = sbr.rel (%p436) target = $region44
    $region43: #{relpos_transformer.12} parent=5 // pred_region
      %s439 = ssub.s32 %s11, 2
      // Predicated region
      $region45: #{relpos_transformer.12} parent=43 // pred_check
        %p440 = pneg %p103
      $region46: #{relpos_transformer.12} parent=43 // pred_check_branch
        %442 = sbr.rel (%p440) target = $region48
      $region47: #{relpos_transformer.12} parent=43 // pred_region
        %p443 = scmp.lt.s32.totalorder %s22, 1
        %s444 = scalar_select %p443, %s22, 1
        %p445 = scmp.lt.s32.totalorder %s23, 0
        %s446 = scalar_select %p445, %s23, 0
        %s447 = smul.addr %s444, 4
        %s448 = sadd.s32 %s446, %s447
        %s449 = smul.addr %s448, 8
        %s450 = scalar_lea.vmem %s2, %s449
      $region48: #{relpos_transformer.12} parent=43 // pred_fallthru
        _
      // Predicated region
      $region49: #{relpos_transformer.12} parent=43 // pred_check
        %p451 = pneg %p131
      $region50: #{relpos_transformer.12} parent=43 // pred_check_branch
        %453 = sbr.rel (%p451) target = $region52
      $region51: #{relpos_transformer.12} parent=43 // pred_region
        %p454 = scmp.lt.s32.totalorder %s22, 1
        %s455 = scalar_select %p454, %s22, 1
        %p456 = scmp.lt.s32.totalorder %s23, 0
        %s457 = scalar_select %p456, %s23, 0
        %s458 = smul.addr %s455, 4
        %s459 = sadd.s32 %s457, %s458
        %s460 = smul.addr %s459, 8
        %s461 = scalar_lea.vmem %s3, %s460
      $region52: #{relpos_transformer.12} parent=43 // pred_fallthru
        _
      // Predicated region
      $region53: #{relpos_transformer.12} parent=43 // pred_check
        %p462 = pneg %p159
      $region54: #{relpos_transformer.12} parent=43 // pred_check_branch
        %464 = sbr.rel (%p462) target = $region56
      $region55: #{relpos_transformer.12} parent=43 // pred_region
        %p465 = scmp.lt.s32.totalorder %s22, 1
        %s466 = scalar_select %p465, %s22, 1
        %p467 = scmp.lt.s32.totalorder %s23, 0
        %s468 = scalar_select %p467, %s23, 0
        %s469 = smul.addr %s466, 4
        %s470 = sadd.s32 %s468, %s469
        %s471 = smul.addr %s470, 8
        %s472 = scalar_lea.vmem %s4, %s471
      $region56: #{relpos_transformer.12} parent=43 // pred_fallthru
        _
    $region44: #{relpos_transformer.12} parent=5 // pred_fallthru
      _
  $region6: #{relpos_transformer.12} parent=0 // loop_footer
    %s15 = sadd.s32 1, %s11
  $region7: #{relpos_transformer.12} parent=0 // loop_footer_branch
    %10 = sbr.rel target = $region3
  $region8: #{relpos_transformer.12} parent=0 // loop_exit
    _

// kernel: relpos_transformer.15
$region0: #{relpos_transformer.15}
  #allocation0 [shape = 'u32[]', space=smem, size = 0x4, offset = 0x4, fixed_abs, tag = 'smem constant byte address 0x4 - core index']
  #allocation1 [shape = 'u32[144,128]{1,0:T(1,128)}', space=vmem, size = 0x12000, scoped, tag = 'internal scratch']
  %s0 = inlined_call_operand.vmem [shape: f32[16,32], index: 0, kind: input, shape index: {}]
  %s1 = inlined_call_operand.vmem [shape: f32[16,32], index: 1, kind: input, shape index: {}]
  %s2 = inlined_call_operand.vmem [shape: f32[1,32], index: 2, kind: input, shape index: {}]
  %s3 = inlined_call_operand.vmem [shape: f32[1,32], index: 3, kind: input, shape index: {}]
  %s4 = inlined_call_operand.vmem [shape: f32[16,32], index: 4, kind: output, shape index: {}]
  %s5 = sld [smem:[#allocation0]]
  $region26: #{relpos_transformer.15} parent=0
    _
  %s7 = ssub.s32 1, %s5
  %s8 = scalar_select 0, %s7, %s5
  // Predicated region
  $region2: #{relpos_transformer.15} parent=0 // pred_check
    _
  $region3: #{relpos_transformer.15} parent=0 // pred_check_branch
    %10 = sbr.rel (0) target = $region5
  $region4: #{relpos_transformer.15} parent=0 // pred_region
    _
  $region5: #{relpos_transformer.15} parent=0 // pred_fallthru
    _
  // Predicated region
  $region6: #{relpos_transformer.15} parent=0 // pred_check
    _
  $region7: #{relpos_transformer.15} parent=0 // pred_check_branch
    %12 = sbr.rel (0) target = $region9
  $region8: #{relpos_transformer.15} parent=0 // pred_region
    _
  $region9: #{relpos_transformer.15} parent=0 // pred_fallthru
    _
  // Predicated region
  $region10: #{relpos_transformer.15} parent=0 // pred_check
    _
  $region11: #{relpos_transformer.15} parent=0 // pred_check_branch
    %14 = sbr.rel (0) target = $region13
  $region12: #{relpos_transformer.15} parent=0 // pred_region
    _
  $region13: #{relpos_transformer.15} parent=0 // pred_fallthru
    _
  // Predicated region
  $region14: #{relpos_transformer.15} parent=0 // pred_check
    _
  $region15: #{relpos_transformer.15} parent=0 // pred_check_branch
    %16 = sbr.rel (0) target = $region17
  $region16: #{relpos_transformer.15} parent=0 // pred_region
    _
  $region17: #{relpos_transformer.15} parent=0 // pred_fallthru
    _
  %v17 = vld [vmem:[%s0] sm:$0xff]
  %v18 = vld [vmem:[%s0 + $0x8] sm:$0xff]
  %v19 = vld [vmem:[%s1] sm:$0xff]
  %v20 = vld [vmem:[%s1 + $0x8] sm:$0xff]
  %v21 = vadd.f32 %v17, %v19
  %v22 = vadd.f32 %v18, %v20
  %vm23 = vcmask 261120
  %v24 = vsel %vm23, %v21, 0.0
  %25 = vadd.xlane.f32.xlu0 %v24
  %v26 = vpop.xlane.xlu0 %25
  %v27 = vsel %vm23, %v22, 0.0
  %28 = vadd.xlane.f32.xlu0 %v27
  %v29 = vpop.xlane.xlu0 %28
  %v30 = vrcp.pop 32.0
  %v31 = vmul.f32 %v26, %v30
  %v32 = vmul.f32 %v29, %v30
  %v33 = vsub.f32 %v21, %v31
  %v34 = vsub.f32 %v22, %v32
  %v35 = vmul.f32 %v33, %v33
  %v36 = vmul.f32 %v34, %v34
  %v37 = vsel %vm23, %v35, 0.0
  %38 = vadd.xlane.f32.xlu0 %v37
  %v39 = vpop.xlane.xlu0 %38
  %v40 = vsel %vm23, %v36, 0.0
  %41 = vadd.xlane.f32.xlu0 %v40
  %v42 = vpop.xlane.xlu0 %41
  %v43 = vmul.f32 %v39, %v30
  %v44 = vmul.f32 %v42, %v30
  %v45 = vadd.f32 %v43, 1e-05
  %v46 = vadd.f32 %v44, 1e-05
  %v47 = vrsqrt.pop %v45
  %v48 = vrsqrt.pop %v46
  %v49 = vmul.f32 %v33, %v47
  %v50 = vmul.f32 %v34, %v48
  %v51 = vld [vmem:[%s2] sm:$0x1]
  %v53 = vlaneseq
  %v54 = vshrl.u32 %v53, 7
  %v55 = vsub.s32 0, %v54
  %v56 = vrot.slane %v51, %v55
  %v58 = vmul.f32 %v49, %v56
  %v59 = vmul.f32 %v50, %v56
  %v60 = vld [vmem:[%s3] sm:$0x1]
  %v62 = vlaneseq
  %v63 = vshrl.u32 %v62, 7
  %v64 = vsub.s32 0, %v63
  %v65 = vrot.slane %v60, %v64
  %v67 = vadd.f32 %v58, %v65
  %v68 = vadd.f32 %v59, %v65
  %69 = vst.msk [vmem:[%s4] sm:$0xff] %vm23, %v67
  %70 = vst.msk [vmem:[%s4 + $0x8] sm:$0xff] %vm23, %v68
  // Predicated region
  $region18: #{relpos_transformer.15} parent=0 // pred_check
    _
  $region19: #{relpos_transformer.15} parent=0 // pred_check_branch
    %72 = sbr.rel (0) target = $region21
  $region20: #{relpos_transformer.15} parent=0 // pred_region
    _
  $region21: #{relpos_transformer.15} parent=0 // pred_fallthru
    _
  // Predicated region
  $region22: #{relpos_transformer.15} parent=0 // pred_check
    _
  $region23: #{relpos_transformer.15} parent=0 // pred_check_branch
    %74 = sbr.rel (0) target = $region25
  $region24: #{relpos_transformer.15} parent=0 // pred_region
    _
  $region25: #{relpos_transformer.15} parent=0 // pred_fallthru
    _

// kernel: relpos_transformer.14
$region0: #{relpos_transformer.14}
  #allocation0 [shape = 'u32[]', space=smem, size = 0x4, offset = 0x4, fixed_abs, tag = 'smem constant byte address 0x4 - core index']
  #allocation1 [shape = 'u32[144,128]{1,0:T(1,128)}', space=vmem, size = 0x12000, scoped, tag = 'internal scratch']
  #allocation2 [shape = 'f32[8,32]{1,0:T(8,128)}', space=vmem, size = 0x1000, scoped, tag = 'scratch operand']
  %s0 = inlined_call_operand.vmem [shape: f32[2,4,8,8], index: 0, kind: input, shape index: {}]
  %s1 = inlined_call_operand.vmem [shape: f32[32,32], index: 1, kind: input, shape index: {}]
  %s2 = inlined_call_operand.vmem [shape: f32[1,32], index: 2, kind: input, shape index: {}]
  %s3 = inlined_call_operand.vmem [shape: f32[2,8,32], index: 3, kind: output, shape index: {}]
  %s4 = sld [smem:[#allocation0]]
  $region53: #{relpos_transformer.14} parent=0
    _
  %s6 = ssub.s32 1, %s4
  %s7 = scalar_select 0, %s6, %s4
  loop: start=0, step=1, limit=10
  $region2: #{relpos_transformer.14} parent=0 // loop_pre_header
    _
  $region3: #{relpos_transformer.14} parent=0 // loop_header
    %s9 = sphi 0, %s13
    %p10 = scmp.ge.s32.totalorder %s9, 10
    %s16 = sphi 0, %s35
    %s17 = sphi 0, %s31
    %s18 = sphi 0, %s27
    %s19 = sphi 0, %s16
    %s20 = sphi 0, %s17
    %s21 = sphi 0, %s18
    %s22 = sphi 0, %s19
    %s23 = sphi 0, %s20
    %s24 = sphi 0, %s21
    %s42 = sphi 0, %s44
    %s45 = sphi 0, %s42
    %s46 = sphi 0, %s45
    %s62 = sphi 0, %s46
    %s68 = sphi 0, %s70
    %s71 = sphi 0, %s68
    %s72 = sphi 0, %s71
    %s88 = sphi 0, %s72
    %s92 = sphi 0, %s92
    %s94 = sphi 0, %s92
    %s95 = sphi 0, %s94
    %s109 = sphi 0, %s95
    %s117 = sphi 0, %s119
    %s120 = sphi 0, %s117
    %s121 = sphi 0, %s120
    %s137 = sphi 0, %s121
  $region4: #{relpos_transformer.14} parent=0 // loop_header_branch
    %12 = sbr.rel (%p10) target = $region8
  $region5: #{relpos_transformer.14} parent=0 // loop_body
    %s14 = ssub.s32 %s9, 1
    %s15 = ssub.s32 %s9, 2
    %s25 = sadd.s32 1, %s18
    %p26 = scmp.ge.s32.totalorder %s25, 4
    %s27 = scalar_select %p26, 0, %s25
    %s28 = sadd.s32 1, %s17
    %s29 = scalar_select %p26, %s28, %s17
    %p30 = scmp.ge.s32.totalorder %s29, 1
    %s31 = scalar_select %p30, 0, %s29
    %s32 = sadd.s32 1, %s16
    %s33 = scalar_select %p30, %s32, %s16
    %p34 = scmp.ge.s32.totalorder %s33, 2
    %s35 = scalar_select %p34, 0, %s33
    %s36 = ssub.s32 %s16, %s35
    %s37 = ssub.s32 %s18, %s27
    %s38 = sor.u32 %s36, %s37
    %s39 = ssub.s32 %s17, %s31
    %s40 = sor.u32 %s38, %s39
    %p41 = scmp.eq.s32.totalorder %s40, 0
    %s43 = sadd.s32 %s42, 1
    %s44 = scalar_select %p41, %s42, %s43
    %p47 = pneg %p41
    %p48 = scmp.eq.s32.totalorder %s9, 7
    %p49 = por %p47, %p48
    %p50 = scmp.ne.s32.totalorder %s42, %s45
    %p51 = scmp.eq.s32.totalorder %s9, 0
    %p52 = por %p50, %p51
    %p53 = scmp.ne.s32.totalorder %s42, %s45
    %p54 = scmp.eq.s32.totalorder %s14, 7
    %p55 = por %p53, %p54
    %p56 = scmp.ne.s32.totalorder %s45, %s46
    %p57 = scmp.eq.s32.totalorder %s14, 0
    %p58 = por %p56, %p57
    %p59 = scmp.ne.s32.totalorder %s45, %s46
    %p60 = scmp.eq.s32.totalorder %s15, 7
    %p61 = por %p59, %p60
    %p63 = scmp.ne.s32.totalorder %s46, %s62
    %p64 = scmp.eq.s32.totalorder %s15, 0
    %p65 = por %p63, %p64
    %s66 = ssub.s32 %s18, %s27
    %p67 = scmp.eq.s32.totalorder %s66, 0
    %s69 = sadd.s32 %s68, 1
    %s70 = scalar_select %p67, %s68, %s69
    %p73 = pneg %p67
    %p74 = scmp.eq.s32.totalorder %s9, 7
    %p75 = por %p73, %p74
    %p76 = scmp.ne.s32.totalorder %s68, %s71
    %p77 = scmp.eq.s32.totalorder %s9, 0
    %p78 = por %p76, %p77
    %p79 = scmp.ne.s32.totalorder %s68, %s71
    %p80 = scmp.eq.s32.totalorder %s14, 7
    %p81 = por %p79, %p80
    %p82 = scmp.ne.s32.totalorder %s71, %s72
    %p83 = scmp.eq.s32.totalorder %s14, 0
    %p84 = por %p82, %p83
    %p85 = scmp.ne.s32.totalorder %s71, %s72
    %p86 = scmp.eq.s32.totalorder %s15, 7
    %p87 = por %p85, %p86
    %p89 = scmp.ne.s32.totalorder %s72, %s88
    %p90 = scmp.eq.s32.totalorder %s15, 0
    %p91 = por %p89, %p90
    %s93 = sadd.s32 %s92, 1
    %p96 = scmp.eq.s32.totalorder %s9, 7
    %p97 = scmp.ne.s32.totalorder %s92, %s94
    %p98 = scmp.eq.s32.totalorder %s9, 0
    %p99 = por %p97, %p98
    %p100 = scmp.ne.s32.totalorder %s92, %s94
    %p101 = scmp.eq.s32.totalorder %s14, 7
    %p102 = por %p100, %p101
    %p103 = scmp.ne.s32.totalorder %s94, %s95
    %p104 = scmp.eq.s32.totalorder %s14, 0
    %p105 = por %p103, %p104
    %p106 = scmp.ne.s32.totalorder %s94, %s95
    %p107 = scmp.eq.s32.totalorder %s15, 7
    %p108 = por %p106, %p107
    %p110 = scmp.ne.s32.totalorder %s95, %s109
    %p111 = scmp.eq.s32.totalorder %s15, 0
    %p112 = por %p110, %p111
    %s113 = ssub.s32 %s16, %s35
    %s114 = ssub.s32 %s17, %s31
    %s115 = sor.u32 %s113, %s114
    %p116 = scmp.eq.s32.totalorder %s115, 0
    %s118 = sadd.s32 %s117, 1
    %s119 = scalar_select %p116, %s117, %s118
    %p122 = pneg %p116
    %p123 = scmp.eq.s32.totalorder %s9, 7
    %p124 = por %p122, %p123
    %p125 = scmp.ne.s32.totalorder %s117, %s120
    %p126 = scmp.eq.s32.totalorder %s9, 0
    %p127 = por %p125, %p126
    %p128 = scmp.ne.s32.totalorder %s117, %s120
    %p129 = scmp.eq.s32.totalorder %s14, 7
    %p130 = por %p128, %p129
    %p131 = scmp.ne.s32.totalorder %s120, %s121
    %p132 = scmp.eq.s32.totalorder %s14, 0
    %p133 = por %p131, %p132
    %p134 = scmp.ne.s32.totalorder %s120, %s121
    %p135 = scmp.eq.s32.totalorder %s15, 7
    %p136 = por %p134, %p135
    %p138 = scmp.ne.s32.totalorder %s121, %s137
    %p139 = scmp.eq.s32.totalorder %s15, 0
    %p140 = por %p138, %p139
    %p141 = scmp.le.s32.totalorder 1, %s9
    %p142 = scmp.lt.s32.totalorder %s9, 9
    %p143 = pnand %p141, %p142
    %p144 = pneg %p143
    // Predicated region
    $region9: #{relpos_transformer.14} parent=5 // pred_check
      _
    $region10: #{relpos_transformer.14} parent=5 // pred_check_branch
      %146 = sbr.rel (%p143) target = $region12
    $region11: #{relpos_transformer.14} parent=5 // pred_region
      %s147 = ssub.s32 %s9, 1
      // Predicated region
      $region13: #{relpos_transformer.14} parent=11 // pred_check
        %p148 = pneg %p105
      $region14: #{relpos_transformer.14} parent=11 // pred_check_branch
        %150 = sbr.rel (%p148) target = $region16
      $region15: #{relpos_transformer.14} parent=11 // pred_region
        _
      $region16: #{relpos_transformer.14} parent=11 // pred_fallthru
        _
    $region12: #{relpos_transformer.14} parent=5 // pred_fallthru
      _
    %p151 = scmp.lt.s32.totalorder %s9, 8
    // Predicated region
    $region17: #{relpos_transformer.14} parent=5 // pred_check
      %p152 = pneg %p151
    $region18: #{relpos_transformer.14} parent=5 // pred_check_branch
      %154 = sbr.rel (%p152) target = $region20
    $region19: #{relpos_transformer.14} parent=5 // pred_region
      // Predicated region
      $region21: #{relpos_transformer.14} parent=19 // pred_check
        %p155 = pneg %p52
      $region22: #{relpos_transformer.14} parent=19 // pred_check_branch
        %157 = sbr.rel (%p155) target = $region24
      $region23: #{relpos_transformer.14} parent=19 // pred_region
        %p158 = scmp.lt.s32.totalorder %s16, 1
        %s159 = scalar_select %p158, %s16, 1
        %p160 = scmp.lt.s32.totalorder %s18, 3
        %s161 = scalar_select %p160, %s18, 3
        %p162 = scmp.lt.s32.totalorder %s17, 0
        %s163 = scalar_select %p162, %s17, 0
        %s164 = sadd.s32 %s163, %s161
        %s165 = smul.addr %s159, 4
        %s166 = sadd.s32 %s164, %s165
        %s167 = smul.addr %s166, 8
        %s168 = scalar_lea.vmem %s0, %s167
      $region24: #{relpos_transformer.14} parent=19 // pred_fallthru
        _
      // Predicated region
      $region25: #{relpos_transformer.14} parent=19 // pred_check
        %p169 = pneg %p78
      $region26: #{relpos_transformer.14} parent=19 // pred_check_branch
        %171 = sbr.rel (%p169) target = $region28
      $region27: #{relpos_transformer.14} parent=19 // pred_region
        %p172 = scmp.lt.s32.totalorder %s18, 3
        %s173 = scalar_select %p172, %s18, 3
        %s174 = smul.addr %s173, 8
        %s175 = scalar_lea.vmem %s1, %s174
      $region28: #{relpos_transformer.14} parent=19 // pred_fallthru
        _
    $region20: #{relpos_transformer.14} parent=5 // pred_fallthru
      _
    %p176 = scmp.le.s32.totalorder 1, %s9
    %p177 = scmp.lt.s32.totalorder %s9, 9
    %p178 = pnand %p176, %p177
    %p179 = pneg %p178
    // Predicated region
    $region29: #{relpos_transformer.14} parent=5 // pred_check
      _
    $region30: #{relpos_transformer.14} parent=5 // pred_check_branch
      %181 = sbr.rel (%p178) target = $region32
    $region31: #{relpos_transformer.14} parent=5 // pred_region
      %s182 = ssub.s32 %s9, 1
      %p183 = scmp.lt.s32.totalorder %s19, 1
      %s184 = scalar_select %p183, %s19, 1
      %p185 = scmp.lt.s32.totalorder %s21, 3
      %s186 = scalar_select %p185, %s21, 3
      %p187 = scmp.lt.s32.totalorder %s20, 0
      %s188 = scalar_select %p187, %s20, 0
      %s189 = sadd.s32 %s188, %s186
      %s190 = smul.addr %s184, 4
      %s191 = sadd.s32 %s189, %s190
      %s192 = smul.addr %s191, 8
      %s193 = scalar_lea.vmem %s0, %s192
      %p194 = pneg %p58
      %p195 = pneg %p55
      %p196 = scmp.lt.s32.totalorder %s21, 3
      %s197 = scalar_select %p196, %s21, 3
      %s198 = smul.addr %s197, 8
      %s199 = scalar_lea.vmem %s1, %s198
      %p200 = pneg %p84
      %p201 = pneg %p81
      %p202 = pneg %p105
      %p203 = pneg %p102
      %p204 = pneg %p133
      %p205 = pneg %p130
      %p206 = scmp.lt.s32.totalorder %s19, 1
      %s207 = scalar_select %p206, %s19, 1
      %p208 = scmp.lt.s32.totalorder %s20, 0
      %s209 = scalar_select %p208, %s20, 0
      %s210 = sadd.s32 %s209, %s207
      %s211 = smul.addr %s210, 8
      %s212 = scalar_lea.vmem %s3, %s211
      %p213 = scmp.lt.s32.totalorder %s19, 1
      %s214 = scalar_select %p213, %s19, 1
      %p215 = scmp.lt.s32.totalorder %s21, 3
      %s216 = scalar_select %p215, %s21, 3
      %p217 = scmp.lt.s32.totalorder %s20, 0
      %s218 = scalar_select %p217, %s20, 0
      %s219 = sadd.s32 %s218, %s216
      %s220 = smul.addr %s214, 4
      %s221 = sadd.s32 %s219, %s220
      %s222 = smul.addr %s221, 8
      %s223 = scalar_lea.vmem %s0, %s222
      %p224 = scmp.lt.s32.totalorder %s21, 3
      %s225 = scalar_select %p224, %s21, 3
      %s226 = smul.addr %s225, 8
      %s227 = scalar_lea.vmem %s1, %s226
      %p228 = scmp.lt.s32.totalorder %s19, 1
      %s229 = scalar_select %p228, %s19, 1
      %p230 = scmp.lt.s32.totalorder %s20, 0
      %s231 = scalar_select %p230, %s20, 0
      %s232 = sadd.s32 %s231, %s229
      %s233 = smul.addr %s232, 8
      %s234 = scalar_lea.vmem %s3, %s233
      %p235 = scmp.eq.s32.totalorder %s21, 0
      // Predicated region
      $region33: #{relpos_transformer.14} parent=31 // pred_check
        %p236 = pneg %p235
      $region34: #{relpos_transformer.14} parent=31 // pred_check_branch
        %238 = sbr.rel (%p236) target = $region36
      $region35: #{relpos_transformer.14} parent=31 // pred_region
        %vm239 = vcmask 261120
        %240 = vst.msk [vmem:[#allocation2] sm:$0xff] %vm239, 0.0
      $region36: #{relpos_transformer.14} parent=31 // pred_fallthru
        _
      %v241 = vld [vmem:[#allocation2] sm:$0xff]
      %v242 = vld [vmem:[%s223] sm:$0xff]
      %v243 = vld [vmem:[%s227] sm:$0xff]
      %vm244 = vcmask 64512
      %v246 = vsel %vm244, %v242, 0
      %248 = vmatprep.subr.mxu0 0.0
      %249 = vmatpush1.msra.mxu0 %v243
      %250 = vmatprep.subr.mxu0 0.0
      %251 = vmatpush1.msra.mxu0 0.0
      %252 = vmatprep.subr.mxu0 0.0
      %253 = vmatpush1.msra.mxu0 0.0
      %254 = vmatprep.subr.mxu0 0.0
      %255 = vmatpush1.msra.mxu0 0.0
      %256 = vmatprep.subr.mxu0 0.0
      %257 = vmatpush1.msra.mxu0 0.0
      %258 = vmatprep.subr.mxu0 0.0
      %259 = vmatpush1.msra.mxu0 0.0
      %260 = vmatprep.subr.mxu0 0.0
      %261 = vmatpush1.msra.mxu0 0.0
      %262 = vmatprep.subr.mxu0 0.0
      %263 = vmatpush1.msra.mxu0 0.0
      %264 = vmatprep.subr.mxu0 0.0
      %265 = vmatpush1.msra.mxu0 0.0
      %266 = vmatprep.subr.mxu0 0.0
      %267 = vmatpush1.msra.mxu0 0.0
      %268 = vmatprep.subr.mxu0 0.0
      %269 = vmatpush1.msra.mxu0 0.0
      %270 = vmatprep.subr.mxu0 0.0
      %271 = vmatpush1.msra.mxu0 0.0
      %272 = vmatprep.subr.mxu0 0.0
      %273 = vmatpush1.msra.mxu0 0.0
      %274 = vmatprep.subr.mxu0 0.0
      %275 = vmatpush1.msra.mxu0 0.0
      %276 = vmatprep.subr.mxu0 0.0
      %277 = vmatpush1.msra.mxu0 0.0
      %278 = vmatprep.subr.mxu0 0.0
      %279 = vmatpush1.msra.mxu0 0.0
      %280 = vmatprep.subr.mxu0 0.0
      %281 = vmatpush1.msra.mxu0 0.0
      %282 = vmatprep.subr.mxu0 0.0
      %283 = vmatpush1.msra.mxu0 0.0
      %284 = vmatprep.subr.mxu0 0.0
      %285 = vmatpush1.msra.mxu0 0.0
      %286 = vmatprep.subr.mxu0 0.0
      %287 = vmatpush1.msra.mxu0 0.0
      %288 = vmatprep.subr.mxu0 0.0
      %289 = vmatpush1.msra.mxu0 0.0
      %290 = vmatprep.subr.mxu0 0.0
      %291 = vmatpush1.msra.mxu0 0.0
      %292 = vmatprep.subr.mxu0 0.0
      %293 = vmatpush1.msra.mxu0 0.0
      %294 = vmatprep.subr.mxu0 0.0
      %295 = vmatpush1.msra.mxu0 0.0
      %296 = vmatprep.subr.mxu0 0.0
      %297 = vmatpush1.msra.mxu0 0.0
      %298 = vmatprep.subr.mxu0 0.0
      %299 = vmatpush1.msra.mxu0 0.0
      %300 = vmatprep.subr.mxu0 0.0
      %301 = vmatpush1.msra.mxu0 0.0
      %302 = vmatprep.subr.mxu0 0.0
      %303 = vmatpush1.msra.mxu0 0.0
      %304 = vmatprep.subr.mxu0 0.0
      %305 = vmatpush1.msra.mxu0 0.0
      %306 = vmatprep.subr.mxu0 0.0
      %307 = vmatpush1.msra.mxu0 0.0
      %308 = vmatprep.subr.mxu0 0.0
      %309 = vmatpush1.msra.mxu0 0.0
      %310 = vmatprep.subr.mxu0 0.0
      %311 = vmatpush1.msra.mxu0 0.0
      %312 = vmatprep.mubr.f32.mxu0 0.0
      %313 = vmatmul.mubr.f32.gmra.mrb[0].mxu0 %v246
      %v314 = vpop.f32.mrb[0].mxu0
      %v315 = vadd.f32 0.0, %v314
      %v316 = vpop.f32.mrb[0].mxu0
      %317 = vdwg.mxu0
      %v318 = vadd.f32 %v241, %v315
      %vm319 = vcmask 261120
      %320 = vst.msk [vmem:[#allocation2] sm:$0xff] %vm319, %v318
      %p321 = scmp.eq.s32.totalorder %s21, 3
      // Predicated region
      $region37: #{relpos_transformer.14} parent=31 // pred_check
        %p322 = pneg %p321
      $region38: #{relpos_transformer.14} parent=31 // pred_check_branch
        %324 = sbr.rel (%p322) target = $region40
      $region39: #{relpos_transformer.14} parent=31 // pred_region
        %v325 = vld [vmem:[#allocation2] sm:$0xff]
        %v326 = vld [vmem:[%s2] sm:$0x1]
        %v328 = vlaneseq
        %v329 = vshrl.u32 %v328, 7
        %v330 = vsub.s32 0, %v329
        %v331 = vrot.slane %v326, %v330
        %v333 = vadd.f32 %v325, %v331
        %334 = vst.msk [vmem:[%s234] sm:$0xff] %vm319, %v333
      $region40: #{relpos_transformer.14} parent=31 // pred_fallthru
        _
      %p335 = scmp.lt.s32.totalorder %s19, 1
      %s336 = scalar_select %p335, %s19, 1
      %p337 = scmp.lt.s32.totalorder %s20, 0
      %s338 = scalar_select %p337, %s20, 0
      %s339 = sadd.s32 %s338, %s336
      %s340 = smul.addr %s339, 8
      %s341 = scalar_lea.vmem %s3, %s340
      // Predicated region
      $region41: #{relpos_transformer.14} parent=31 // pred_check
        %p342 = pneg %p130
      $region42: #{relpos_transformer.14} parent=31 // pred_check_branch
        %344 = sbr.rel (%p342) target = $region44
      $region43: #{relpos_transformer.14} parent=31 // pred_region
        _
      $region44: #{relpos_transformer.14} parent=31 // pred_fallthru
        _
    $region32: #{relpos_transformer.14} parent=5 // pred_fallthru
      _
    %p345 = scmp.le.s32.totalorder 2, %s9
    // Predicated region
    $region45: #{relpos_transformer.14} parent=5 // pred_check
      %p346 = pneg %p345
    $region46: #{relpos_transformer.14} parent=5 // pred_check_branch
      %348 = sbr.rel (%p346) target = $region48
    $region47: #{relpos_transformer.14} parent=5 // pred_region
      %s349 = ssub.s32 %s9, 2
      // Predicated region
      $region49: #{relpos_transformer.14} parent=47 // pred_check
        %p350 = pneg %p136
      $region50: #{relpos_transformer.14} parent=47 // pred_check_branch
        %352 = sbr.rel (%p350) target = $region52
      $region51: #{relpos_transformer.14} parent=47 // pred_region
        %p353 = scmp.lt.s32.totalorder %s22, 1
        %s354 = scalar_select %p353, %s22, 1
        %p355 = scmp.lt.s32.totalorder %s23, 0
        %s356 = scalar_select %p355, %s23, 0
        %s357 = sadd.s32 %s356, %s354
        %s358 = smul.addr %s357, 8
        %s359 = scalar_lea.vmem %s3, %s358
      $region52: #{relpos_transformer.14} parent=47 // pred_fallthru
        _
    $region48: #{relpos_transformer.14} parent=5 // pred_fallthru
      _
  $region6: #{relpos_transformer.14} parent=0 // loop_footer
    %s13 = sadd.s32 1, %s9
  $region7: #{relpos_transformer.14} parent=0 // loop_footer_branch
    %8 = sbr.rel target = $region3
  $region8: #{relpos_transformer.14} parent=0 // loop_exit
    _

// kernel: relpos_transformer.23
$region0: #{relpos_transformer.23}
  #allocation0 [shape = 'u32[]', space=smem, size = 0x4, offset = 0x4, fixed_abs, tag = 'smem constant byte address 0x4 - core index']
  #allocation1 [shape = 'u32[144,128]{1,0:T(1,128)}', space=vmem, size = 0x12000, scoped, tag = 'internal scratch']
  %s0 = inlined_call_operand.vmem [shape: f32[16,32], index: 0, kind: input, shape index: {}]
  %s1 = inlined_call_operand.vmem [shape: f32[16,32], index: 1, kind: input, shape index: {}]
  %s2 = inlined_call_operand.vmem [shape: f32[1,32], index: 2, kind: input, shape index: {}]
  %s3 = inlined_call_operand.vmem [shape: f32[1,32], index: 3, kind: input, shape index: {}]
  %s4 = inlined_call_operand.hbm [shape: f32[16,32], index: 4, kind: output, shape index: {}]
  %s5 = sld [smem:[#allocation0]]
  $region26: #{relpos_transformer.23} parent=0
    _
  %s7 = ssub.s32 1, %s5
  %s8 = scalar_select 0, %s7, %s5
  $region1: #{relpos_transformer.23} parent=0
    #allocation2 [shape = 'u8[8192]{0}', space=vmem, size = 0x2000, scoped, tag = 'output window, operand 0, single buffered']
    #allocation3 [shape = 's32[1]{0}', space=sflag, size = 0x4, scoped, tag = 'scoped memory for relpos_transformer.23']
    %9 = vsyncpa [#allocation3], 0
    // Predicated region
    $region2: #{relpos_transformer.23} parent=1 // pred_check
      _
    $region3: #{relpos_transformer.23} parent=1 // pred_check_branch
      %11 = sbr.rel (0) target = $region5
    $region4: #{relpos_transformer.23} parent=1 // pred_region
      _
    $region5: #{relpos_transformer.23} parent=1 // pred_fallthru
      _
    // Predicated region
    $region6: #{relpos_transformer.23} parent=1 // pred_check
      _
    $region7: #{relpos_transformer.23} parent=1 // pred_check_branch
      %13 = sbr.rel (0) target = $region9
    $region8: #{relpos_transformer.23} parent=1 // pred_region
      _
    $region9: #{relpos_transformer.23} parent=1 // pred_fallthru
      _
    // Predicated region
    $region10: #{relpos_transformer.23} parent=1 // pred_check
      _
    $region11: #{relpos_transformer.23} parent=1 // pred_check_branch
      %15 = sbr.rel (0) target = $region13
    $region12: #{relpos_transformer.23} parent=1 // pred_region
      _
    $region13: #{relpos_transformer.23} parent=1 // pred_fallthru
      _
    // Predicated region
    $region14: #{relpos_transformer.23} parent=1 // pred_check
      _
    $region15: #{relpos_transformer.23} parent=1 // pred_check_branch
      %17 = sbr.rel (0) target = $region17
    $region16: #{relpos_transformer.23} parent=1 // pred_region
      _
    $region17: #{relpos_transformer.23} parent=1 // pred_fallthru
      _
    %v18 = vld [vmem:[%s0] sm:$0xff]
    %v19 = vld [vmem:[%s0 + $0x8] sm:$0xff]
    %v20 = vld [vmem:[%s1] sm:$0xff]
    %v21 = vld [vmem:[%s1 + $0x8] sm:$0xff]
    %v22 = vadd.f32 %v18, %v20
    %v23 = vadd.f32 %v19, %v21
    %vm24 = vcmask 261120
    %v25 = vsel %vm24, %v22, 0.0
    %26 = vadd.xlane.f32.xlu0 %v25
    %v27 = vpop.xlane.xlu0 %26
    %v28 = vsel %vm24, %v23, 0.0
    %29 = vadd.xlane.f32.xlu0 %v28
    %v30 = vpop.xlane.xlu0 %29
    %v31 = vrcp.pop 32.0
    %v32 = vmul.f32 %v27, %v31
    %v33 = vmul.f32 %v30, %v31
    %v34 = vsub.f32 %v22, %v32
    %v35 = vsub.f32 %v23, %v33
    %v36 = vmul.f32 %v34, %v34
    %v37 = vmul.f32 %v35, %v35
    %v38 = vsel %vm24, %v36, 0.0
    %39 = vadd.xlane.f32.xlu0 %v38
    %v40 = vpop.xlane.xlu0 %39
    %v41 = vsel %vm24, %v37, 0.0
    %42 = vadd.xlane.f32.xlu0 %v41
    %v43 = vpop.xlane.xlu0 %42
    %v44 = vmul.f32 %v40, %v31
    %v45 = vmul.f32 %v43, %v31
    %v46 = vadd.f32 %v44, 1e-05
    %v47 = vadd.f32 %v45, 1e-05
    %v48 = vrsqrt.pop %v46
    %v49 = vrsqrt.pop %v47
    %v50 = vmul.f32 %v34, %v48
    %v51 = vmul.f32 %v35, %v49
    %v52 = vld [vmem:[%s2] sm:$0x1]
    %v54 = vlaneseq
    %v55 = vshrl.u32 %v54, 7
    %v56 = vsub.s32 0, %v55
    %v57 = vrot.slane %v52, %v56
    %v59 = vmul.f32 %v50, %v57
    %v60 = vmul.f32 %v51, %v57
    %v61 = vld [vmem:[%s3] sm:$0x1]
    %v63 = vlaneseq
    %v64 = vshrl.u32 %v63, 7
    %v65 = vsub.s32 0, %v64
    %v66 = vrot.slane %v61, %v65
    %v68 = vadd.f32 %v59, %v66
    %v69 = vadd.f32 %v60, %v66
    %70 = vst.msk [vmem:[#allocation2] sm:$0xff] %vm24, %v68
    %71 = vst.msk [vmem:[#allocation2 + $0x8] sm:$0xff] %vm24, %v69
    // Predicated region
    $region18: #{relpos_transformer.23} parent=1 // pred_check
      _
    $region19: #{relpos_transformer.23} parent=1 // pred_check_branch
      %73 = sbr.rel (0) target = $region21
    $region20: #{relpos_transformer.23} parent=1 // pred_region
      %s75 = ssub.s32 256, 256
      %76 = vsyncadd [#allocation3], %s75
      %s77 = sshll.u32 [#allocation2], 4
      %s78 = int_to_ptr.vmem [resolvable:$true] %s77
      %83 = dma.vmem_to_hbm [thread:$0]  %s78, 256, %s4, [#allocation3], 128, 128, 8
    $region21: #{relpos_transformer.23} parent=1 // pred_fallthru
      _
    // Predicated region
    $region22: #{relpos_transformer.23} parent=1 // pred_check
      _
    $region23: #{relpos_transformer.23} parent=1 // pred_check_branch
      %85 = sbr.rel (0) target = $region25
    $region24: #{relpos_transformer.23} parent=1 // pred_region
      %86 = dma.done [#allocation3], 256
    $region25: #{relpos_transformer.23} parent=1 // pred_fallthru
      _
    %87 = vsyncpa [#allocation3], 1

// kernel: relpos_transformer.16
$region0: #{relpos_transformer.16}
  #allocation0 [shape = 'u32[]', space=smem, size = 0x4, offset = 0x4, fixed_abs, tag = 'smem constant byte address 0x4 - core index']
  #allocation1 [shape = 'u32[144,128]{1,0:T(1,128)}', space=vmem, size = 0x12000, scoped, tag = 'internal scratch']
  #allocation2 [shape = 'f32[16,32]{1,0:T(8,128)}', space=vmem, size = 0x2000, scoped, tag = 'scratch operand']
  %s0 = inlined_call_operand.vmem [shape: f32[16,32], index: 0, kind: input, shape index: {}]
  %s1 = inlined_call_operand.vmem [shape: f32[32,128], index: 1, kind: input, shape index: {}]
  %s2 = inlined_call_operand.vmem [shape: f32[1,128], index: 2, kind: input, shape index: {}]
  %s3 = inlined_call_operand.vmem [shape: f32[128,32], index: 3, kind: input, shape index: {}]
  %s4 = inlined_call_operand.vmem [shape: f32[1,32], index: 4, kind: input, shape index: {}]
  %s5 = inlined_call_operand.vmem [shape: f32[16,32], index: 5, kind: output, shape index: {}]
  %s6 = sld [smem:[#allocation0]]
  $region38: #{relpos_transformer.16} parent=0
    _
  %s8 = ssub.s32 1, %s6
  %s9 = scalar_select 0, %s8, %s6
  // Predicated region
  $region2: #{relpos_transformer.16} parent=0 // pred_check
    _
  $region3: #{relpos_transformer.16} parent=0 // pred_check_branch
    %11 = sbr.rel (0) target = $region5
  $region4: #{relpos_transformer.16} parent=0 // pred_region
    _
  $region5: #{relpos_transformer.16} parent=0 // pred_fallthru
    _
  // Predicated region
  $region6: #{relpos_transformer.16} parent=0 // pred_check
    _
  $region7: #{relpos_transformer.16} parent=0 // pred_check_branch
    %13 = sbr.rel (0) target = $region9
  $region8: #{relpos_transformer.16} parent=0 // pred_region
    _
  $region9: #{relpos_transformer.16} parent=0 // pred_fallthru
    _
  // Predicated region
  $region10: #{relpos_transformer.16} parent=0 // pred_check
    _
  $region11: #{relpos_transformer.16} parent=0 // pred_check_branch
    %15 = sbr.rel (0) target = $region13
  $region12: #{relpos_transformer.16} parent=0 // pred_region
    _
  $region13: #{relpos_transformer.16} parent=0 // pred_fallthru
    _
  // Predicated region
  $region14: #{relpos_transformer.16} parent=0 // pred_check
    _
  $region15: #{relpos_transformer.16} parent=0 // pred_check_branch
    %17 = sbr.rel (0) target = $region17
  $region16: #{relpos_transformer.16} parent=0 // pred_region
    _
  $region17: #{relpos_transformer.16} parent=0 // pred_fallthru
    _
  // Predicated region
  $region18: #{relpos_transformer.16} parent=0 // pred_check
    _
  $region19: #{relpos_transformer.16} parent=0 // pred_check_branch
    %19 = sbr.rel (0) target = $region21
  $region20: #{relpos_transformer.16} parent=0 // pred_region
    _
  $region21: #{relpos_transformer.16} parent=0 // pred_fallthru
    _
  %p20 = scmp.eq.s32.totalorder 0, 0
  // Predicated region
  $region22: #{relpos_transformer.16} parent=0 // pred_check
    %p21 = pneg %p20
  $region23: #{relpos_transformer.16} parent=0 // pred_check_branch
    %23 = sbr.rel (%p21) target = $region25
  $region24: #{relpos_transformer.16} parent=0 // pred_region
    %vm24 = vcmask 261120
    %25 = vst.msk [vmem:[#allocation2] sm:$0xff] %vm24, 0.0
    %26 = vst.msk [vmem:[#allocation2 + $0x8] sm:$0xff] %vm24, 0.0
  $region25: #{relpos_transformer.16} parent=0 // pred_fallthru
    _
  %v27 = vld [vmem:[%s0] sm:$0xff]
  %v28 = vld [vmem:[%s0 + $0x8] sm:$0xff]
  %v29 = vld [vmem:[%s1] sm:$0xff]
  %v30 = vld [vmem:[%s1 + $0x8] sm:$0xff]
  %v31 = vld [vmem:[%s1 + $0x10] sm:$0xff]
  %v32 = vld [vmem:[%s1 + $0x18] sm:$0xff]
  %v33 = vld [vmem:[%s2] sm:$0x1]
  %v35 = vlaneseq
  %v36 = vshrl.u32 %v35, 7
  %v37 = vsub.s32 0, %v36
  %v38 = vrot.slane %v33, %v37
  %vm40 = vcmask 261120
  %v42 = vsel %vm40, %v27, 0
  %v45 = vsel %vm40, %v28, 0
  %47 = vmatprep.subr.mxu0 0.0
  %48 = vmatpush1.msra.mxu0 %v29
  %49 = vmatprep.subr.mxu0 0.0
  %50 = vmatpush1.msra.mxu0 %v30
  %51 = vmatprep.subr.mxu0 0.0
  %52 = vmatpush1.msra.mxu0 %v31
  %53 = vmatprep.subr.mxu0 0.0
  %54 = vmatpush1.msra.mxu0 %v32
  %55 = vmatprep.subr.mxu0 0.0
  %56 = vmatpush1.msra.mxu0 0.0
  %57 = vmatprep.subr.mxu0 0.0
  %58 = vmatpush1.msra.mxu0 0.0
  %59 = vmatprep.subr.mxu0 0.0
  %60 = vmatpush1.msra.mxu0 0.0
  %61 = vmatprep.subr.mxu0 0.0
  %62 = vmatpush1.msra.mxu0 0.0
  %63 = vmatprep.subr.mxu0 0.0
  %64 = vmatpush1.msra.mxu0 0.0
  %65 = vmatprep.subr.mxu0 0.0
  %66 = vmatpush1.msra.mxu0 0.0
  %67 = vmatprep.subr.mxu0 0.0
  %68 = vmatpush1.msra.mxu0 0.0
  %69 = vmatprep.subr.mxu0 0.0
  %70 = vmatpush1.msra.mxu0 0.0
  %71 = vmatprep.subr.mxu0 0.0
  %72 = vmatpush1.msra.mxu0 0.0
  %73 = vmatprep.subr.mxu0 0.0
  %74 = vmatpush1.msra.mxu0 0.0
  %75 = vmatprep.subr.mxu0 0.0
  %76 = vmatpush1.msra.mxu0 0.0
  %77 = vmatprep.subr.mxu0 0.0
  %78 = vmatpush1.msra.mxu0 0.0
  %79 = vmatprep.subr.mxu0 0.0
  %80 = vmatpush1.msra.mxu0 0.0
  %81 = vmatprep.subr.mxu0 0.0
  %82 = vmatpush1.msra.mxu0 0.0
  %83 = vmatprep.subr.mxu0 0.0
  %84 = vmatpush1.msra.mxu0 0.0
  %85 = vmatprep.subr.mxu0 0.0
  %86 = vmatpush1.msra.mxu0 0.0
  %87 = vmatprep.subr.mxu0 0.0
  %88 = vmatpush1.msra.mxu0 0.0
  %89 = vmatprep.subr.mxu0 0.0
  %90 = vmatpush1.msra.mxu0 0.0
  %91 = vmatprep.subr.mxu0 0.0
  %92 = vmatpush1.msra.mxu0 0.0
  %93 = vmatprep.subr.mxu0 0.0
  %94 = vmatpush1.msra.mxu0 0.0
  %95 = vmatprep.subr.mxu0 0.0
  %96 = vmatpush1.msra.mxu0 0.0
  %97 = vmatprep.subr.mxu0 0.0
  %98 = vmatpush1.msra.mxu0 0.0
  %99 = vmatprep.subr.mxu0 0.0
  %100 = vmatpush1.msra.mxu0 0.0
  %101 = vmatprep.subr.mxu0 0.0
  %102 = vmatpush1.msra.mxu0 0.0
  %103 = vmatprep.subr.mxu0 0.0
  %104 = vmatpush1.msra.mxu0 0.0
  %105 = vmatprep.subr.mxu0 0.0
  %106 = vmatpush1.msra.mxu0 0.0
  %107 = vmatprep.subr.mxu0 0.0
  %108 = vmatpush1.msra.mxu0 0.0
  %109 = vmatprep.subr.mxu0 0.0
  %110 = vmatpush1.msra.mxu0 0.0
  %111 = vmatprep.mubr.f32.mxu0 0.0
  %112 = vmatmul.mubr.f32.gmra.mrb[0].mxu0 %v42
  %v113 = vpop.f32.mrb[0].mxu0
  %v114 = vadd.f32 %v38, %v113
  %v115 = vpop.f32.mrb[0].mxu0
  %116 = vmatprep.mubr.f32.mxu0 0.0
  %117 = vmatmul.mubr.f32.gmra.mrb[0].mxu0 %v45
  %v118 = vpop.f32.mrb[0].mxu0
  %v119 = vadd.f32 %v38, %v118
  %v120 = vpop.f32.mrb[0].mxu0
  %121 = vdwg.mxu0
  %v122 = vmul.f32 %v114, 0.5
  %v123 = vmul.f32 %v119, 0.5
  %v124 = vmul.f32 %v114, 0.70710677
  %v125 = vmul.f32 %v119, 0.70710677
  %vm126 = vcmp.lt.f32.partialorder %v124, 0.0
  %vm127 = vcmp.lt.f32.partialorder %v125, 0.0
  %v128 = vsel %vm126, -1.0, 1.0
  %v129 = vsel %vm127, -1.0, 1.0
  %v130 = vand.u32 2147483647, %v124
  %v131 = vand.u32 2147483647, %v125
  %v132 = vmul.f32 %v130, 0.3275911
  %v133 = vmul.f32 %v131, 0.3275911
  %v134 = vadd.f32 %v132, 1.0
  %v135 = vadd.f32 %v133, 1.0
  %v136 = vrcp.pop %v134
  %v137 = vmul.f32 1.0, %v136
  %v138 = vrcp.pop %v135
  %v139 = vmul.f32 1.0, %v138
  %v140 = vmul.f32 %v137, 1.0614054
  %v141 = vmul.f32 %v139, 1.0614054
  %v142 = vadd.f32 %v140, -1.4531521
  %v143 = vadd.f32 %v141, -1.4531521
  %v144 = vmul.f32 %v142, %v137
  %v145 = vmul.f32 %v143, %v139
  %v146 = vadd.f32 %v144, 1.4214138
  %v147 = vadd.f32 %v145, 1.4214138
  %v148 = vmul.f32 %v146, %v137
  %v149 = vmul.f32 %v147, %v139
  %v150 = vadd.f32 %v148, -0.28449672
  %v151 = vadd.f32 %v149, -0.28449672
  %v152 = vmul.f32 %v150, %v137
  %v153 = vmul.f32 %v151, %v139
  %v154 = vadd.f32 %v152, 0.2548296
  %v155 = vadd.f32 %v153, 0.2548296
  %v156 = vmul.f32 %v154, %v137
  %v157 = vmul.f32 %v155, %v139
  %v158 = vsub.f32 0.0, %v130
  %v159 = vsub.f32 0.0, %v131
  %v160 = vmul.f32 %v158, %v130
  %v161 = vmul.f32 %v159, %v131
  %v162 = vmul.f32 %v160, 1.442695
  %v163 = vpow.pop %v162
  %v164 = vmul.f32 %v161, 1.442695
  %v165 = vpow.pop %v164
  %v166 = vmul.f32 %v156, %v163
  %v167 = vmul.f32 %v157, %v165
  %v168 = vsub.f32 1.0, %v166
  %v169 = vsub.f32 1.0, %v167
  %v170 = vmul.f32 %v128, %v168
  %v171 = vmul.f32 %v129, %v169
  %v172 = vadd.f32 %v170, 1.0
  %v173 = vadd.f32 %v171, 1.0
  %v174 = vmul.f32 %v122, %v172
  %v175 = vmul.f32 %v123, %v173
  %v176 = vld [vmem:[#allocation2] sm:$0xff]
  %v177 = vld [vmem:[#allocation2 + $0x8] sm:$0xff]
  %v178 = vld [vmem:[%s3] sm:$0xff]
  %v179 = vld [vmem:[%s3 + $0x8] sm:$0xff]
  %v180 = vld [vmem:[%s3 + $0x10] sm:$0xff]
  %v181 = vld [vmem:[%s3 + $0x18] sm:$0xff]
  %v182 = vld [vmem:[%s3 + $0x20] sm:$0xff]
  %v183 = vld [vmem:[%s3 + $0x28] sm:$0xff]
  %v184 = vld [vmem:[%s3 + $0x30] sm:$0xff]
  %v185 = vld [vmem:[%s3 + $0x38] sm:$0xff]
  %v186 = vld [vmem:[%s3 + $0x40] sm:$0xff]
  %v187 = vld [vmem:[%s3 + $0x48] sm:$0xff]
  %v188 = vld [vmem:[%s3 + $0x50] sm:$0xff]
  %v189 = vld [vmem:[%s3 + $0x58] sm:$0xff]
  %v190 = vld [vmem:[%s3 + $0x60] sm:$0xff]
  %v191 = vld [vmem:[%s3 + $0x68] sm:$0xff]
  %v192 = vld [vmem:[%s3 + $0x70] sm:$0xff]
  %v193 = vld [vmem:[%s3 + $0x78] sm:$0xff]
  %194 = vmatprep.subr.mxu0 0.0
  %195 = vmatpush1.msra.mxu0 %v178
  %196 = vmatprep.subr.mxu0 0.0
  %197 = vmatpush1.msra.mxu0 %v179
  %198 = vmatprep.subr.mxu0 0.0
  %199 = vmatpush1.msra.mxu0 %v180
  %200 = vmatprep.subr.mxu0 0.0
  %201 = vmatpush1.msra.mxu0 %v181
  %202 = vmatprep.subr.mxu0 0.0
  %203 = vmatpush1.msra.mxu0 %v182
  %204 = vmatprep.subr.mxu0 0.0
  %205 = vmatpush1.msra.mxu0 %v183
  %206 = vmatprep.subr.mxu0 0.0
  %207 = vmatpush1.msra.mxu0 %v184
  %208 = vmatprep.subr.mxu0 0.0
  %209 = vmatpush1.msra.mxu0 %v185
  %210 = vmatprep.subr.mxu0 0.0
  %211 = vmatpush1.msra.mxu0 %v186
  %212 = vmatprep.subr.mxu0 0.0
  %213 = vmatpush1.msra.mxu0 %v187
  %214 = vmatprep.subr.mxu0 0.0
  %215 = vmatpush1.msra.mxu0 %v188
  %216 = vmatprep.subr.mxu0 0.0
  %217 = vmatpush1.msra.mxu0 %v189
  %218 = vmatprep.subr.mxu0 0.0
  %219 = vmatpush1.msra.mxu0 %v190
  %220 = vmatprep.subr.mxu0 0.0
  %221 = vmatpush1.msra.mxu0 %v191
  %222 = vmatprep.subr.mxu0 0.0
  %223 = vmatpush1.msra.mxu0 %v192
  %224 = vmatprep.subr.mxu0 0.0
  %225 = vmatpush1.msra.mxu0 %v193
  %226 = vmatprep.subr.mxu0 0.0
  %227 = vmatpush1.msra.mxu0 0.0
  %228 = vmatprep.subr.mxu0 0.0
  %229 = vmatpush1.msra.mxu0 0.0
  %230 = vmatprep.subr.mxu0 0.0
  %231 = vmatpush1.msra.mxu0 0.0
  %232 = vmatprep.subr.mxu0 0.0
  %233 = vmatpush1.msra.mxu0 0.0
  %234 = vmatprep.subr.mxu0 0.0
  %235 = vmatpush1.msra.mxu0 0.0
  %236 = vmatprep.subr.mxu0 0.0
  %237 = vmatpush1.msra.mxu0 0.0
  %238 = vmatprep.subr.mxu0 0.0
  %239 = vmatpush1.msra.mxu0 0.0
  %240 = vmatprep.subr.mxu0 0.0
  %241 = vmatpush1.msra.mxu0 0.0
  %242 = vmatprep.subr.mxu0 0.0
  %243 = vmatpush1.msra.mxu0 0.0
  %244 = vmatprep.subr.mxu0 0.0
  %245 = vmatpush1.msra.mxu0 0.0
  %246 = vmatprep.subr.mxu0 0.0
  %247 = vmatpush1.msra.mxu0 0.0
  %248 = vmatprep.subr.mxu0 0.0
  %249 = vmatpush1.msra.mxu0 0.0
  %250 = vmatprep.subr.mxu0 0.0
  %251 = vmatpush1.msra.mxu0 0.0
  %252 = vmatprep.subr.mxu0 0.0
  %253 = vmatpush1.msra.mxu0 0.0
  %254 = vmatprep.subr.mxu0 0.0
  %255 = vmatpush1.msra.mxu0 0.0
  %256 = vmatprep.subr.mxu0 0.0
  %257 = vmatpush1.msra.mxu0 0.0
  %258 = vmatprep.mubr.f32.mxu0 0.0
  %259 = vmatmul.mubr.f32.gmra.mrb[0].mxu0 %v174
  %v260 = vpop.f32.mrb[0].mxu0
  %v261 = vadd.f32 0.0, %v260
  %v262 = vpop.f32.mrb[0].mxu0
  %263 = vmatprep.mubr.f32.mxu0 0.0
  %264 = vmatmul.mubr.f32.gmra.mrb[0].mxu0 %v175
  %v265 = vpop.f32.mrb[0].mxu0
  %v266 = vadd.f32 0.0, %v265
  %v267 = vpop.f32.mrb[0].mxu0
  %268 = vdwg.mxu0
  %v269 = vadd.f32 %v176, %v261
  %v270 = vadd.f32 %v177, %v266
  %271 = vst.msk [vmem:[#allocation2] sm:$0xff] %vm40, %v269
  %272 = vst.msk [vmem:[#allocation2 + $0x8] sm:$0xff] %vm40, %v270
  // Predicated region
  $region26: #{relpos_transformer.16} parent=0 // pred_check
    %p273 = pneg %p20
  $region27: #{relpos_transformer.16} parent=0 // pred_check_branch
    %275 = sbr.rel (%p273) target = $region29
  $region28: #{relpos_transformer.16} parent=0 // pred_region
    %v276 = vld [vmem:[#allocation2] sm:$0xff]
    %v277 = vld [vmem:[#allocation2 + $0x8] sm:$0xff]
    %v278 = vld [vmem:[%s4] sm:$0x1]
    %v280 = vlaneseq
    %v281 = vshrl.u32 %v280, 7
    %v282 = vsub.s32 0, %v281
    %v283 = vrot.slane %v278, %v282
    %v285 = vadd.f32 %v276, %v283
    %v286 = vadd.f32 %v277, %v283
    %287 = vst.msk [vmem:[%s5] sm:$0xff] %vm40, %v285
    %288 = vst.msk [vmem:[%s5 + $0x8] sm:$0xff] %vm40, %v286
  $region29: #{relpos_transformer.16} parent=0 // pred_fallthru
    _
  // Predicated region
  $region30: #{relpos_transformer.16} parent=0 // pred_check
    _
  $region31: #{relpos_transformer.16} parent=0 // pred_check_branch
    %290 = sbr.rel (0) target = $region33
  $region32: #{relpos_transformer.16} parent=0 // pred_region
    _
  $region33: #{relpos_transformer.16} parent=0 // pred_fallthru
    _
  // Predicated region
  $region34: #{relpos_transformer.16} parent=0 // pred_check
    _
  $region35: #{relpos_transformer.16} parent=0 // pred_check_branch
    %292 = sbr.rel (0) target = $region37
  $region36: #{relpos_transformer.16} parent=0 // pred_region
    _
  $region37: #{relpos_transformer.16} parent=0 // pred_fallthru
    _

// kernel: relpos_transformer.13
$region0: #{relpos_transformer.13}
  #allocation0 [shape = 'u32[]', space=smem, size = 0x4, offset = 0x4, fixed_abs, tag = 'smem constant byte address 0x4 - core index']
  #allocation1 [shape = 'u32[144,128]{1,0:T(1,128)}', space=vmem, size = 0x12000, scoped, tag = 'internal scratch']
  #allocation2 [shape = 'f32[4,8,1]{2,1,0:T(8,128)}', space=vmem, size = 0x4000, scoped, tag = 'scratch operand']
  #allocation3 [shape = 'f32[4,8,1]{2,1,0:T(8,128)}', space=vmem, size = 0x4000, scoped, tag = 'scratch operand']
  #allocation4 [shape = 'f32[4,8,8]{2,1,0:T(8,128)}', space=vmem, size = 0x4000, scoped, tag = 'scratch operand']
  #allocation5 [shape = 'f32[1]{0:T(128)S(6)}', space=smem, size = 0x200, scoped, tag = 'scoped memory for relpos_transformer.13']
  %s0 = inlined_call_operand.<no memory space> [shape: f32[1], index: 0, kind: input, shape index: {}]
  %s1 = inlined_call_operand.vmem [shape: f32[4], index: 1, kind: input, shape index: {}]
  %s2 = inlined_call_operand.vmem [shape: f32[2,4,8,8], index: 2, kind: input, shape index: {}]
  %s3 = inlined_call_operand.vmem [shape: f32[2,4,8,8], index: 3, kind: input, shape index: {}]
  %s4 = inlined_call_operand.vmem [shape: f32[2,4,8,8], index: 4, kind: input, shape index: {}]
  %s5 = inlined_call_operand.vmem [shape: f32[2,8,3], index: 5, kind: input, shape index: {}]
  %s6 = inlined_call_operand.vmem [shape: f32[2,3,8], index: 6, kind: input, shape index: {}]
  %s7 = inlined_call_operand.vmem [shape: f32[16,4], index: 7, kind: input, shape index: {}]
  %s8 = inlined_call_operand.vmem [shape: f32[16,1], index: 8, kind: input, shape index: {}]
  %s9 = inlined_call_operand.vmem [shape: f32[16,4], index: 9, kind: input, shape index: {}]
  %s10 = inlined_call_operand.vmem [shape: f32[2,1,8], index: 10, kind: input, shape index: {}]
  %s11 = inlined_call_operand.vmem [shape: f32[2,4,8,8], index: 11, kind: output, shape index: {}]
  %s12 = sld [smem:[#allocation0]]
  $region89: #{relpos_transformer.13} parent=0
    _
  %s14 = ssub.s32 1, %s12
  %s15 = scalar_select 0, %s14, %s12
  %16 = sst [smem:[#allocation5]] %s0
  $region1: #{relpos_transformer.13} parent=0
    #allocation6 [shape = 'u8[512]{0}', space=smem, size = 0x200, scoped, tag = 'input window, operand 1, single buffered']
    #allocation7 [shape = 's32[2]{0}', space=sflag, size = 0x8, scoped, tag = 'scoped memory for relpos_transformer.13']
    %17 = vsyncpa [#allocation7], 0
    loop: start=0, step=1, limit=4
    $region2: #{relpos_transformer.13} parent=1 // loop_pre_header
      _
    $region3: #{relpos_transformer.13} parent=1 // loop_header
      %s19 = sphi 0, %s23
      %p20 = scmp.ge.s32.totalorder %s19, 4
      %s26 = sphi 0, %s45
      %s27 = sphi 0, %s41
      %s28 = sphi 0, %s37
      %s29 = sphi 0, %s26
      %s30 = sphi 0, %s27
      %s31 = sphi 0, %s28
      %s32 = sphi 0, %s29
      %s33 = sphi 0, %s30
      %s34 = sphi 0, %s31
      %s46 = sphi 0, %s46
      %s48 = sphi 0, %s46
      %s49 = sphi 0, %s48
      %s63 = sphi 0, %s49
      %s67 = sphi 0, %s67
      %s69 = sphi 0, %s67
      %s70 = sphi 0, %s69
      %s84 = sphi 0, %s70
      %s92 = sphi 0, %s94
      %s95 = sphi 0, %s92
      %s96 = sphi 0, %s95
      %s112 = sphi 0, %s96
      %s120 = sphi 0, %s122
      %s123 = sphi 0, %s120
      %s124 = sphi 0, %s123
      %s140 = sphi 0, %s124
      %s148 = sphi 0, %s150
      %s151 = sphi 0, %s148
      %s152 = sphi 0, %s151
      %s168 = sphi 0, %s152
      %s176 = sphi 0, %s178
      %s179 = sphi 0, %s176
      %s180 = sphi 0, %s179
      %s196 = sphi 0, %s180
      %s204 = sphi 0, %s206
      %s207 = sphi 0, %s204
      %s208 = sphi 0, %s207
      %s224 = sphi 0, %s208
      %s228 = sphi 0, %s228
      %s230 = sphi 0, %s228
      %s231 = sphi 0, %s230
      %s245 = sphi 0, %s231
      %s249 = sphi 0, %s249
      %s251 = sphi 0, %s249
      %s252 = sphi 0, %s251
      %s266 = sphi 0, %s252
      %s270 = sphi 0, %s270
      %s272 = sphi 0, %s270
      %s273 = sphi 0, %s272
      %s287 = sphi 0, %s273
      %s295 = sphi 0, %s297
      %s298 = sphi 0, %s295
      %s299 = sphi 0, %s298
      %s315 = sphi 0, %s299
      %s323 = sphi 0, %s325
      %s326 = sphi 0, %s323
      %s327 = sphi 0, %s326
      %s343 = sphi 0, %s327
    $region4: #{relpos_transformer.13} parent=1 // loop_header_branch
      %22 = sbr.rel (%p20) target = $region8
    $region5: #{relpos_transformer.13} parent=1 // loop_body
      %s24 = ssub.s32 %s19, 1
      %s25 = ssub.s32 %s19, 2
      %s35 = sadd.s32 1, %s28
      %p36 = scmp.ge.s32.totalorder %s35, 1
      %s37 = scalar_select %p36, 0, %s35
      %s38 = sadd.s32 1, %s27
      %s39 = scalar_select %p36, %s38, %s27
      %p40 = scmp.ge.s32.totalorder %s39, 1
      %s41 = scalar_select %p40, 0, %s39
      %s42 = sadd.s32 1, %s26
      %s43 = scalar_select %p40, %s42, %s26
      %p44 = scmp.ge.s32.totalorder %s43, 2
      %s45 = scalar_select %p44, 0, %s43
      %s47 = sadd.s32 %s46, 1
      %p50 = scmp.eq.s32.totalorder %s19, 1
      %p51 = scmp.ne.s32.totalorder %s46, %s48
      %p52 = scmp.eq.s32.totalorder %s19, 0
      %p53 = por %p51, %p52
      %p54 = scmp.ne.s32.totalorder %s46, %s48
      %p55 = scmp.eq.s32.totalorder %s24, 1
      %p56 = por %p54, %p55
      %p57 = scmp.ne.s32.totalorder %s48, %s49
      %p58 = scmp.eq.s32.totalorder %s24, 0
      %p59 = por %p57, %p58
      %p60 = scmp.ne.s32.totalorder %s48, %s49
      %p61 = scmp.eq.s32.totalorder %s25, 1
      %p62 = por %p60, %p61
      %p64 = scmp.ne.s32.totalorder %s49, %s63
      %p65 = scmp.eq.s32.totalorder %s25, 0
      %p66 = por %p64, %p65
      %s68 = sadd.s32 %s67, 1
      %p71 = scmp.eq.s32.totalorder %s19, 1
      %p72 = scmp.ne.s32.totalorder %s67, %s69
      %p73 = scmp.eq.s32.totalorder %s19, 0
      %p74 = por %p72, %p73
      %p75 = scmp.ne.s32.totalorder %s67, %s69
      %p76 = scmp.eq.s32.totalorder %s24, 1
      %p77 = por %p75, %p76
      %p78 = scmp.ne.s32.totalorder %s69, %s70
      %p79 = scmp.eq.s32.totalorder %s24, 0
      %p80 = por %p78, %p79
      %p81 = scmp.ne.s32.totalorder %s69, %s70
      %p82 = scmp.eq.s32.totalorder %s25, 1
      %p83 = por %p81, %p82
      %p85 = scmp.ne.s32.totalorder %s70, %s84
      %p86 = scmp.eq.s32.totalorder %s25, 0
      %p87 = por %p85, %p86
      %s88 = ssub.s32 %s26, %s45
      %s89 = ssub.s32 %s27, %s41
      %s90 = sor.u32 %s88, %s89
      %p91 = scmp.eq.s32.totalorder %s90, 0
      %s93 = sadd.s32 %s92, 1
      %s94 = scalar_select %p91, %s92, %s93
      %p97 = pneg %p91
      %p98 = scmp.eq.s32.totalorder %s19, 1
      %p99 = por %p97, %p98
      %p100 = scmp.ne.s32.totalorder %s92, %s95
      %p101 = scmp.eq.s32.totalorder %s19, 0
      %p102 = por %p100, %p101
      %p103 = scmp.ne.s32.totalorder %s92, %s95
      %p104 = scmp.eq.s32.totalorder %s24, 1
      %p105 = por %p103, %p104
      %p106 = scmp.ne.s32.totalorder %s95, %s96
      %p107 = scmp.eq.s32.totalorder %s24, 0
      %p108 = por %p106, %p107
      %p109 = scmp.ne.s32.totalorder %s95, %s96
      %p110 = scmp.eq.s32.totalorder %s25, 1
      %p111 = por %p109, %p110
      %p113 = scmp.ne.s32.totalorder %s96, %s112
      %p114 = scmp.eq.s32.totalorder %s25, 0
      %p115 = por %p113, %p114
      %s116 = ssub.s32 %s26, %s45
      %s117 = ssub.s32 %s28, %s37
      %s118 = sor.u32 %s116, %s117
      %p119 = scmp.eq.s32.totalorder %s118, 0
      %s121 = sadd.s32 %s120, 1
      %s122 = scalar_select %p119, %s120, %s121
      %p125 = pneg %p119
      %p126 = scmp.eq.s32.totalorder %s19, 1
      %p127 = por %p125, %p126
      %p128 = scmp.ne.s32.totalorder %s120, %s123
      %p129 = scmp.eq.s32.totalorder %s19, 0
      %p130 = por %p128, %p129
      %p131 = scmp.ne.s32.totalorder %s120, %s123
      %p132 = scmp.eq.s32.totalorder %s24, 1
      %p133 = por %p131, %p132
      %p134 = scmp.ne.s32.totalorder %s123, %s124
      %p135 = scmp.eq.s32.totalorder %s24, 0
      %p136 = por %p134, %p135
      %p137 = scmp.ne.s32.totalorder %s123, %s124
      %p138 = scmp.eq.s32.totalorder %s25, 1
      %p139 = por %p137, %p138
      %p141 = scmp.ne.s32.totalorder %s124, %s140
      %p142 = scmp.eq.s32.totalorder %s25, 0
      %p143 = por %p141, %p142
      %s144 = ssub.s32 %s26, %s45
      %s145 = ssub.s32 %s28, %s37
      %s146 = sor.u32 %s144, %s145
      %p147 = scmp.eq.s32.totalorder %s146, 0
      %s149 = sadd.s32 %s148, 1
      %s150 = scalar_select %p147, %s148, %s149
      %p153 = pneg %p147
      %p154 = scmp.eq.s32.totalorder %s19, 1
      %p155 = por %p153, %p154
      %p156 = scmp.ne.s32.totalorder %s148, %s151
      %p157 = scmp.eq.s32.totalorder %s19, 0
      %p158 = por %p156, %p157
      %p159 = scmp.ne.s32.totalorder %s148, %s151
      %p160 = scmp.eq.s32.totalorder %s24, 1
      %p161 = por %p159, %p160
      %p162 = scmp.ne.s32.totalorder %s151, %s152
      %p163 = scmp.eq.s32.totalorder %s24, 0
      %p164 = por %p162, %p163
      %p165 = scmp.ne.s32.totalorder %s151, %s152
      %p166 = scmp.eq.s32.totalorder %s25, 1
      %p167 = por %p165, %p166
      %p169 = scmp.ne.s32.totalorder %s152, %s168
      %p170 = scmp.eq.s32.totalorder %s25, 0
      %p171 = por %p169, %p170
      %s172 = ssub.s32 %s26, %s45
      %s173 = ssub.s32 %s27, %s41
      %s174 = sor.u32 %s172, %s173
      %p175 = scmp.eq.s32.totalorder %s174, 0
      %s177 = sadd.s32 %s176, 1
      %s178 = scalar_select %p175, %s176, %s177
      %p181 = pneg %p175
      %p182 = scmp.eq.s32.totalorder %s19, 1
      %p183 = por %p181, %p182
      %p184 = scmp.ne.s32.totalorder %s176, %s179
      %p185 = scmp.eq.s32.totalorder %s19, 0
      %p186 = por %p184, %p185
      %p187 = scmp.ne.s32.totalorder %s176, %s179
      %p188 = scmp.eq.s32.totalorder %s24, 1
      %p189 = por %p187, %p188
      %p190 = scmp.ne.s32.totalorder %s179, %s180
      %p191 = scmp.eq.s32.totalorder %s24, 0
      %p192 = por %p190, %p191
      %p193 = scmp.ne.s32.totalorder %s179, %s180
      %p194 = scmp.eq.s32.totalorder %s25, 1
      %p195 = por %p193, %p194
      %p197 = scmp.ne.s32.totalorder %s180, %s196
      %p198 = scmp.eq.s32.totalorder %s25, 0
      %p199 = por %p197, %p198
      %s200 = ssub.s32 %s26, %s45
      %s201 = ssub.s32 %s28, %s37
      %s202 = sor.u32 %s200, %s201
      %p203 = scmp.eq.s32.totalorder %s202, 0
      %s205 = sadd.s32 %s204, 1
      %s206 = scalar_select %p203, %s204, %s205
      %p209 = pneg %p203
      %p210 = scmp.eq.s32.totalorder %s19, 1
      %p211 = por %p209, %p210
      %p212 = scmp.ne.s32.totalorder %s204, %s207
      %p213 = scmp.eq.s32.totalorder %s19, 0
      %p214 = por %p212, %p213
      %p215 = scmp.ne.s32.totalorder %s204, %s207
      %p216 = scmp.eq.s32.totalorder %s24, 1
      %p217 = por %p215, %p216
      %p218 = scmp.ne.s32.totalorder %s207, %s208
      %p219 = scmp.eq.s32.totalorder %s24, 0
      %p220 = por %p218, %p219
      %p221 = scmp.ne.s32.totalorder %s207, %s208
      %p222 = scmp.eq.s32.totalorder %s25, 1
      %p223 = por %p221, %p222
      %p225 = scmp.ne.s32.totalorder %s208, %s224
      %p226 = scmp.eq.s32.totalorder %s25, 0
      %p227 = por %p225, %p226
      %s229 = sadd.s32 %s228, 1
      %p232 = scmp.eq.s32.totalorder %s19, 1
      %p233 = scmp.ne.s32.totalorder %s228, %s230
      %p234 = scmp.eq.s32.totalorder %s19, 0
      %p235 = por %p233, %p234
      %p236 = scmp.ne.s32.totalorder %s228, %s230
      %p237 = scmp.eq.s32.totalorder %s24, 1
      %p238 = por %p236, %p237
      %p239 = scmp.ne.s32.totalorder %s230, %s231
      %p240 = scmp.eq.s32.totalorder %s24, 0
      %p241 = por %p239, %p240
      %p242 = scmp.ne.s32.totalorder %s230, %s231
      %p243 = scmp.eq.s32.totalorder %s25, 1
      %p244 = por %p242, %p243
      %p246 = scmp.ne.s32.totalorder %s231, %s245
      %p247 = scmp.eq.s32.totalorder %s25, 0
      %p248 = por %p246, %p247
      %s250 = sadd.s32 %s249, 1
      %p253 = scmp.eq.s32.totalorder %s19, 1
      %p254 = scmp.ne.s32.totalorder %s249, %s251
      %p255 = scmp.eq.s32.totalorder %s19, 0
      %p256 = por %p254, %p255
      %p257 = scmp.ne.s32.totalorder %s249, %s251
      %p258 = scmp.eq.s32.totalorder %s24, 1
      %p259 = por %p257, %p258
      %p260 = scmp.ne.s32.totalorder %s251, %s252
      %p261 = scmp.eq.s32.totalorder %s24, 0
      %p262 = por %p260, %p261
      %p263 = scmp.ne.s32.totalorder %s251, %s252
      %p264 = scmp.eq.s32.totalorder %s25, 1
      %p265 = por %p263, %p264
      %p267 = scmp.ne.s32.totalorder %s252, %s266
      %p268 = scmp.eq.s32.totalorder %s25, 0
      %p269 = por %p267, %p268
      %s271 = sadd.s32 %s270, 1
      %p274 = scmp.eq.s32.totalorder %s19, 1
      %p275 = scmp.ne.s32.totalorder %s270, %s272
      %p276 = scmp.eq.s32.totalorder %s19, 0
      %p277 = por %p275, %p276
      %p278 = scmp.ne.s32.totalorder %s270, %s272
      %p279 = scmp.eq.s32.totalorder %s24, 1
      %p280 = por %p278, %p279
      %p281 = scmp.ne.s32.totalorder %s272, %s273
      %p282 = scmp.eq.s32.totalorder %s24, 0
      %p283 = por %p281, %p282
      %p284 = scmp.ne.s32.totalorder %s272, %s273
      %p285 = scmp.eq.s32.totalorder %s25, 1
      %p286 = por %p284, %p285
      %p288 = scmp.ne.s32.totalorder %s273, %s287
      %p289 = scmp.eq.s32.totalorder %s25, 0
      %p290 = por %p288, %p289
      %s291 = ssub.s32 %s26, %s45
      %s292 = ssub.s32 %s28, %s37
      %s293 = sor.u32 %s291, %s292
      %p294 = scmp.eq.s32.totalorder %s293, 0
      %s296 = sadd.s32 %s295, 1
      %s297 = scalar_select %p294, %s295, %s296
      %p300 = pneg %p294
      %p301 = scmp.eq.s32.totalorder %s19, 1
      %p302 = por %p300, %p301
      %p303 = scmp.ne.s32.totalorder %s295, %s298
      %p304 = scmp.eq.s32.totalorder %s19, 0
      %p305 = por %p303, %p304
      %p306 = scmp.ne.s32.totalorder %s295, %s298
      %p307 = scmp.eq.s32.totalorder %s24, 1
      %p308 = por %p306, %p307
      %p309 = scmp.ne.s32.totalorder %s298, %s299
      %p310 = scmp.eq.s32.totalorder %s24, 0
      %p311 = por %p309, %p310
      %p312 = scmp.ne.s32.totalorder %s298, %s299
      %p313 = scmp.eq.s32.totalorder %s25, 1
      %p314 = por %p312, %p313
      %p316 = scmp.ne.s32.totalorder %s299, %s315
      %p317 = scmp.eq.s32.totalorder %s25, 0
      %p318 = por %p316, %p317
      %s319 = ssub.s32 %s26, %s45
      %s320 = ssub.s32 %s27, %s41
      %s321 = sor.u32 %s319, %s320
      %p322 = scmp.eq.s32.totalorder %s321, 0
      %s324 = sadd.s32 %s323, 1
      %s325 = scalar_select %p322, %s323, %s324
      %p328 = pneg %p322
      %p329 = scmp.eq.s32.totalorder %s19, 1
      %p330 = por %p328, %p329
      %p331 = scmp.ne.s32.totalorder %s323, %s326
      %p332 = scmp.eq.s32.totalorder %s19, 0
      %p333 = por %p331, %p332
      %p334 = scmp.ne.s32.totalorder %s323, %s326
      %p335 = scmp.eq.s32.totalorder %s24, 1
      %p336 = por %p334, %p335
      %p337 = scmp.ne.s32.totalorder %s326, %s327
      %p338 = scmp.eq.s32.totalorder %s24, 0
      %p339 = por %p337, %p338
      %p340 = scmp.ne.s32.totalorder %s326, %s327
      %p341 = scmp.eq.s32.totalorder %s25, 1
      %p342 = por %p340, %p341
      %p344 = scmp.ne.s32.totalorder %s327, %s343
      %p345 = scmp.eq.s32.totalorder %s25, 0
      %p346 = por %p344, %p345
      %p347 = scmp.le.s32.totalorder 1, %s19
      %p348 = scmp.lt.s32.totalorder %s19, 3
      %p349 = pnand %p347, %p348
      %p350 = pneg %p349
      // Predicated region
      $region9: #{relpos_transformer.13} parent=5 // pred_check
        _
      $region10: #{relpos_transformer.13} parent=5 // pred_check_branch
        %352 = sbr.rel (%p349) target = $region12
      $region11: #{relpos_transformer.13} parent=5 // pred_region
        %s353 = ssub.s32 %s19, 1
        // Predicated region
        $region13: #{relpos_transformer.13} parent=11 // pred_check
          %p354 = pneg %p59
        $region14: #{relpos_transformer.13} parent=11 // pred_check_branch
          %356 = sbr.rel (%p354) target = $region16
        $region15: #{relpos_transformer.13} parent=11 // pred_region
          _
        $region16: #{relpos_transformer.13} parent=11 // pred_fallthru
          _
        // Predicated region
        $region17: #{relpos_transformer.13} parent=11 // pred_check
          %p357 = pneg %p80
        $region18: #{relpos_transformer.13} parent=11 // pred_check_branch
          %359 = sbr.rel (%p357) target = $region20
        $region19: #{relpos_transformer.13} parent=11 // pred_region
          %s361 = ssub.s32 16, 16
          %362 = vsyncadd [#allocation7], %s361
          %s364 = sshll.u32 %s1, 4
          %s365 = int_to_ptr.vmem [resolvable:$true] %s364
          %367 = dma.vmem_to_smem %s365, 16, [#allocation6], [#allocation7]
        $region20: #{relpos_transformer.13} parent=11 // pred_fallthru
          _
        // Predicated region
        $region21: #{relpos_transformer.13} parent=11 // pred_check
          %p368 = pneg %p241
        $region22: #{relpos_transformer.13} parent=11 // pred_check_branch
          %370 = sbr.rel (%p368) target = $region24
        $region23: #{relpos_transformer.13} parent=11 // pred_region
          _
        $region24: #{relpos_transformer.13} parent=11 // pred_fallthru
          _
        // Predicated region
        $region25: #{relpos_transformer.13} parent=11 // pred_check
          %p371 = pneg %p262
        $region26: #{relpos_transformer.13} parent=11 // pred_check_branch
          %373 = sbr.rel (%p371) target = $region28
        $region27: #{relpos_transformer.13} parent=11 // pred_region
          _
        $region28: #{relpos_transformer.13} parent=11 // pred_fallthru
          _
        // Predicated region
        $region29: #{relpos_transformer.13} parent=11 // pred_check
          %p374 = pneg %p283
        $region30: #{relpos_transformer.13} parent=11 // pred_check_branch
          %376 = sbr.rel (%p374) target = $region32
        $region31: #{relpos_transformer.13} parent=11 // pred_region
          _
        $region32: #{relpos_transformer.13} parent=11 // pred_fallthru
          _
      $region12: #{relpos_transformer.13} parent=5 // pred_fallthru
        _
      %p377 = scmp.lt.s32.totalorder %s19, 2
      // Predicated region
      $region33: #{relpos_transformer.13} parent=5 // pred_check
        %p378 = pneg %p377
      $region34: #{relpos_transformer.13} parent=5 // pred_check_branch
        %380 = sbr.rel (%p378) target = $region36
      $region35: #{relpos_transformer.13} parent=5 // pred_region
        // Predicated region
        $region37: #{relpos_transformer.13} parent=35 // pred_check
          %p381 = pneg %p102
        $region38: #{relpos_transformer.13} parent=35 // pred_check_branch
          %383 = sbr.rel (%p381) target = $region40
        $region39: #{relpos_transformer.13} parent=35 // pred_region
          %p384 = scmp.lt.s32.totalorder %s26, 1
          %s385 = scalar_select %p384, %s26, 1
          %p386 = scmp.lt.s32.totalorder %s27, 0
          %s387 = scalar_select %p386, %s27, 0
          %s388 = smul.addr %s385, 4
          %s389 = sadd.s32 %s387, %s388
          %s390 = smul.addr %s389, 8
          %s391 = scalar_lea.vmem %s2, %s390
        $region40: #{relpos_transformer.13} parent=35 // pred_fallthru
          _
        // Predicated region
        $region41: #{relpos_transformer.13} parent=35 // pred_check
          %p392 = pneg %p130
        $region42: #{relpos_transformer.13} parent=35 // pred_check_branch
          %394 = sbr.rel (%p392) target = $region44
        $region43: #{relpos_transformer.13} parent=35 // pred_region
          %p395 = scmp.lt.s32.totalorder %s26, 1
          %s396 = scalar_select %p395, %s26, 1
          %p397 = scmp.lt.s32.totalorder %s28, 0
          %s398 = scalar_select %p397, %s28, 0
          %s399 = smul.addr %s396, 4
          %s400 = sadd.s32 %s398, %s399
          %s401 = smul.addr %s400, 8
          %s402 = scalar_lea.vmem %s3, %s401
        $region44: #{relpos_transformer.13} parent=35 // pred_fallthru
          _
        // Predicated region
        $region45: #{relpos_transformer.13} parent=35 // pred_check
          %p403 = pneg %p158
        $region46: #{relpos_transformer.13} parent=35 // pred_check_branch
          %405 = sbr.rel (%p403) target = $region48
        $region47: #{relpos_transformer.13} parent=35 // pred_region
          %p406 = scmp.lt.s32.totalorder %s26, 1
          %s407 = scalar_select %p406, %s26, 1
          %p408 = scmp.lt.s32.totalorder %s28, 0
          %s409 = scalar_select %p408, %s28, 0
          %s410 = smul.addr %s407, 4
          %s411 = sadd.s32 %s409, %s410
          %s412 = smul.addr %s411, 8
          %s413 = scalar_lea.vmem %s4, %s412
        $region48: #{relpos_transformer.13} parent=35 // pred_fallthru
          _
        // Predicated region
        $region49: #{relpos_transformer.13} parent=35 // pred_check
          %p414 = pneg %p186
        $region50: #{relpos_transformer.13} parent=35 // pred_check_branch
          %416 = sbr.rel (%p414) target = $region52
        $region51: #{relpos_transformer.13} parent=35 // pred_region
          %p417 = scmp.lt.s32.totalorder %s26, 1
          %s418 = scalar_select %p417, %s26, 1
          %p419 = scmp.lt.s32.totalorder %s27, 0
          %s420 = scalar_select %p419, %s27, 0
          %s421 = sadd.s32 %s420, %s418
          %s422 = smul.addr %s421, 8
          %s423 = scalar_lea.vmem %s5, %s422
        $region52: #{relpos_transformer.13} parent=35 // pred_fallthru
          _
        // Predicated region
        $region53: #{relpos_transformer.13} parent=35 // pred_check
          %p424 = pneg %p214
        $region54: #{relpos_transformer.13} parent=35 // pred_check_branch
          %426 = sbr.rel (%p424) target = $region56
        $region55: #{relpos_transformer.13} parent=35 // pred_region
          %p427 = scmp.lt.s32.totalorder %s26, 1
          %s428 = scalar_select %p427, %s26, 1
          %p429 = scmp.lt.s32.totalorder %s28, 0
          %s430 = scalar_select %p429, %s28, 0
          %s431 = sadd.s32 %s430, %s428
          %s432 = smul.addr %s431, 4
          %s433 = scalar_lea.vmem %s6, %s432
        $region56: #{relpos_transformer.13} parent=35 // pred_fallthru
          _
        // Predicated region
        $region57: #{relpos_transformer.13} parent=35 // pred_check
          %p434 = pneg %p305
        $region58: #{relpos_transformer.13} parent=35 // pred_check_branch
          %436 = sbr.rel (%p434) target = $region60
        $region59: #{relpos_transformer.13} parent=35 // pred_region
          %p437 = scmp.lt.s32.totalorder %s26, 1
          %s438 = scalar_select %p437, %s26, 1
          %p439 = scmp.lt.s32.totalorder %s28, 0
          %s440 = scalar_select %p439, %s28, 0
          %s441 = sadd.s32 %s440, %s438
          %s442 = scalar_lea.vmem %s10, %s441
        $region60: #{relpos_transformer.13} parent=35 // pred_fallthru
          _
      $region36: #{relpos_transformer.13} parent=5 // pred_fallthru
        _
      %p443 = scmp.le.s32.totalorder 1, %s19
      %p444 = scmp.lt.s32.totalorder %s19, 3
      %p445 = pnand %p443, %p444
      %p446 = pneg %p445
      // Predicated region
      $region61: #{relpos_transformer.13} parent=5 // pred_check
        _
      $region62: #{relpos_transformer.13} parent=5 // pred_check_branch
        %448 = sbr.rel (%p445) target = $region64
      $region63: #{relpos_transformer.13} parent=5 // pred_region
        %s449 = ssub.s32 %s19, 1
        // Predicated region
        $region65: #{relpos_transformer.13} parent=63 // pred_check
          %p450 = pneg %p80
        $region66: #{relpos_transformer.13} parent=63 // pred_check_branch
          %452 = sbr.rel (%p450) target = $region68
        $region67: #{relpos_transformer.13} parent=63 // pred_region
          %453 = dma.done [#allocation7], 16
        $region68: #{relpos_transformer.13} parent=63 // pred_fallthru
          _
        %454 = sfence
        %p455 = pneg %p59
        %p456 = pneg %p56
        %p457 = pneg %p80
        %p458 = pneg %p77
        %p459 = scmp.lt.s32.totalorder %s29, 1
        %s460 = scalar_select %p459, %s29, 1
        %p461 = scmp.lt.s32.totalorder %s30, 0
        %s462 = scalar_select %p461, %s30, 0
        %s463 = smul.addr %s460, 4
        %s464 = sadd.s32 %s462, %s463
        %s465 = smul.addr %s464, 8
        %s466 = scalar_lea.vmem %s2, %s465
        %p467 = pneg %p108
        %p468 = pneg %p105
        %p469 = scmp.lt.s32.totalorder %s29, 1
        %s470 = scalar_select %p469, %s29, 1
        %p471 = scmp.lt.s32.totalorder %s31, 0
        %s472 = scalar_select %p471, %s31, 0
        %s473 = smul.addr %s470, 4
        %s474 = sadd.s32 %s472, %s473
        %s475 = smul.addr %s474, 8
        %s476 = scalar_lea.vmem %s3, %s475
        %p477 = pneg %p136
        %p478 = pneg %p133
        %p479 = scmp.lt.s32.totalorder %s29, 1
        %s480 = scalar_select %p479, %s29, 1
        %p481 = scmp.lt.s32.totalorder %s31, 0
        %s482 = scalar_select %p481, %s31, 0
        %s483 = smul.addr %s480, 4
        %s484 = sadd.s32 %s482, %s483
        %s485 = smul.addr %s484, 8
        %s486 = scalar_lea.vmem %s4, %s485
        %p487 = pneg %p164
        %p488 = pneg %p161
        %p489 = scmp.lt.s32.totalorder %s29, 1
        %s490 = scalar_select %p489, %s29, 1
        %p491 = scmp.lt.s32.totalorder %s30, 0
        %s492 = scalar_select %p491, %s30, 0
        %s493 = sadd.s32 %s492, %s490
        %s494 = smul.addr %s493, 8
        %s495 = scalar_lea.vmem %s5, %s494
        %p496 = pneg %p192
        %p497 = pneg %p189
        %p498 = scmp.lt.s32.totalorder %s29, 1
        %s499 = scalar_select %p498, %s29, 1
        %p500 = scmp.lt.s32.totalorder %s31, 0
        %s501 = scalar_select %p500, %s31, 0
        %s502 = sadd.s32 %s501, %s499
        %s503 = smul.addr %s502, 4
        %s504 = scalar_lea.vmem %s6, %s503
        %p505 = pneg %p220
        %p506 = pneg %p217
        %p507 = pneg %p241
        %p508 = pneg %p238
        %p509 = pneg %p262
        %p510 = pneg %p259
        %p511 = pneg %p283
        %p512 = pneg %p280
        %p513 = scmp.lt.s32.totalorder %s29, 1
        %s514 = scalar_select %p513, %s29, 1
        %p515 = scmp.lt.s32.totalorder %s31, 0
        %s516 = scalar_select %p515, %s31, 0
        %s517 = sadd.s32 %s516, %s514
        %s518 = scalar_lea.vmem %s10, %s517
        %p519 = pneg %p311
        %p520 = pneg %p308
        %p521 = pneg %p339
        %p522 = pneg %p336
        %p523 = scmp.lt.s32.totalorder %s29, 1
        %s524 = scalar_select %p523, %s29, 1
        %p525 = scmp.lt.s32.totalorder %s30, 0
        %s526 = scalar_select %p525, %s30, 0
        %s527 = smul.addr %s524, 4
        %s528 = sadd.s32 %s526, %s527
        %s529 = smul.addr %s528, 8
        %s530 = scalar_lea.vmem %s11, %s529
        %p531 = scmp.lt.s32.totalorder %s29, 1
        %s532 = scalar_select %p531, %s29, 1
        %p533 = scmp.lt.s32.totalorder %s30, 0
        %s534 = scalar_select %p533, %s30, 0
        %s535 = smul.addr %s532, 4
        %s536 = sadd.s32 %s534, %s535
        %s537 = smul.addr %s536, 8
        %s538 = scalar_lea.vmem %s2, %s537
        %p539 = scmp.lt.s32.totalorder %s29, 1
        %s540 = scalar_select %p539, %s29, 1
        %p541 = scmp.lt.s32.totalorder %s31, 0
        %s542 = scalar_select %p541, %s31, 0
        %s543 = smul.addr %s540, 4
        %s544 = sadd.s32 %s542, %s543
        %s545 = smul.addr %s544, 8
        %s546 = scalar_lea.vmem %s3, %s545
        %p547 = scmp.lt.s32.totalorder %s29, 1
        %s548 = scalar_select %p547, %s29, 1
        %p549 = scmp.lt.s32.totalorder %s31, 0
        %s550 = scalar_select %p549, %s31, 0
        %s551 = smul.addr %s548, 4
        %s552 = sadd.s32 %s550, %s551
        %s553 = smul.addr %s552, 8
        %s554 = scalar_lea.vmem %s4, %s553
        %p555 = scmp.lt.s32.totalorder %s29, 1
        %s556 = scalar_select %p555, %s29, 1
        %p557 = scmp.lt.s32.totalorder %s30, 0
        %s558 = scalar_select %p557, %s30, 0
        %s559 = sadd.s32 %s558, %s556
        %s560 = smul.addr %s559, 8
        %s561 = scalar_lea.vmem %s5, %s560
        %p562 = scmp.lt.s32.totalorder %s29, 1
        %s563 = scalar_select %p562, %s29, 1
        %p564 = scmp.lt.s32.totalorder %s31, 0
        %s565 = scalar_select %p564, %s31, 0
        %s566 = sadd.s32 %s565, %s563
        %s567 = smul.addr %s566, 4
        %s568 = scalar_lea.vmem %s6, %s567
        %p569 = scmp.lt.s32.totalorder %s29, 1
        %s570 = scalar_select %p569, %s29, 1
        %p571 = scmp.lt.s32.totalorder %s31, 0
        %s572 = scalar_select %p571, %s31, 0
        %s573 = sadd.s32 %s572, %s570
        %s574 = scalar_lea.vmem %s10, %s573
        %p575 = scmp.lt.s32.totalorder %s29, 1
        %s576 = scalar_select %p575, %s29, 1
        %p577 = scmp.lt.s32.totalorder %s30, 0
        %s578 = scalar_select %p577, %s30, 0
        %s579 = smul.addr %s576, 4
        %s580 = sadd.s32 %s578, %s579
        %s581 = smul.addr %s580, 8
        %s582 = scalar_lea.vmem %s11, %s581
        %p583 = scmp.eq.s32.totalorder %s31, 0
        // Predicated region
        $region69: #{relpos_transformer.13} parent=63 // pred_check
          %p584 = pneg %p583
        $region70: #{relpos_transformer.13} parent=63 // pred_check_branch
          %586 = sbr.rel (%p584) target = $region72
        $region71: #{relpos_transformer.13} parent=63 // pred_region
          %vm587 = vcmask 7168
          %588 = vst.msk [vmem:[#allocation2] sm:$0xff] %vm587, -inf
          %589 = vst.msk [vmem:[#allocation2 + $0x8] sm:$0xff] %vm587, -inf
          %590 = vst.msk [vmem:[#allocation2 + $0x10] sm:$0xff] %vm587, -inf
          %591 = vst.msk [vmem:[#allocation2 + $0x18] sm:$0xff] %vm587, -inf
          %592 = vst.msk [vmem:[#allocation3] sm:$0xff] %vm587, 0.0
          %593 = vst.msk [vmem:[#allocation3 + $0x8] sm:$0xff] %vm587, 0.0
          %594 = vst.msk [vmem:[#allocation3 + $0x10] sm:$0xff] %vm587, 0.0
          %595 = vst.msk [vmem:[#allocation3 + $0x18] sm:$0xff] %vm587, 0.0
          %vm596 = vcmask 64512
          %597 = vst.msk [vmem:[#allocation4] sm:$0xff] %vm596, 0.0
          %598 = vst.msk [vmem:[#allocation4 + $0x8] sm:$0xff] %vm596, 0.0
          %599 = vst.msk [vmem:[#allocation4 + $0x10] sm:$0xff] %vm596, 0.0
          %600 = vst.msk [vmem:[#allocation4 + $0x18] sm:$0xff] %vm596, 0.0
        $region72: #{relpos_transformer.13} parent=63 // pred_fallthru
          _
        %v601 = vld [vmem:[%s538] sm:$0xff]
        %v602 = vld [vmem:[%s538 + $0x8] sm:$0xff]
        %v603 = vld [vmem:[%s538 + $0x10] sm:$0xff]
        %v604 = vld [vmem:[%s538 + $0x18] sm:$0xff]
        %v605 = vld [vmem:[%s546] sm:$0xff]
        %v606 = vld [vmem:[%s546 + $0x8] sm:$0xff]
        %v607 = vld [vmem:[%s546 + $0x10] sm:$0xff]
        %v608 = vld [vmem:[%s546 + $0x18] sm:$0xff]
        %v609 = vld [vmem:[%s554] sm:$0xff]
        %v610 = vld [vmem:[%s554 + $0x8] sm:$0xff]
        %v611 = vld [vmem:[%s554 + $0x10] sm:$0xff]
        %v612 = vld [vmem:[%s554 + $0x18] sm:$0xff]
        %vm613 = vcmask 64512
        %v615 = vsel %vm613, %v601, 0
        %v618 = vsel %vm613, %v605, 0
        %620 = vmatprep.subr.mxu0 0.0
        %621 = vmatpush1.xpose.msra.mxu0 %v618
        %622 = vmatprep.subr.mxu0 0.0
        %623 = vmatpush1.xpose.msra.mxu0 0.0
        %624 = vmatprep.subr.mxu0 0.0
        %625 = vmatpush1.xpose.msra.mxu0 0.0
        %626 = vmatprep.subr.mxu0 0.0
        %627 = vmatpush1.xpose.msra.mxu0 0.0
        %628 = vmatprep.subr.mxu0 0.0
        %629 = vmatpush1.xpose.msra.mxu0 0.0
        %630 = vmatprep.subr.mxu0 0.0
        %631 = vmatpush1.xpose.msra.mxu0 0.0
        %632 = vmatprep.subr.mxu0 0.0
        %633 = vmatpush1.xpose.msra.mxu0 0.0
        %634 = vmatprep.subr.mxu0 0.0
        %635 = vmatpush1.xpose.msra.mxu0 0.0
        %636 = vmatprep.subr.mxu0 0.0
        %637 = vmatpush1.xpose.msra.mxu0 0.0
        %638 = vmatprep.subr.mxu0 0.0
        %639 = vmatpush1.xpose.msra.mxu0 0.0
        %640 = vmatprep.subr.mxu0 0.0
        %641 = vmatpush1.xpose.msra.mxu0 0.0
        %642 = vmatprep.subr.mxu0 0.0
        %643 = vmatpush1.xpose.msra.mxu0 0.0
        %644 = vmatprep.subr.mxu0 0.0
        %645 = vmatpush1.xpose.msra.mxu0 0.0
        %646 = vmatprep.subr.mxu0 0.0
        %647 = vmatpush1.xpose.msra.mxu0 0.0
        %648 = vmatprep.subr.mxu0 0.0
        %649 = vmatpush1.xpose.msra.mxu0 0.0
        %650 = vmatprep.subr.mxu0 0.0
        %651 = vmatpush1.xpose.msra.mxu0 0.0
        %652 = vmatprep.subr.mxu0 0.0
        %653 = vmatpush1.xpose.msra.mxu0 0.0
        %654 = vmatprep.subr.mxu0 0.0
        %655 = vmatpush1.xpose.msra.mxu0 0.0
        %656 = vmatprep.subr.mxu0 0.0
        %657 = vmatpush1.xpose.msra.mxu0 0.0
        %658 = vmatprep.subr.mxu0 0.0
        %659 = vmatpush1.xpose.msra.mxu0 0.0
        %660 = vmatprep.subr.mxu0 0.0
        %661 = vmatpush1.xpose.msra.mxu0 0.0
        %662 = vmatprep.subr.mxu0 0.0
        %663 = vmatpush1.xpose.msra.mxu0 0.0
        %664 = vmatprep.subr.mxu0 0.0
        %665 = vmatpush1.xpose.msra.mxu0 0.0
        %666 = vmatprep.subr.mxu0 0.0
        %667 = vmatpush1.xpose.msra.mxu0 0.0
        %668 = vmatprep.subr.mxu0 0.0
        %669 = vmatpush1.xpose.msra.mxu0 0.0
        %670 = vmatprep.subr.mxu0 0.0
        %671 = vmatpush1.xpose.msra.mxu0 0.0
        %672 = vmatprep.subr.mxu0 0.0
        %673 = vmatpush1.xpose.msra.mxu0 0.0
        %674 = vmatprep.subr.mxu0 0.0
        %675 = vmatpush1.xpose.msra.mxu0 0.0
        %676 = vmatprep.subr.mxu0 0.0
        %677 = vmatpush1.xpose.msra.mxu0 0.0
        %678 = vmatprep.subr.mxu0 0.0
        %679 = vmatpush1.xpose.msra.mxu0 0.0
        %680 = vmatprep.subr.mxu0 0.0
        %681 = vmatpush1.xpose.msra.mxu0 0.0
        %682 = vmatprep.subr.mxu0 0.0
        %683 = vmatpush1.xpose.msra.mxu0 0.0
        %684 = vmatprep.mubr.f32.mxu0 0.0
        %685 = vmatmul.mubr.f32.gmra.mrb[0].mxu0 %v615
        %v686 = vpop.f32.mrb[0].mxu0
        %v687 = vadd.f32 0.0, %v686
        %v688 = vpop.f32.mrb[0].mxu0
        %689 = vdwg.mxu0
        %v691 = vsel %vm613, %v602, 0
        %v694 = vsel %vm613, %v606, 0
        %696 = vmatprep.subr.mxu0 0.0
        %697 = vmatpush1.xpose.msra.mxu0 %v694
        %698 = vmatprep.subr.mxu0 0.0
        %699 = vmatpush1.xpose.msra.mxu0 0.0
        %700 = vmatprep.subr.mxu0 0.0
        %701 = vmatpush1.xpose.msra.mxu0 0.0
        %702 = vmatprep.subr.mxu0 0.0
        %703 = vmatpush1.xpose.msra.mxu0 0.0
        %704 = vmatprep.subr.mxu0 0.0
        %705 = vmatpush1.xpose.msra.mxu0 0.0
        %706 = vmatprep.subr.mxu0 0.0
        %707 = vmatpush1.xpose.msra.mxu0 0.0
        %708 = vmatprep.subr.mxu0 0.0
        %709 = vmatpush1.xpose.msra.mxu0 0.0
        %710 = vmatprep.subr.mxu0 0.0
        %711 = vmatpush1.xpose.msra.mxu0 0.0
        %712 = vmatprep.subr.mxu0 0.0
        %713 = vmatpush1.xpose.msra.mxu0 0.0
        %714 = vmatprep.subr.mxu0 0.0
        %715 = vmatpush1.xpose.msra.mxu0 0.0
        %716 = vmatprep.subr.mxu0 0.0
        %717 = vmatpush1.xpose.msra.mxu0 0.0
        %718 = vmatprep.subr.mxu0 0.0
        %719 = vmatpush1.xpose.msra.mxu0 0.0
        %720 = vmatprep.subr.mxu0 0.0
        %721 = vmatpush1.xpose.msra.mxu0 0.0
        %722 = vmatprep.subr.mxu0 0.0
        %723 = vmatpush1.xpose.msra.mxu0 0.0
        %724 = vmatprep.subr.mxu0 0.0
        %725 = vmatpush1.xpose.msra.mxu0 0.0
        %726 = vmatprep.subr.mxu0 0.0
        %727 = vmatpush1.xpose.msra.mxu0 0.0
        %728 = vmatprep.subr.mxu0 0.0
        %729 = vmatpush1.xpose.msra.mxu0 0.0
        %730 = vmatprep.subr.mxu0 0.0
        %731 = vmatpush1.xpose.msra.mxu0 0.0
        %732 = vmatprep.subr.mxu0 0.0
        %733 = vmatpush1.xpose.msra.mxu0 0.0
        %734 = vmatprep.subr.mxu0 0.0
        %735 = vmatpush1.xpose.msra.mxu0 0.0
        %736 = vmatprep.subr.mxu0 0.0
        %737 = vmatpush1.xpose.msra.mxu0 0.0
        %738 = vmatprep.subr.mxu0 0.0
        %739 = vmatpush1.xpose.msra.mxu0 0.0
        %740 = vmatprep.subr.mxu0 0.0
        %741 = vmatpush1.xpose.msra.mxu0 0.0
        %742 = vmatprep.subr.mxu0 0.0
        %743 = vmatpush1.xpose.msra.mxu0 0.0
        %744 = vmatprep.subr.mxu0 0.0
        %745 = vmatpush1.xpose.msra.mxu0 0.0
        %746 = vmatprep.subr.mxu0 0.0
        %747 = vmatpush1.xpose.msra.mxu0 0.0
        %748 = vmatprep.subr.mxu0 0.0
        %749 = vmatpush1.xpose.msra.mxu0 0.0
        %750 = vmatprep.subr.mxu0 0.0
        %751 = vmatpush1.xpose.msra.mxu0 0.0
        %752 = vmatprep.subr.mxu0 0.0
        %753 = vmatpush1.xpose.msra.mxu0 0.0
        %754 = vmatprep.subr.mxu0 0.0
        %755 = vmatpush1.xpose.msra.mxu0 0.0
        %756 = vmatprep.subr.mxu0 0.0
        %757 = vmatpush1.xpose.msra.mxu0 0.0
        %758 = vmatprep.subr.mxu0 0.0
        %759 = vmatpush1.xpose.msra.mxu0 0.0
        %760 = vmatprep.mubr.f32.mxu0 0.0
        %761 = vmatmul.mubr.f32.gmra.mrb[0].mxu0 %v691
        %v762 = vpop.f32.mrb[0].mxu0
        %v763 = vadd.f32 0.0, %v762
        %v764 = vpop.f32.mrb[0].mxu0
        %765 = vdwg.mxu0
        %v767 = vsel %vm613, %v603, 0
        %v770 = vsel %vm613, %v607, 0
        %772 = vmatprep.subr.mxu0 0.0
        %773 = vmatpush1.xpose.msra.mxu0 %v770
        %774 = vmatprep.subr.mxu0 0.0
        %775 = vmatpush1.xpose.msra.mxu0 0.0
        %776 = vmatprep.subr.mxu0 0.0
        %777 = vmatpush1.xpose.msra.mxu0 0.0
        %778 = vmatprep.subr.mxu0 0.0
        %779 = vmatpush1.xpose.msra.mxu0 0.0
        %780 = vmatprep.subr.mxu0 0.0
        %781 = vmatpush1.xpose.msra.mxu0 0.0
        %782 = vmatprep.subr.mxu0 0.0
        %783 = vmatpush1.xpose.msra.mxu0 0.0
        %784 = vmatprep.subr.mxu0 0.0
        %785 = vmatpush1.xpose.msra.mxu0 0.0
        %786 = vmatprep.subr.mxu0 0.0
        %787 = vmatpush1.xpose.msra.mxu0 0.0
        %788 = vmatprep.subr.mxu0 0.0
        %789 = vmatpush1.xpose.msra.mxu0 0.0
        %790 = vmatprep.subr.mxu0 0.0
        %791 = vmatpush1.xpose.msra.mxu0 0.0
        %792 = vmatprep.subr.mxu0 0.0
        %793 = vmatpush1.xpose.msra.mxu0 0.0
        %794 = vmatprep.subr.mxu0 0.0
        %795 = vmatpush1.xpose.msra.mxu0 0.0
        %796 = vmatprep.subr.mxu0 0.0
        %797 = vmatpush1.xpose.msra.mxu0 0.0
        %798 = vmatprep.subr.mxu0 0.0
        %799 = vmatpush1.xpose.msra.mxu0 0.0
        %800 = vmatprep.subr.mxu0 0.0
        %801 = vmatpush1.xpose.msra.mxu0 0.0
        %802 = vmatprep.subr.mxu0 0.0
        %803 = vmatpush1.xpose.msra.mxu0 0.0
        %804 = vmatprep.subr.mxu0 0.0
        %805 = vmatpush1.xpose.msra.mxu0 0.0
        %806 = vmatprep.subr.mxu0 0.0
        %807 = vmatpush1.xpose.msra.mxu0 0.0
        %808 = vmatprep.subr.mxu0 0.0
        %809 = vmatpush1.xpose.msra.mxu0 0.0
        %810 = vmatprep.subr.mxu0 0.0
        %811 = vmatpush1.xpose.msra.mxu0 0.0
        %812 = vmatprep.subr.mxu0 0.0
        %813 = vmatpush1.xpose.msra.mxu0 0.0
        %814 = vmatprep.subr.mxu0 0.0
        %815 = vmatpush1.xpose.msra.mxu0 0.0
        %816 = vmatprep.subr.mxu0 0.0
        %817 = vmatpush1.xpose.msra.mxu0 0.0
        %818 = vmatprep.subr.mxu0 0.0
        %819 = vmatpush1.xpose.msra.mxu0 0.0
        %820 = vmatprep.subr.mxu0 0.0
        %821 = vmatpush1.xpose.msra.mxu0 0.0
        %822 = vmatprep.subr.mxu0 0.0
        %823 = vmatpush1.xpose.msra.mxu0 0.0
        %824 = vmatprep.subr.mxu0 0.0
        %825 = vmatpush1.xpose.msra.mxu0 0.0
        %826 = vmatprep.subr.mxu0 0.0
        %827 = vmatpush1.xpose.msra.mxu0 0.0
        %828 = vmatprep.subr.mxu0 0.0
        %829 = vmatpush1.xpose.msra.mxu0 0.0
        %830 = vmatprep.subr.mxu0 0.0
        %831 = vmatpush1.xpose.msra.mxu0 0.0
        %832 = vmatprep.subr.mxu0 0.0
        %833 = vmatpush1.xpose.msra.mxu0 0.0
        %834 = vmatprep.subr.mxu0 0.0
        %835 = vmatpush1.xpose.msra.mxu0 0.0
        %836 = vmatprep.mubr.f32.mxu0 0.0
        %837 = vmatmul.mubr.f32.gmra.mrb[0].mxu0 %v767
        %v838 = vpop.f32.mrb[0].mxu0
        %v839 = vadd.f32 0.0, %v838
        %v840 = vpop.f32.mrb[0].mxu0
        %841 = vdwg.mxu0
        %v843 = vsel %vm613, %v604, 0
        %v846 = vsel %vm613, %v608, 0
        %848 = vmatprep.subr.mxu0 0.0
        %849 = vmatpush1.xpose.msra.mxu0 %v846
        %850 = vmatprep.subr.mxu0 0.0
        %851 = vmatpush1.xpose.msra.mxu0 0.0
        %852 = vmatprep.subr.mxu0 0.0
        %853 = vmatpush1.xpose.msra.mxu0 0.0
        %854 = vmatprep.subr.mxu0 0.0
        %855 = vmatpush1.xpose.msra.mxu0 0.0
        %856 = vmatprep.subr.mxu0 0.0
        %857 = vmatpush1.xpose.msra.mxu0 0.0
        %858 = vmatprep.subr.mxu0 0.0
        %859 = vmatpush1.xpose.msra.mxu0 0.0
        %860 = vmatprep.subr.mxu0 0.0
        %861 = vmatpush1.xpose.msra.mxu0 0.0
        %862 = vmatprep.subr.mxu0 0.0
        %863 = vmatpush1.xpose.msra.mxu0 0.0
        %864 = vmatprep.subr.mxu0 0.0
        %865 = vmatpush1.xpose.msra.mxu0 0.0
        %866 = vmatprep.subr.mxu0 0.0
        %867 = vmatpush1.xpose.msra.mxu0 0.0
        %868 = vmatprep.subr.mxu0 0.0
        %869 = vmatpush1.xpose.msra.mxu0 0.0
        %870 = vmatprep.subr.mxu0 0.0
        %871 = vmatpush1.xpose.msra.mxu0 0.0
        %872 = vmatprep.subr.mxu0 0.0
        %873 = vmatpush1.xpose.msra.mxu0 0.0
        %874 = vmatprep.subr.mxu0 0.0
        %875 = vmatpush1.xpose.msra.mxu0 0.0
        %876 = vmatprep.subr.mxu0 0.0
        %877 = vmatpush1.xpose.msra.mxu0 0.0
        %878 = vmatprep.subr.mxu0 0.0
        %879 = vmatpush1.xpose.msra.mxu0 0.0
        %880 = vmatprep.subr.mxu0 0.0
        %881 = vmatpush1.xpose.msra.mxu0 0.0
        %882 = vmatprep.subr.mxu0 0.0
        %883 = vmatpush1.xpose.msra.mxu0 0.0
        %884 = vmatprep.subr.mxu0 0.0
        %885 = vmatpush1.xpose.msra.mxu0 0.0
        %886 = vmatprep.subr.mxu0 0.0
        %887 = vmatpush1.xpose.msra.mxu0 0.0
        %888 = vmatprep.subr.mxu0 0.0
        %889 = vmatpush1.xpose.msra.mxu0 0.0
        %890 = vmatprep.subr.mxu0 0.0
        %891 = vmatpush1.xpose.msra.mxu0 0.0
        %892 = vmatprep.subr.mxu0 0.0
        %893 = vmatpush1.xpose.msra.mxu0 0.0
        %894 = vmatprep.subr.mxu0 0.0
        %895 = vmatpush1.xpose.msra.mxu0 0.0
        %896 = vmatprep.subr.mxu0 0.0
        %897 = vmatpush1.xpose.msra.mxu0 0.0
        %898 = vmatprep.subr.mxu0 0.0
        %899 = vmatpush1.xpose.msra.mxu0 0.0
        %900 = vmatprep.subr.mxu0 0.0
        %901 = vmatpush1.xpose.msra.mxu0 0.0
        %902 = vmatprep.subr.mxu0 0.0
        %903 = vmatpush1.xpose.msra.mxu0 0.0
        %904 = vmatprep.subr.mxu0 0.0
        %905 = vmatpush1.xpose.msra.mxu0 0.0
        %906 = vmatprep.subr.mxu0 0.0
        %907 = vmatpush1.xpose.msra.mxu0 0.0
        %908 = vmatprep.subr.mxu0 0.0
        %909 = vmatpush1.xpose.msra.mxu0 0.0
        %910 = vmatprep.subr.mxu0 0.0
        %911 = vmatpush1.xpose.msra.mxu0 0.0
        %912 = vmatprep.mubr.f32.mxu0 0.0
        %913 = vmatmul.mubr.f32.gmra.mrb[0].mxu0 %v843
        %v914 = vpop.f32.mrb[0].mxu0
        %v915 = vadd.f32 0.0, %v914
        %v916 = vpop.f32.mrb[0].mxu0
        %917 = vdwg.mxu0
        %v918 = vmul.f32 %v687, 0.35355338
        %v919 = vmul.f32 %v763, 0.35355338
        %v920 = vmul.f32 %v839, 0.35355338
        %v921 = vmul.f32 %v915, 0.35355338
        %v922 = vld [vmem:[%s561] sm:$0xff]
        %v923 = vld [vmem:[%s568] sm:$0x7]
        %v924 = vld [vmem:[%s7] sm:$0xff]
        %v925 = vld [vmem:[%s7 + $0x8] sm:$0xff]
        %v926 = vld [vmem:[%s8] sm:$0xff]
        %v927 = vld [vmem:[%s8 + $0x8] sm:$0xff]
        %v928 = vld [vmem:[%s9] sm:$0xff]
        %v929 = vld [vmem:[%s9 + $0x8] sm:$0xff]
        %931 = vset.pattern.permute.xlu0 0
        %932 = vperm.xlu0 %931, %v922
        %v933 = vpop.permute.xlu0 %932
        %v935 = vlaneseq
        %v936 = vshrl.u32 %v935, 7
        %v937 = vsub.s32 0, %v936
        %v938 = vrot.slane %v923, %v937
        %v939 = vsub.f32 %v933, %v938
        %940 = vset.pattern.permute.xlu0 1
        %941 = vperm.xlu0 %940, %v922
        %v942 = vpop.permute.xlu0 %941
        %v944 = vlaneseq
        %v945 = vshrl.u32 %v944, 7
        %v946 = vsub.s32 1, %v945
        %v947 = vrot.slane %v923, %v946
        %v948 = vsub.f32 %v942, %v947
        %949 = vset.pattern.permute.xlu0 2
        %950 = vperm.xlu0 %949, %v922
        %v951 = vpop.permute.xlu0 %950
        %v953 = vlaneseq
        %v954 = vshrl.u32 %v953, 7
        %v955 = vsub.s32 2, %v954
        %v956 = vrot.slane %v923, %v955
        %v957 = vsub.f32 %v951, %v956
        %v958 = vmul.f32 %v939, %v939
        %v959 = vmul.f32 %v948, %v948
        %v960 = vadd.f32 %v958, %v959
        %v961 = vmul.f32 %v957, %v957
        %v962 = vadd.f32 %v960, %v961
        %v963 = vrsqrt.pop %v962
        %v964 = vmul.f32 %v962, %v963
        %vm965 = vcmp.eq.f32.partialorder %v962, inf
        %v966 = vsel %vm965, %v962, %v964
        %vm967 = vcmp.eq.f32.partialorder %v962, 0.0
        %v968 = vand.u32 %v962, 2147483648
        %v969 = vsel %vm967, %v968, %v966
        %v971 = vcombine.high %v939, %v939
        %v973 = vunpack.c.l.s4 1966171168
        %v974 = vunpack.c.0.s8 %v973
        %v975 = vlaneseq
        %v976 = vshrl.u32 %v975, 7
        %v977 = vsub.s32 %v974, %v976
        %v978 = vrot.slane %v939, %v977
        %v980 = vunpack.c.l.s4 1966171168
        %v981 = vunpack.c.0.s8 %v980
        %v982 = vlaneseq
        %v983 = vshrl.u32 %v982, 7
        %v984 = vsub.s32 %v981, %v983
        %v985 = vrot.slane %v971, %v984
        %v986 = vcombine.high %v978, %v978
        %v987 = vcombine.high %v985, %v985
        %v989 = vunpack.c.l.s4 1966171168
        %v990 = vunpack.c.0.s8 %v989
        %v991 = vlaneseq
        %v992 = vshrl.u32 %v991, 7
        %v993 = vsub.s32 %v990, %v992
        %v994 = vrot.slane %v978, %v993
        %v996 = vunpack.c.l.s4 1966171168
        %v997 = vunpack.c.0.s8 %v996
        %v998 = vlaneseq
        %v999 = vshrl.u32 %v998, 7
        %v1000 = vsub.s32 %v997, %v999
        %v1001 = vrot.slane %v985, %v1000
        %v1003 = vunpack.c.l.s4 1966171168
        %v1004 = vunpack.c.0.s8 %v1003
        %v1005 = vlaneseq
        %v1006 = vshrl.u32 %v1005, 7
        %v1007 = vsub.s32 %v1004, %v1006
        %v1008 = vrot.slane %v986, %v1007
        %v1010 = vunpack.c.l.s4 1966171168
        %v1011 = vunpack.c.0.s8 %v1010
        %v1012 = vlaneseq
        %v1013 = vshrl.u32 %v1012, 7
        %v1014 = vsub.s32 %v1011, %v1013
        %v1015 = vrot.slane %v987, %v1014
        %v1016 = vcombine.high %v994, %v994
        %v1017 = vcombine.high %v1001, %v1001
        %v1018 = vcombine.high %v1008, %v1008
        %v1019 = vcombine.high %v1015, %v1015
        %v1020 = vlaneseq
        %v1021 = vshrl.u32 %v1020, 7
        %v1022 = vsub.s32 0, %v1021
        %v1023 = vrot.slane %v994, %v1022
        %v1024 = vlaneseq
        %v1025 = vshrl.u32 %v1024, 7
        %v1026 = vsub.s32 0, %v1025
        %v1027 = vrot.slane %v1008, %v1026
        %v1028 = vlaneseq
        %v1029 = vshrl.u32 %v1028, 7
        %v1030 = vsub.s32 0, %v1029
        %v1031 = vrot.slane %v1016, %v1030
        %v1032 = vlaneseq
        %v1033 = vshrl.u32 %v1032, 7
        %v1034 = vsub.s32 0, %v1033
        %v1035 = vrot.slane %v1018, %v1034
        %v1036 = vlaneseq
        %v1037 = vshrl.u32 %v1036, 7
        %v1038 = vsub.s32 0, %v1037
        %v1039 = vrot.slane %v1001, %v1038
        %v1040 = vlaneseq
        %v1041 = vshrl.u32 %v1040, 7
        %v1042 = vsub.s32 0, %v1041
        %v1043 = vrot.slane %v1015, %v1042
        %v1044 = vlaneseq
        %v1045 = vshrl.u32 %v1044, 7
        %v1046 = vsub.s32 0, %v1045
        %v1047 = vrot.slane %v1017, %v1046
        %v1048 = vlaneseq
        %v1049 = vshrl.u32 %v1048, 7
        %v1050 = vsub.s32 0, %v1049
        %v1051 = vrot.slane %v1019, %v1050
        %1061 = vset.pattern.permute.xlu0 0
        %1062 = vperm.xlu0 %1061, %v924
        %v1063 = vpop.permute.xlu0 %1062
        %1066 = vset.pattern.permute.xlu0 0
        %1067 = vperm.xlu0 %1066, %v925
        %v1068 = vpop.permute.xlu0 %1067
        %v1070 = vmul.f32 %v1023, %v1063
        %v1071 = vmul.f32 %v1023, %v1068
        %v1072 = vmul.f32 %v1027, %v1063
        %v1073 = vmul.f32 %v1027, %v1068
        %v1074 = vmul.f32 %v1031, %v1063
        %v1075 = vmul.f32 %v1031, %v1068
        %v1076 = vmul.f32 %v1035, %v1063
        %v1077 = vmul.f32 %v1035, %v1068
        %v1078 = vmul.f32 %v1039, %v1063
        %v1079 = vmul.f32 %v1039, %v1068
        %v1080 = vmul.f32 %v1043, %v1063
        %v1081 = vmul.f32 %v1043, %v1068
        %v1082 = vmul.f32 %v1047, %v1063
        %v1083 = vmul.f32 %v1047, %v1068
        %v1084 = vmul.f32 %v1051, %v1063
        %v1085 = vmul.f32 %v1051, %v1068
        %v1087 = vcombine.high %v948, %v948
        %v1089 = vunpack.c.l.s4 1966171168
        %v1090 = vunpack.c.0.s8 %v1089
        %v1091 = vlaneseq
        %v1092 = vshrl.u32 %v1091, 7
        %v1093 = vsub.s32 %v1090, %v1092
        %v1094 = vrot.slane %v948, %v1093
        %v1096 = vunpack.c.l.s4 1966171168
        %v1097 = vunpack.c.0.s8 %v1096
        %v1098 = vlaneseq
        %v1099 = vshrl.u32 %v1098, 7
        %v1100 = vsub.s32 %v1097, %v1099
        %v1101 = vrot.slane %v1087, %v1100
        %v1102 = vcombine.high %v1094, %v1094
        %v1103 = vcombine.high %v1101, %v1101
        %v1105 = vunpack.c.l.s4 1966171168
        %v1106 = vunpack.c.0.s8 %v1105
        %v1107 = vlaneseq
        %v1108 = vshrl.u32 %v1107, 7
        %v1109 = vsub.s32 %v1106, %v1108
        %v1110 = vrot.slane %v1094, %v1109
        %v1112 = vunpack.c.l.s4 1966171168
        %v1113 = vunpack.c.0.s8 %v1112
        %v1114 = vlaneseq
        %v1115 = vshrl.u32 %v1114, 7
        %v1116 = vsub.s32 %v1113, %v1115
        %v1117 = vrot.slane %v1101, %v1116
        %v1119 = vunpack.c.l.s4 1966171168
        %v1120 = vunpack.c.0.s8 %v1119
        %v1121 = vlaneseq
        %v1122 = vshrl.u32 %v1121, 7
        %v1123 = vsub.s32 %v1120, %v1122
        %v1124 = vrot.slane %v1102, %v1123
        %v1126 = vunpack.c.l.s4 1966171168
        %v1127 = vunpack.c.0.s8 %v1126
        %v1128 = vlaneseq
        %v1129 = vshrl.u32 %v1128, 7
        %v1130 = vsub.s32 %v1127, %v1129
        %v1131 = vrot.slane %v1103, %v1130
        %v1132 = vcombine.high %v1110, %v1110
        %v1133 = vcombine.high %v1117, %v1117
        %v1134 = vcombine.high %v1124, %v1124
        %v1135 = vcombine.high %v1131, %v1131
        %v1136 = vlaneseq
        %v1137 = vshrl.u32 %v1136, 7
        %v1138 = vsub.s32 0, %v1137
        %v1139 = vrot.slane %v1110, %v1138
        %v1140 = vlaneseq
        %v1141 = vshrl.u32 %v1140, 7
        %v1142 = vsub.s32 0, %v1141
        %v1143 = vrot.slane %v1124, %v1142
        %v1144 = vlaneseq
        %v1145 = vshrl.u32 %v1144, 7
        %v1146 = vsub.s32 0, %v1145
        %v1147 = vrot.slane %v1132, %v1146
        %v1148 = vlaneseq
        %v1149 = vshrl.u32 %v1148, 7
        %v1150 = vsub.s32 0, %v1149
        %v1151 = vrot.slane %v1134, %v1150
        %v1152 = vlaneseq
        %v1153 = vshrl.u32 %v1152, 7
        %v1154 = vsub.s32 0, %v1153
        %v1155 = vrot.slane %v1117, %v1154
        %v1156 = vlaneseq
        %v1157 = vshrl.u32 %v1156, 7
        %v1158 = vsub.s32 0, %v1157
        %v1159 = vrot.slane %v1131, %v1158
        %v1160 = vlaneseq
        %v1161 = vshrl.u32 %v1160, 7
        %v1162 = vsub.s32 0, %v1161
        %v1163 = vrot.slane %v1133, %v1162
        %v1164 = vlaneseq
        %v1165 = vshrl.u32 %v1164, 7
        %v1166 = vsub.s32 0, %v1165
        %v1167 = vrot.slane %v1135, %v1166
        %1176 = vset.pattern.permute.xlu0 1
        %1177 = vperm.xlu0 %1176, %v924
        %v1178 = vpop.permute.xlu0 %1177
        %1180 = vset.pattern.permute.xlu0 1
        %1181 = vperm.xlu0 %1180, %v925
        %v1182 = vpop.permute.xlu0 %1181
        %v1184 = vmul.f32 %v1139, %v1178
        %v1185 = vmul.f32 %v1139, %v1182
        %v1186 = vmul.f32 %v1143, %v1178
        %v1187 = vmul.f32 %v1143, %v1182
        %v1188 = vmul.f32 %v1147, %v1178
        %v1189 = vmul.f32 %v1147, %v1182
        %v1190 = vmul.f32 %v1151, %v1178
        %v1191 = vmul.f32 %v1151, %v1182
        %v1192 = vmul.f32 %v1155, %v1178
        %v1193 = vmul.f32 %v1155, %v1182
        %v1194 = vmul.f32 %v1159, %v1178
        %v1195 = vmul.f32 %v1159, %v1182
        %v1196 = vmul.f32 %v1163, %v1178
        %v1197 = vmul.f32 %v1163, %v1182
        %v1198 = vmul.f32 %v1167, %v1178
        %v1199 = vmul.f32 %v1167, %v1182
        %v1200 = vadd.f32 %v1070, %v1184
        %v1201 = vadd.f32 %v1071, %v1185
        %v1202 = vadd.f32 %v1072, %v1186
        %v1203 = vadd.f32 %v1073, %v1187
        %v1204 = vadd.f32 %v1074, %v1188
        %v1205 = vadd.f32 %v1075, %v1189
        %v1206 = vadd.f32 %v1076, %v1190
        %v1207 = vadd.f32 %v1077, %v1191
        %v1208 = vadd.f32 %v1078, %v1192
        %v1209 = vadd.f32 %v1079, %v1193
        %v1210 = vadd.f32 %v1080, %v1194
        %v1211 = vadd.f32 %v1081, %v1195
        %v1212 = vadd.f32 %v1082, %v1196
        %v1213 = vadd.f32 %v1083, %v1197
        %v1214 = vadd.f32 %v1084, %v1198
        %v1215 = vadd.f32 %v1085, %v1199
        %v1217 = vcombine.high %v957, %v957
        %v1219 = vunpack.c.l.s4 1966171168
        %v1220 = vunpack.c.0.s8 %v1219
        %v1221 = vlaneseq
        %v1222 = vshrl.u32 %v1221, 7
        %v1223 = vsub.s32 %v1220, %v1222
        %v1224 = vrot.slane %v957, %v1223
        %v1226 = vunpack.c.l.s4 1966171168
        %v1227 = vunpack.c.0.s8 %v1226
        %v1228 = vlaneseq
        %v1229 = vshrl.u32 %v1228, 7
        %v1230 = vsub.s32 %v1227, %v1229
        %v1231 = vrot.slane %v1217, %v1230
        %v1232 = vcombine.high %v1224, %v1224
        %v1233 = vcombine.high %v1231, %v1231
        %v1235 = vunpack.c.l.s4 1966171168
        %v1236 = vunpack.c.0.s8 %v1235
        %v1237 = vlaneseq
        %v1238 = vshrl.u32 %v1237, 7
        %v1239 = vsub.s32 %v1236, %v1238
        %v1240 = vrot.slane %v1224, %v1239
        %v1242 = vunpack.c.l.s4 1966171168
        %v1243 = vunpack.c.0.s8 %v1242
        %v1244 = vlaneseq
        %v1245 = vshrl.u32 %v1244, 7
        %v1246 = vsub.s32 %v1243, %v1245
        %v1247 = vrot.slane %v1231, %v1246
        %v1249 = vunpack.c.l.s4 1966171168
        %v1250 = vunpack.c.0.s8 %v1249
        %v1251 = vlaneseq
        %v1252 = vshrl.u32 %v1251, 7
        %v1253 = vsub.s32 %v1250, %v1252
        %v1254 = vrot.slane %v1232, %v1253
        %v1256 = vunpack.c.l.s4 1966171168
        %v1257 = vunpack.c.0.s8 %v1256
        %v1258 = vlaneseq
        %v1259 = vshrl.u32 %v1258, 7
        %v1260 = vsub.s32 %v1257, %v1259
        %v1261 = vrot.slane %v1233, %v1260
        %v1262 = vcombine.high %v1240, %v1240
        %v1263 = vcombine.high %v1247, %v1247
        %v1264 = vcombine.high %v1254, %v1254
        %v1265 = vcombine.high %v1261, %v1261
        %v1266 = vlaneseq
        %v1267 = vshrl.u32 %v1266, 7
        %v1268 = vsub.s32 0, %v1267
        %v1269 = vrot.slane %v1240, %v1268
        %v1270 = vlaneseq
        %v1271 = vshrl.u32 %v1270, 7
        %v1272 = vsub.s32 0, %v1271
        %v1273 = vrot.slane %v1254, %v1272
        %v1274 = vlaneseq
        %v1275 = vshrl.u32 %v1274, 7
        %v1276 = vsub.s32 0, %v1275
        %v1277 = vrot.slane %v1262, %v1276
        %v1278 = vlaneseq
        %v1279 = vshrl.u32 %v1278, 7
        %v1280 = vsub.s32 0, %v1279
        %v1281 = vrot.slane %v1264, %v1280
        %v1282 = vlaneseq
        %v1283 = vshrl.u32 %v1282, 7
        %v1284 = vsub.s32 0, %v1283
        %v1285 = vrot.slane %v1247, %v1284
        %v1286 = vlaneseq
        %v1287 = vshrl.u32 %v1286, 7
        %v1288 = vsub.s32 0, %v1287
        %v1289 = vrot.slane %v1261, %v1288
        %v1290 = vlaneseq
        %v1291 = vshrl.u32 %v1290, 7
        %v1292 = vsub.s32 0, %v1291
        %v1293 = vrot.slane %v1263, %v1292
        %v1294 = vlaneseq
        %v1295 = vshrl.u32 %v1294, 7
        %v1296 = vsub.s32 0, %v1295
        %v1297 = vrot.slane %v1265, %v1296
        %1306 = vset.pattern.permute.xlu0 2
        %1307 = vperm.xlu0 %1306, %v924
        %v1308 = vpop.permute.xlu0 %1307
        %1310 = vset.pattern.permute.xlu0 2
        %1311 = vperm.xlu0 %1310, %v925
        %v1312 = vpop.permute.xlu0 %1311
        %v1314 = vmul.f32 %v1269, %v1308
        %v1315 = vmul.f32 %v1269, %v1312
        %v1316 = vmul.f32 %v1273, %v1308
        %v1317 = vmul.f32 %v1273, %v1312
        %v1318 = vmul.f32 %v1277, %v1308
        %v1319 = vmul.f32 %v1277, %v1312
        %v1320 = vmul.f32 %v1281, %v1308
        %v1321 = vmul.f32 %v1281, %v1312
        %v1322 = vmul.f32 %v1285, %v1308
        %v1323 = vmul.f32 %v1285, %v1312
        %v1324 = vmul.f32 %v1289, %v1308
        %v1325 = vmul.f32 %v1289, %v1312
        %v1326 = vmul.f32 %v1293, %v1308
        %v1327 = vmul.f32 %v1293, %v1312
        %v1328 = vmul.f32 %v1297, %v1308
        %v1329 = vmul.f32 %v1297, %v1312
        %v1330 = vadd.f32 %v1200, %v1314
        %v1331 = vadd.f32 %v1201, %v1315
        %v1332 = vadd.f32 %v1202, %v1316
        %v1333 = vadd.f32 %v1203, %v1317
        %v1334 = vadd.f32 %v1204, %v1318
        %v1335 = vadd.f32 %v1205, %v1319
        %v1336 = vadd.f32 %v1206, %v1320
        %v1337 = vadd.f32 %v1207, %v1321
        %v1338 = vadd.f32 %v1208, %v1322
        %v1339 = vadd.f32 %v1209, %v1323
        %v1340 = vadd.f32 %v1210, %v1324
        %v1341 = vadd.f32 %v1211, %v1325
        %v1342 = vadd.f32 %v1212, %v1326
        %v1343 = vadd.f32 %v1213, %v1327
        %v1344 = vadd.f32 %v1214, %v1328
        %v1345 = vadd.f32 %v1215, %v1329
        %v1347 = vcombine.high %v969, %v969
        %v1349 = vunpack.c.l.s4 1966171168
        %v1350 = vunpack.c.0.s8 %v1349
        %v1351 = vlaneseq
        %v1352 = vshrl.u32 %v1351, 7
        %v1353 = vsub.s32 %v1350, %v1352
        %v1354 = vrot.slane %v969, %v1353
        %v1356 = vunpack.c.l.s4 1966171168
        %v1357 = vunpack.c.0.s8 %v1356
        %v1358 = vlaneseq
        %v1359 = vshrl.u32 %v1358, 7
        %v1360 = vsub.s32 %v1357, %v1359
        %v1361 = vrot.slane %v1347, %v1360
        %v1362 = vcombine.high %v1354, %v1354
        %v1363 = vcombine.high %v1361, %v1361
        %v1365 = vunpack.c.l.s4 1966171168
        %v1366 = vunpack.c.0.s8 %v1365
        %v1367 = vlaneseq
        %v1368 = vshrl.u32 %v1367, 7
        %v1369 = vsub.s32 %v1366, %v1368
        %v1370 = vrot.slane %v1354, %v1369
        %v1372 = vunpack.c.l.s4 1966171168
        %v1373 = vunpack.c.0.s8 %v1372
        %v1374 = vlaneseq
        %v1375 = vshrl.u32 %v1374, 7
        %v1376 = vsub.s32 %v1373, %v1375
        %v1377 = vrot.slane %v1361, %v1376
        %v1379 = vunpack.c.l.s4 1966171168
        %v1380 = vunpack.c.0.s8 %v1379
        %v1381 = vlaneseq
        %v1382 = vshrl.u32 %v1381, 7
        %v1383 = vsub.s32 %v1380, %v1382
        %v1384 = vrot.slane %v1362, %v1383
        %v1386 = vunpack.c.l.s4 1966171168
        %v1387 = vunpack.c.0.s8 %v1386
        %v1388 = vlaneseq
        %v1389 = vshrl.u32 %v1388, 7
        %v1390 = vsub.s32 %v1387, %v1389
        %v1391 = vrot.slane %v1363, %v1390
        %v1392 = vcombine.high %v1370, %v1370
        %v1393 = vcombine.high %v1377, %v1377
        %v1394 = vcombine.high %v1384, %v1384
        %v1395 = vcombine.high %v1391, %v1391
        %v1396 = vlaneseq
        %v1397 = vshrl.u32 %v1396, 7
        %v1398 = vsub.s32 0, %v1397
        %v1399 = vrot.slane %v1370, %v1398
        %v1400 = vlaneseq
        %v1401 = vshrl.u32 %v1400, 7
        %v1402 = vsub.s32 0, %v1401
        %v1403 = vrot.slane %v1384, %v1402
        %v1404 = vlaneseq
        %v1405 = vshrl.u32 %v1404, 7
        %v1406 = vsub.s32 0, %v1405
        %v1407 = vrot.slane %v1392, %v1406
        %v1408 = vlaneseq
        %v1409 = vshrl.u32 %v1408, 7
        %v1410 = vsub.s32 0, %v1409
        %v1411 = vrot.slane %v1394, %v1410
        %v1412 = vlaneseq
        %v1413 = vshrl.u32 %v1412, 7
        %v1414 = vsub.s32 0, %v1413
        %v1415 = vrot.slane %v1377, %v1414
        %v1416 = vlaneseq
        %v1417 = vshrl.u32 %v1416, 7
        %v1418 = vsub.s32 0, %v1417
        %v1419 = vrot.slane %v1391, %v1418
        %v1420 = vlaneseq
        %v1421 = vshrl.u32 %v1420, 7
        %v1422 = vsub.s32 0, %v1421
        %v1423 = vrot.slane %v1393, %v1422
        %v1424 = vlaneseq
        %v1425 = vshrl.u32 %v1424, 7
        %v1426 = vsub.s32 0, %v1425
        %v1427 = vrot.slane %v1395, %v1426
        %1436 = vset.pattern.permute.xlu0 3
        %1437 = vperm.xlu0 %1436, %v924
        %v1438 = vpop.permute.xlu0 %1437
        %1440 = vset.pattern.permute.xlu0 3
        %1441 = vperm.xlu0 %1440, %v925
        %v1442 = vpop.permute.xlu0 %1441
        %v1444 = vmul.f32 %v1399, %v1438
        %v1445 = vmul.f32 %v1399, %v1442
        %v1446 = vmul.f32 %v1403, %v1438
        %v1447 = vmul.f32 %v1403, %v1442
        %v1448 = vmul.f32 %v1407, %v1438
        %v1449 = vmul.f32 %v1407, %v1442
        %v1450 = vmul.f32 %v1411, %v1438
        %v1451 = vmul.f32 %v1411, %v1442
        %v1452 = vmul.f32 %v1415, %v1438
        %v1453 = vmul.f32 %v1415, %v1442
        %v1454 = vmul.f32 %v1419, %v1438
        %v1455 = vmul.f32 %v1419, %v1442
        %v1456 = vmul.f32 %v1423, %v1438
        %v1457 = vmul.f32 %v1423, %v1442
        %v1458 = vmul.f32 %v1427, %v1438
        %v1459 = vmul.f32 %v1427, %v1442
        %v1460 = vadd.f32 %v1330, %v1444
        %v1461 = vadd.f32 %v1331, %v1445
        %v1462 = vadd.f32 %v1332, %v1446
        %v1463 = vadd.f32 %v1333, %v1447
        %v1464 = vadd.f32 %v1334, %v1448
        %v1465 = vadd.f32 %v1335, %v1449
        %v1466 = vadd.f32 %v1336, %v1450
        %v1467 = vadd.f32 %v1337, %v1451
        %v1468 = vadd.f32 %v1338, %v1452
        %v1469 = vadd.f32 %v1339, %v1453
        %v1470 = vadd.f32 %v1340, %v1454
        %v1471 = vadd.f32 %v1341, %v1455
        %v1472 = vadd.f32 %v1342, %v1456
        %v1473 = vadd.f32 %v1343, %v1457
        %v1474 = vadd.f32 %v1344, %v1458
        %v1475 = vadd.f32 %v1345, %v1459
        %1477 = vset.pattern.permute.xlu0 0
        %1478 = vperm.xlu0 %1477, %v926
        %v1479 = vpop.permute.xlu0 %1478
        %1482 = vset.pattern.permute.xlu0 0
        %1483 = vperm.xlu0 %1482, %v927
        %v1484 = vpop.permute.xlu0 %1483
        %v1486 = vadd.f32 %v1460, %v1479
        %v1487 = vadd.f32 %v1461, %v1484
        %v1488 = vadd.f32 %v1462, %v1479
        %v1489 = vadd.f32 %v1463, %v1484
        %v1490 = vadd.f32 %v1464, %v1479
        %v1491 = vadd.f32 %v1465, %v1484
        %v1492 = vadd.f32 %v1466, %v1479
        %v1493 = vadd.f32 %v1467, %v1484
        %v1494 = vadd.f32 %v1468, %v1479
        %v1495 = vadd.f32 %v1469, %v1484
        %v1496 = vadd.f32 %v1470, %v1479
        %v1497 = vadd.f32 %v1471, %v1484
        %v1498 = vadd.f32 %v1472, %v1479
        %v1499 = vadd.f32 %v1473, %v1484
        %v1500 = vadd.f32 %v1474, %v1479
        %v1501 = vadd.f32 %v1475, %v1484
        %v1502 = vmul.f32 %v1486, 0.5
        %v1503 = vmul.f32 %v1487, 0.5
        %v1504 = vmul.f32 %v1488, 0.5
        %v1505 = vmul.f32 %v1489, 0.5
        %v1506 = vmul.f32 %v1490, 0.5
        %v1507 = vmul.f32 %v1491, 0.5
        %v1508 = vmul.f32 %v1492, 0.5
        %v1509 = vmul.f32 %v1493, 0.5
        %v1510 = vmul.f32 %v1494, 0.5
        %v1511 = vmul.f32 %v1495, 0.5
        %v1512 = vmul.f32 %v1496, 0.5
        %v1513 = vmul.f32 %v1497, 0.5
        %v1514 = vmul.f32 %v1498, 0.5
        %v1515 = vmul.f32 %v1499, 0.5
        %v1516 = vmul.f32 %v1500, 0.5
        %v1517 = vmul.f32 %v1501, 0.5
        %v1518 = vmul.f32 %v1486, 0.70710677
        %v1519 = vmul.f32 %v1487, 0.70710677
        %v1520 = vmul.f32 %v1488, 0.70710677
        %v1521 = vmul.f32 %v1489, 0.70710677
        %v1522 = vmul.f32 %v1490, 0.70710677
        %v1523 = vmul.f32 %v1491, 0.70710677
        %v1524 = vmul.f32 %v1492, 0.70710677
        %v1525 = vmul.f32 %v1493, 0.70710677
        %v1526 = vmul.f32 %v1494, 0.70710677
        %v1527 = vmul.f32 %v1495, 0.70710677
        %v1528 = vmul.f32 %v1496, 0.70710677
        %v1529 = vmul.f32 %v1497, 0.70710677
        %v1530 = vmul.f32 %v1498, 0.70710677
        %v1531 = vmul.f32 %v1499, 0.70710677
        %v1532 = vmul.f32 %v1500, 0.70710677
        %v1533 = vmul.f32 %v1501, 0.70710677
        %vm1534 = vcmp.lt.f32.partialorder %v1518, 0.0
        %vm1535 = vcmp.lt.f32.partialorder %v1519, 0.0
        %vm1536 = vcmp.lt.f32.partialorder %v1520, 0.0
        %vm1537 = vcmp.lt.f32.partialorder %v1521, 0.0
        %vm1538 = vcmp.lt.f32.partialorder %v1522, 0.0
        %vm1539 = vcmp.lt.f32.partialorder %v1523, 0.0
        %vm1540 = vcmp.lt.f32.partialorder %v1524, 0.0
        %vm1541 = vcmp.lt.f32.partialorder %v1525, 0.0
        %vm1542 = vcmp.lt.f32.partialorder %v1526, 0.0
        %vm1543 = vcmp.lt.f32.partialorder %v1527, 0.0
        %vm1544 = vcmp.lt.f32.partialorder %v1528, 0.0
        %vm1545 = vcmp.lt.f32.partialorder %v1529, 0.0
        %vm1546 = vcmp.lt.f32.partialorder %v1530, 0.0
        %vm1547 = vcmp.lt.f32.partialorder %v1531, 0.0
        %vm1548 = vcmp.lt.f32.partialorder %v1532, 0.0
        %vm1549 = vcmp.lt.f32.partialorder %v1533, 0.0
        %v1550 = vsel %vm1534, -1.0, 1.0
        %v1551 = vsel %vm1535, -1.0, 1.0
        %v1552 = vsel %vm1536, -1.0, 1.0
        %v1553 = vsel %vm1537, -1.0, 1.0
        %v1554 = vsel %vm1538, -1.0, 1.0
        %v1555 = vsel %vm1539, -1.0, 1.0
        %v1556 = vsel %vm1540, -1.0, 1.0
        %v1557 = vsel %vm1541, -1.0, 1.0
        %v1558 = vsel %vm1542, -1.0, 1.0
        %v1559 = vsel %vm1543, -1.0, 1.0
        %v1560 = vsel %vm1544, -1.0, 1.0
        %v1561 = vsel %vm1545, -1.0, 1.0
        %v1562 = vsel %vm1546, -1.0, 1.0
        %v1563 = vsel %vm1547, -1.0, 1.0
        %v1564 = vsel %vm1548, -1.0, 1.0
        %v1565 = vsel %vm1549, -1.0, 1.0
        %v1566 = vand.u32 2147483647, %v1518
        %v1567 = vand.u32 2147483647, %v1519
        %v1568 = vand.u32 2147483647, %v1520
        %v1569 = vand.u32 2147483647, %v1521
        %v1570 = vand.u32 2147483647, %v1522
        %v1571 = vand.u32 2147483647, %v1523
        %v1572 = vand.u32 2147483647, %v1524
        %v1573 = vand.u32 2147483647, %v1525
        %v1574 = vand.u32 2147483647, %v1526
        %v1575 = vand.u32 2147483647, %v1527
        %v1576 = vand.u32 2147483647, %v1528
        %v1577 = vand.u32 2147483647, %v1529
        %v1578 = vand.u32 2147483647, %v1530
        %v1579 = vand.u32 2147483647, %v1531
        %v1580 = vand.u32 2147483647, %v1532
        %v1581 = vand.u32 2147483647, %v1533
        %v1582 = vmul.f32 %v1566, 0.3275911
        %v1583 = vmul.f32 %v1567, 0.3275911
        %v1584 = vmul.f32 %v1568, 0.3275911
        %v1585 = vmul.f32 %v1569, 0.3275911
        %v1586 = vmul.f32 %v1570, 0.3275911
        %v1587 = vmul.f32 %v1571, 0.3275911
        %v1588 = vmul.f32 %v1572, 0.3275911
        %v1589 = vmul.f32 %v1573, 0.3275911
        %v1590 = vmul.f32 %v1574, 0.3275911
        %v1591 = vmul.f32 %v1575, 0.3275911
        %v1592 = vmul.f32 %v1576, 0.3275911
        %v1593 = vmul.f32 %v1577, 0.3275911
        %v1594 = vmul.f32 %v1578, 0.3275911
        %v1595 = vmul.f32 %v1579, 0.3275911
        %v1596 = vmul.f32 %v1580, 0.3275911
        %v1597 = vmul.f32 %v1581, 0.3275911
        %v1598 = vadd.f32 %v1582, 1.0
        %v1599 = vadd.f32 %v1583, 1.0
        %v1600 = vadd.f32 %v1584, 1.0
        %v1601 = vadd.f32 %v1585, 1.0
        %v1602 = vadd.f32 %v1586, 1.0
        %v1603 = vadd.f32 %v1587, 1.0
        %v1604 = vadd.f32 %v1588, 1.0
        %v1605 = vadd.f32 %v1589, 1.0
        %v1606 = vadd.f32 %v1590, 1.0
        %v1607 = vadd.f32 %v1591, 1.0
        %v1608 = vadd.f32 %v1592, 1.0
        %v1609 = vadd.f32 %v1593, 1.0
        %v1610 = vadd.f32 %v1594, 1.0
        %v1611 = vadd.f32 %v1595, 1.0
        %v1612 = vadd.f32 %v1596, 1.0
        %v1613 = vadd.f32 %v1597, 1.0
        %v1614 = vrcp.pop %v1598
        %v1615 = vmul.f32 1.0, %v1614
        %v1616 = vrcp.pop %v1599
        %v1617 = vmul.f32 1.0, %v1616
        %v1618 = vrcp.pop %v1600
        %v1619 = vmul.f32 1.0, %v1618
        %v1620 = vrcp.pop %v1601
        %v1621 = vmul.f32 1.0, %v1620
        %v1622 = vrcp.pop %v1602
        %v1623 = vmul.f32 1.0, %v1622
        %v1624 = vrcp.pop %v1603
        %v1625 = vmul.f32 1.0, %v1624
        %v1626 = vrcp.pop %v1604
        %v1627 = vmul.f32 1.0, %v1626
        %v1628 = vrcp.pop %v1605
        %v1629 = vmul.f32 1.0, %v1628
        %v1630 = vrcp.pop %v1606
        %v1631 = vmul.f32 1.0, %v1630
        %v1632 = vrcp.pop %v1607
        %v1633 = vmul.f32 1.0, %v1632
        %v1634 = vrcp.pop %v1608
        %v1635 = vmul.f32 1.0, %v1634
        %v1636 = vrcp.pop %v1609
        %v1637 = vmul.f32 1.0, %v1636
        %v1638 = vrcp.pop %v1610
        %v1639 = vmul.f32 1.0, %v1638
        %v1640 = vrcp.pop %v1611
        %v1641 = vmul.f32 1.0, %v1640
        %v1642 = vrcp.pop %v1612
        %v1643 = vmul.f32 1.0, %v1642
        %v1644 = vrcp.pop %v1613
        %v1645 = vmul.f32 1.0, %v1644
        %v1646 = vmul.f32 %v1615, 1.0614054
        %v1647 = vmul.f32 %v1617, 1.0614054
        %v1648 = vmul.f32 %v1619, 1.0614054
        %v1649 = vmul.f32 %v1621, 1.0614054
        %v1650 = vmul.f32 %v1623, 1.0614054
        %v1651 = vmul.f32 %v1625, 1.0614054
        %v1652 = vmul.f32 %v1627, 1.0614054
        %v1653 = vmul.f32 %v1629, 1.0614054
        %v1654 = vmul.f32 %v1631, 1.0614054
        %v1655 = vmul.f32 %v1633, 1.0614054
        %v1656 = vmul.f32 %v1635, 1.0614054
        %v1657 = vmul.f32 %v1637, 1.0614054
        %v1658 = vmul.f32 %v1639, 1.0614054
        %v1659 = vmul.f32 %v1641, 1.0614054
        %v1660 = vmul.f32 %v1643, 1.0614054
        %v1661 = vmul.f32 %v1645, 1.0614054
        %v1662 = vadd.f32 %v1646, -1.4531521
        %v1663 = vadd.f32 %v1647, -1.4531521
        %v1664 = vadd.f32 %v1648, -1.4531521
        %v1665 = vadd.f32 %v1649, -1.4531521
        %v1666 = vadd.f32 %v1650, -1.4531521
        %v1667 = vadd.f32 %v1651, -1.4531521
        %v1668 = vadd.f32 %v1652, -1.4531521
        %v1669 = vadd.f32 %v1653, -1.4531521
        %v1670 = vadd.f32 %v1654, -1.4531521
        %v1671 = vadd.f32 %v1655, -1.4531521
        %v1672 = vadd.f32 %v1656, -1.4531521
        %v1673 = vadd.f32 %v1657, -1.4531521
        %v1674 = vadd.f32 %v1658, -1.4531521
        %v1675 = vadd.f32 %v1659, -1.4531521
        %v1676 = vadd.f32 %v1660, -1.4531521
        %v1677 = vadd.f32 %v1661, -1.4531521
        %v1678 = vmul.f32 %v1662, %v1615
        %v1679 = vmul.f32 %v1663, %v1617
        %v1680 = vmul.f32 %v1664, %v1619
        %v1681 = vmul.f32 %v1665, %v1621
        %v1682 = vmul.f32 %v1666, %v1623
        %v1683 = vmul.f32 %v1667, %v1625
        %v1684 = vmul.f32 %v1668, %v1627
        %v1685 = vmul.f32 %v1669, %v1629
        %v1686 = vmul.f32 %v1670, %v1631
        %v1687 = vmul.f32 %v1671, %v1633
        %v1688 = vmul.f32 %v1672, %v1635
        %v1689 = vmul.f32 %v1673, %v1637
        %v1690 = vmul.f32 %v1674, %v1639
        %v1691 = vmul.f32 %v1675, %v1641
        %v1692 = vmul.f32 %v1676, %v1643
        %v1693 = vmul.f32 %v1677, %v1645
        %v1694 = vadd.f32 %v1678, 1.4214138
        %v1695 = vadd.f32 %v1679, 1.4214138
        %v1696 = vadd.f32 %v1680, 1.4214138
        %v1697 = vadd.f32 %v1681, 1.4214138
        %v1698 = vadd.f32 %v1682, 1.4214138
        %v1699 = vadd.f32 %v1683, 1.4214138
        %v1700 = vadd.f32 %v1684, 1.4214138
        %v1701 = vadd.f32 %v1685, 1.4214138
        %v1702 = vadd.f32 %v1686, 1.4214138
        %v1703 = vadd.f32 %v1687, 1.4214138
        %v1704 = vadd.f32 %v1688, 1.4214138
        %v1705 = vadd.f32 %v1689, 1.4214138
        %v1706 = vadd.f32 %v1690, 1.4214138
        %v1707 = vadd.f32 %v1691, 1.4214138
        %v1708 = vadd.f32 %v1692, 1.4214138
        %v1709 = vadd.f32 %v1693, 1.4214138
        %v1710 = vmul.f32 %v1694, %v1615
        %v1711 = vmul.f32 %v1695, %v1617
        %v1712 = vmul.f32 %v1696, %v1619
        %v1713 = vmul.f32 %v1697, %v1621
        %v1714 = vmul.f32 %v1698, %v1623
        %v1715 = vmul.f32 %v1699, %v1625
        %v1716 = vmul.f32 %v1700, %v1627
        %v1717 = vmul.f32 %v1701, %v1629
        %v1718 = vmul.f32 %v1702, %v1631
        %v1719 = vmul.f32 %v1703, %v1633
        %v1720 = vmul.f32 %v1704, %v1635
        %v1721 = vmul.f32 %v1705, %v1637
        %v1722 = vmul.f32 %v1706, %v1639
        %v1723 = vmul.f32 %v1707, %v1641
        %v1724 = vmul.f32 %v1708, %v1643
        %v1725 = vmul.f32 %v1709, %v1645
        %v1726 = vadd.f32 %v1710, -0.28449672
        %v1727 = vadd.f32 %v1711, -0.28449672
        %v1728 = vadd.f32 %v1712, -0.28449672
        %v1729 = vadd.f32 %v1713, -0.28449672
        %v1730 = vadd.f32 %v1714, -0.28449672
        %v1731 = vadd.f32 %v1715, -0.28449672
        %v1732 = vadd.f32 %v1716, -0.28449672
        %v1733 = vadd.f32 %v1717, -0.28449672
        %v1734 = vadd.f32 %v1718, -0.28449672
        %v1735 = vadd.f32 %v1719, -0.28449672
        %v1736 = vadd.f32 %v1720, -0.28449672
        %v1737 = vadd.f32 %v1721, -0.28449672
        %v1738 = vadd.f32 %v1722, -0.28449672
        %v1739 = vadd.f32 %v1723, -0.28449672
        %v1740 = vadd.f32 %v1724, -0.28449672
        %v1741 = vadd.f32 %v1725, -0.28449672
        %v1742 = vmul.f32 %v1726, %v1615
        %v1743 = vmul.f32 %v1727, %v1617
        %v1744 = vmul.f32 %v1728, %v1619
        %v1745 = vmul.f32 %v1729, %v1621
        %v1746 = vmul.f32 %v1730, %v1623
        %v1747 = vmul.f32 %v1731, %v1625
        %v1748 = vmul.f32 %v1732, %v1627
        %v1749 = vmul.f32 %v1733, %v1629
        %v1750 = vmul.f32 %v1734, %v1631
        %v1751 = vmul.f32 %v1735, %v1633
        %v1752 = vmul.f32 %v1736, %v1635
        %v1753 = vmul.f32 %v1737, %v1637
        %v1754 = vmul.f32 %v1738, %v1639
        %v1755 = vmul.f32 %v1739, %v1641
        %v1756 = vmul.f32 %v1740, %v1643
        %v1757 = vmul.f32 %v1741, %v1645
        %v1758 = vadd.f32 %v1742, 0.2548296
        %v1759 = vadd.f32 %v1743, 0.2548296
        %v1760 = vadd.f32 %v1744, 0.2548296
        %v1761 = vadd.f32 %v1745, 0.2548296
        %v1762 = vadd.f32 %v1746, 0.2548296
        %v1763 = vadd.f32 %v1747, 0.2548296
        %v1764 = vadd.f32 %v1748, 0.2548296
        %v1765 = vadd.f32 %v1749, 0.2548296
        %v1766 = vadd.f32 %v1750, 0.2548296
        %v1767 = vadd.f32 %v1751, 0.2548296
        %v1768 = vadd.f32 %v1752, 0.2548296
        %v1769 = vadd.f32 %v1753, 0.2548296
        %v1770 = vadd.f32 %v1754, 0.2548296
        %v1771 = vadd.f32 %v1755, 0.2548296
        %v1772 = vadd.f32 %v1756, 0.2548296
        %v1773 = vadd.f32 %v1757, 0.2548296
        %v1774 = vmul.f32 %v1758, %v1615
        %v1775 = vmul.f32 %v1759, %v1617
        %v1776 = vmul.f32 %v1760, %v1619
        %v1777 = vmul.f32 %v1761, %v1621
        %v1778 = vmul.f32 %v1762, %v1623
        %v1779 = vmul.f32 %v1763, %v1625
        %v1780 = vmul.f32 %v1764, %v1627
        %v1781 = vmul.f32 %v1765, %v1629
        %v1782 = vmul.f32 %v1766, %v1631
        %v1783 = vmul.f32 %v1767, %v1633
        %v1784 = vmul.f32 %v1768, %v1635
        %v1785 = vmul.f32 %v1769, %v1637
        %v1786 = vmul.f32 %v1770, %v1639
        %v1787 = vmul.f32 %v1771, %v1641
        %v1788 = vmul.f32 %v1772, %v1643
        %v1789 = vmul.f32 %v1773, %v1645
        %v1790 = vsub.f32 0.0, %v1566
        %v1791 = vsub.f32 0.0, %v1567
        %v1792 = vsub.f32 0.0, %v1568
        %v1793 = vsub.f32 0.0, %v1569
        %v1794 = vsub.f32 0.0, %v1570
        %v1795 = vsub.f32 0.0, %v1571
        %v1796 = vsub.f32 0.0, %v1572
        %v1797 = vsub.f32 0.0, %v1573
        %v1798 = vsub.f32 0.0, %v1574
        %v1799 = vsub.f32 0.0, %v1575
        %v1800 = vsub.f32 0.0, %v1576
        %v1801 = vsub.f32 0.0, %v1577
        %v1802 = vsub.f32 0.0, %v1578
        %v1803 = vsub.f32 0.0, %v1579
        %v1804 = vsub.f32 0.0, %v1580
        %v1805 = vsub.f32 0.0, %v1581
        %v1806 = vmul.f32 %v1790, %v1566
        %v1807 = vmul.f32 %v1791, %v1567
        %v1808 = vmul.f32 %v1792, %v1568
        %v1809 = vmul.f32 %v1793, %v1569
        %v1810 = vmul.f32 %v1794, %v1570
        %v1811 = vmul.f32 %v1795, %v1571
        %v1812 = vmul.f32 %v1796, %v1572
        %v1813 = vmul.f32 %v1797, %v1573
        %v1814 = vmul.f32 %v1798, %v1574
        %v1815 = vmul.f32 %v1799, %v1575
        %v1816 = vmul.f32 %v1800, %v1576
        %v1817 = vmul.f32 %v1801, %v1577
        %v1818 = vmul.f32 %v1802, %v1578
        %v1819 = vmul.f32 %v1803, %v1579
        %v1820 = vmul.f32 %v1804, %v1580
        %v1821 = vmul.f32 %v1805, %v1581
        %v1822 = vmul.f32 %v1806, 1.442695
        %v1823 = vpow.pop %v1822
        %v1824 = vmul.f32 %v1807, 1.442695
        %v1825 = vpow.pop %v1824
        %v1826 = vmul.f32 %v1808, 1.442695
        %v1827 = vpow.pop %v1826
        %v1828 = vmul.f32 %v1809, 1.442695
        %v1829 = vpow.pop %v1828
        %v1830 = vmul.f32 %v1810, 1.442695
        %v1831 = vpow.pop %v1830
        %v1832 = vmul.f32 %v1811, 1.442695
        %v1833 = vpow.pop %v1832
        %v1834 = vmul.f32 %v1812, 1.442695
        %v1835 = vpow.pop %v1834
        %v1836 = vmul.f32 %v1813, 1.442695
        %v1837 = vpow.pop %v1836
        %v1838 = vmul.f32 %v1814, 1.442695
        %v1839 = vpow.pop %v1838
        %v1840 = vmul.f32 %v1815, 1.442695
        %v1841 = vpow.pop %v1840
        %v1842 = vmul.f32 %v1816, 1.442695
        %v1843 = vpow.pop %v1842
        %v1844 = vmul.f32 %v1817, 1.442695
        %v1845 = vpow.pop %v1844
        %v1846 = vmul.f32 %v1818, 1.442695
        %v1847 = vpow.pop %v1846
        %v1848 = vmul.f32 %v1819, 1.442695
        %v1849 = vpow.pop %v1848
        %v1850 = vmul.f32 %v1820, 1.442695
        %v1851 = vpow.pop %v1850
        %v1852 = vmul.f32 %v1821, 1.442695
        %v1853 = vpow.pop %v1852
        %v1854 = vmul.f32 %v1774, %v1823
        %v1855 = vmul.f32 %v1775, %v1825
        %v1856 = vmul.f32 %v1776, %v1827
        %v1857 = vmul.f32 %v1777, %v1829
        %v1858 = vmul.f32 %v1778, %v1831
        %v1859 = vmul.f32 %v1779, %v1833
        %v1860 = vmul.f32 %v1780, %v1835
        %v1861 = vmul.f32 %v1781, %v1837
        %v1862 = vmul.f32 %v1782, %v1839
        %v1863 = vmul.f32 %v1783, %v1841
        %v1864 = vmul.f32 %v1784, %v1843
        %v1865 = vmul.f32 %v1785, %v1845
        %v1866 = vmul.f32 %v1786, %v1847
        %v1867 = vmul.f32 %v1787, %v1849
        %v1868 = vmul.f32 %v1788, %v1851
        %v1869 = vmul.f32 %v1789, %v1853
        %v1870 = vsub.f32 1.0, %v1854
        %v1871 = vsub.f32 1.0, %v1855
        %v1872 = vsub.f32 1.0, %v1856
        %v1873 = vsub.f32 1.0, %v1857
        %v1874 = vsub.f32 1.0, %v1858
        %v1875 = vsub.f32 1.0, %v1859
        %v1876 = vsub.f32 1.0, %v1860
        %v1877 = vsub.f32 1.0, %v1861
        %v1878 = vsub.f32 1.0, %v1862
        %v1879 = vsub.f32 1.0, %v1863
        %v1880 = vsub.f32 1.0, %v1864
        %v1881 = vsub.f32 1.0, %v1865
        %v1882 = vsub.f32 1.0, %v1866
        %v1883 = vsub.f32 1.0, %v1867
        %v1884 = vsub.f32 1.0, %v1868
        %v1885 = vsub.f32 1.0, %v1869
        %v1886 = vmul.f32 %v1550, %v1870
        %v1887 = vmul.f32 %v1551, %v1871
        %v1888 = vmul.f32 %v1552, %v1872
        %v1889 = vmul.f32 %v1553, %v1873
        %v1890 = vmul.f32 %v1554, %v1874
        %v1891 = vmul.f32 %v1555, %v1875
        %v1892 = vmul.f32 %v1556, %v1876
        %v1893 = vmul.f32 %v1557, %v1877
        %v1894 = vmul.f32 %v1558, %v1878
        %v1895 = vmul.f32 %v1559, %v1879
        %v1896 = vmul.f32 %v1560, %v1880
        %v1897 = vmul.f32 %v1561, %v1881
        %v1898 = vmul.f32 %v1562, %v1882
        %v1899 = vmul.f32 %v1563, %v1883
        %v1900 = vmul.f32 %v1564, %v1884
        %v1901 = vmul.f32 %v1565, %v1885
        %v1902 = vadd.f32 %v1886, 1.0
        %v1903 = vadd.f32 %v1887, 1.0
        %v1904 = vadd.f32 %v1888, 1.0
        %v1905 = vadd.f32 %v1889, 1.0
        %v1906 = vadd.f32 %v1890, 1.0
        %v1907 = vadd.f32 %v1891, 1.0
        %v1908 = vadd.f32 %v1892, 1.0
        %v1909 = vadd.f32 %v1893, 1.0
        %v1910 = vadd.f32 %v1894, 1.0
        %v1911 = vadd.f32 %v1895, 1.0
        %v1912 = vadd.f32 %v1896, 1.0
        %v1913 = vadd.f32 %v1897, 1.0
        %v1914 = vadd.f32 %v1898, 1.0
        %v1915 = vadd.f32 %v1899, 1.0
        %v1916 = vadd.f32 %v1900, 1.0
        %v1917 = vadd.f32 %v1901, 1.0
        %v1918 = vmul.f32 %v1502, %v1902
        %v1919 = vmul.f32 %v1503, %v1903
        %v1920 = vmul.f32 %v1504, %v1904
        %v1921 = vmul.f32 %v1505, %v1905
        %v1922 = vmul.f32 %v1506, %v1906
        %v1923 = vmul.f32 %v1507, %v1907
        %v1924 = vmul.f32 %v1508, %v1908
        %v1925 = vmul.f32 %v1509, %v1909
        %v1926 = vmul.f32 %v1510, %v1910
        %v1927 = vmul.f32 %v1511, %v1911
        %v1928 = vmul.f32 %v1512, %v1912
        %v1929 = vmul.f32 %v1513, %v1913
        %v1930 = vmul.f32 %v1514, %v1914
        %v1931 = vmul.f32 %v1515, %v1915
        %v1932 = vmul.f32 %v1516, %v1916
        %v1933 = vmul.f32 %v1517, %v1917
        %1935 = vset.pattern.permute.xlu0 0
        %1936 = vperm.xlu0 %1935, %v928
        %v1937 = vpop.permute.xlu0 %1936
        %1940 = vset.pattern.permute.xlu0 0
        %1941 = vperm.xlu0 %1940, %v929
        %v1942 = vpop.permute.xlu0 %1941
        %v1944 = vmul.f32 %v1918, %v1937
        %v1945 = vmul.f32 %v1919, %v1942
        %v1946 = vmul.f32 %v1920, %v1937
        %v1947 = vmul.f32 %v1921, %v1942
        %v1948 = vmul.f32 %v1922, %v1937
        %v1949 = vmul.f32 %v1923, %v1942
        %v1950 = vmul.f32 %v1924, %v1937
        %v1951 = vmul.f32 %v1925, %v1942
        %v1952 = vmul.f32 %v1926, %v1937
        %v1953 = vmul.f32 %v1927, %v1942
        %v1954 = vmul.f32 %v1928, %v1937
        %v1955 = vmul.f32 %v1929, %v1942
        %v1956 = vmul.f32 %v1930, %v1937
        %v1957 = vmul.f32 %v1931, %v1942
        %v1958 = vmul.f32 %v1932, %v1937
        %v1959 = vmul.f32 %v1933, %v1942
        %v1960 = vsel %vm613, %v1944, 0.0
        %v1961 = vsel %vm613, %v1945, 0.0
        %v1962 = vadd.f32 %v1960, %v1961
        %v1963 = vrot.slane %v1962, 4
        %v1964 = vadd.f32 %v1962, %v1963
        %v1965 = vrot.slane %v1964, 2
        %v1966 = vadd.f32 %v1964, %v1965
        %v1967 = vrot.slane %v1966, 1
        %v1968 = vadd.f32 %v1966, %v1967
        %v1969 = vsel %vm613, %v1946, 0.0
        %v1970 = vsel %vm613, %v1947, 0.0
        %v1971 = vadd.f32 %v1969, %v1970
        %v1972 = vrot.slane %v1971, 4
        %v1973 = vadd.f32 %v1971, %v1972
        %v1974 = vrot.slane %v1973, 2
        %v1975 = vadd.f32 %v1973, %v1974
        %v1976 = vrot.slane %v1975, 1
        %v1977 = vadd.f32 %v1975, %v1976
        %v1978 = vsel %vm613, %v1948, 0.0
        %v1979 = vsel %vm613, %v1949, 0.0
        %v1980 = vadd.f32 %v1978, %v1979
        %v1981 = vrot.slane %v1980, 4
        %v1982 = vadd.f32 %v1980, %v1981
        %v1983 = vrot.slane %v1982, 2
        %v1984 = vadd.f32 %v1982, %v1983
        %v1985 = vrot.slane %v1984, 1
        %v1986 = vadd.f32 %v1984, %v1985
        %v1987 = vsel %vm613, %v1950, 0.0
        %v1988 = vsel %vm613, %v1951, 0.0
        %v1989 = vadd.f32 %v1987, %v1988
        %v1990 = vrot.slane %v1989, 4
        %v1991 = vadd.f32 %v1989, %v1990
        %v1992 = vrot.slane %v1991, 2
        %v1993 = vadd.f32 %v1991, %v1992
        %v1994 = vrot.slane %v1993, 1
        %v1995 = vadd.f32 %v1993, %v1994
        %v1996 = vsel %vm613, %v1952, 0.0
        %v1997 = vsel %vm613, %v1953, 0.0
        %v1998 = vadd.f32 %v1996, %v1997
        %v1999 = vrot.slane %v1998, 4
        %v2000 = vadd.f32 %v1998, %v1999
        %v2001 = vrot.slane %v2000, 2
        %v2002 = vadd.f32 %v2000, %v2001
        %v2003 = vrot.slane %v2002, 1
        %v2004 = vadd.f32 %v2002, %v2003
        %v2005 = vsel %vm613, %v1954, 0.0
        %v2006 = vsel %vm613, %v1955, 0.0
        %v2007 = vadd.f32 %v2005, %v2006
        %v2008 = vrot.slane %v2007, 4
        %v2009 = vadd.f32 %v2007, %v2008
        %v2010 = vrot.slane %v2009, 2
        %v2011 = vadd.f32 %v2009, %v2010
        %v2012 = vrot.slane %v2011, 1
        %v2013 = vadd.f32 %v2011, %v2012
        %v2014 = vsel %vm613, %v1956, 0.0
        %v2015 = vsel %vm613, %v1957, 0.0
        %v2016 = vadd.f32 %v2014, %v2015
        %v2017 = vrot.slane %v2016, 4
        %v2018 = vadd.f32 %v2016, %v2017
        %v2019 = vrot.slane %v2018, 2
        %v2020 = vadd.f32 %v2018, %v2019
        %v2021 = vrot.slane %v2020, 1
        %v2022 = vadd.f32 %v2020, %v2021
        %v2023 = vsel %vm613, %v1958, 0.0
        %v2024 = vsel %vm613, %v1959, 0.0
        %v2025 = vadd.f32 %v2023, %v2024
        %v2026 = vrot.slane %v2025, 4
        %v2027 = vadd.f32 %v2025, %v2026
        %v2028 = vrot.slane %v2027, 2
        %v2029 = vadd.f32 %v2027, %v2028
        %v2030 = vrot.slane %v2029, 1
        %v2031 = vadd.f32 %v2029, %v2030
        %s2032 = sld [smem:[#allocation6]]
        %v2033 = vstv %s2032
        %v2034 = vadd.f32 %v1968, %v2033
        %v2035 = vadd.f32 %v1977, %v2033
        %v2036 = vadd.f32 %v1986, %v2033
        %v2037 = vadd.f32 %v1995, %v2033
        %v2038 = vadd.f32 %v2004, %v2033
        %v2039 = vadd.f32 %v2013, %v2033
        %v2040 = vadd.f32 %v2022, %v2033
        %v2041 = vadd.f32 %v2031, %v2033
        %2042 = vset.pattern.permute.xlu0 1
        %2043 = vperm.xlu0 %2042, %v928
        %v2044 = vpop.permute.xlu0 %2043
        %2046 = vset.pattern.permute.xlu0 1
        %2047 = vperm.xlu0 %2046, %v929
        %v2048 = vpop.permute.xlu0 %2047
        %v2050 = vmul.f32 %v1918, %v2044
        %v2051 = vmul.f32 %v1919, %v2048
        %v2052 = vmul.f32 %v1920, %v2044
        %v2053 = vmul.f32 %v1921, %v2048
        %v2054 = vmul.f32 %v1922, %v2044
        %v2055 = vmul.f32 %v1923, %v2048
        %v2056 = vmul.f32 %v1924, %v2044
        %v2057 = vmul.f32 %v1925, %v2048
        %v2058 = vmul.f32 %v1926, %v2044
        %v2059 = vmul.f32 %v1927, %v2048
        %v2060 = vmul.f32 %v1928, %v2044
        %v2061 = vmul.f32 %v1929, %v2048
        %v2062 = vmul.f32 %v1930, %v2044
        %v2063 = vmul.f32 %v1931, %v2048
        %v2064 = vmul.f32 %v1932, %v2044
        %v2065 = vmul.f32 %v1933, %v2048
        %v2066 = vsel %vm613, %v2050, 0.0
        %v2067 = vsel %vm613, %v2051, 0.0
        %v2068 = vadd.f32 %v2066, %v2067
        %v2069 = vrot.slane %v2068, 4
        %v2070 = vadd.f32 %v2068, %v2069
        %v2071 = vrot.slane %v2070, 2
        %v2072 = vadd.f32 %v2070, %v2071
        %v2073 = vrot.slane %v2072, 1
        %v2074 = vadd.f32 %v2072, %v2073
        %v2075 = vsel %vm613, %v2052, 0.0
        %v2076 = vsel %vm613, %v2053, 0.0
        %v2077 = vadd.f32 %v2075, %v2076
        %v2078 = vrot.slane %v2077, 4
        %v2079 = vadd.f32 %v2077, %v2078
        %v2080 = vrot.slane %v2079, 2
        %v2081 = vadd.f32 %v2079, %v2080
        %v2082 = vrot.slane %v2081, 1
        %v2083 = vadd.f32 %v2081, %v2082
        %v2084 = vsel %vm613, %v2054, 0.0
        %v2085 = vsel %vm613, %v2055, 0.0
        %v2086 = vadd.f32 %v2084, %v2085
        %v2087 = vrot.slane %v2086, 4
        %v2088 = vadd.f32 %v2086, %v2087
        %v2089 = vrot.slane %v2088, 2
        %v2090 = vadd.f32 %v2088, %v2089
        %v2091 = vrot.slane %v2090, 1
        %v2092 = vadd.f32 %v2090, %v2091
        %v2093 = vsel %vm613, %v2056, 0.0
        %v2094 = vsel %vm613, %v2057, 0.0
        %v2095 = vadd.f32 %v2093, %v2094
        %v2096 = vrot.slane %v2095, 4
        %v2097 = vadd.f32 %v2095, %v2096
        %v2098 = vrot.slane %v2097, 2
        %v2099 = vadd.f32 %v2097, %v2098
        %v2100 = vrot.slane %v2099, 1
        %v2101 = vadd.f32 %v2099, %v2100
        %v2102 = vsel %vm613, %v2058, 0.0
        %v2103 = vsel %vm613, %v2059, 0.0
        %v2104 = vadd.f32 %v2102, %v2103
        %v2105 = vrot.slane %v2104, 4
        %v2106 = vadd.f32 %v2104, %v2105
        %v2107 = vrot.slane %v2106, 2
        %v2108 = vadd.f32 %v2106, %v2107
        %v2109 = vrot.slane %v2108, 1
        %v2110 = vadd.f32 %v2108, %v2109
        %v2111 = vsel %vm613, %v2060, 0.0
        %v2112 = vsel %vm613, %v2061, 0.0
        %v2113 = vadd.f32 %v2111, %v2112
        %v2114 = vrot.slane %v2113, 4
        %v2115 = vadd.f32 %v2113, %v2114
        %v2116 = vrot.slane %v2115, 2
        %v2117 = vadd.f32 %v2115, %v2116
        %v2118 = vrot.slane %v2117, 1
        %v2119 = vadd.f32 %v2117, %v2118
        %v2120 = vsel %vm613, %v2062, 0.0
        %v2121 = vsel %vm613, %v2063, 0.0
        %v2122 = vadd.f32 %v2120, %v2121
        %v2123 = vrot.slane %v2122, 4
        %v2124 = vadd.f32 %v2122, %v2123
        %v2125 = vrot.slane %v2124, 2
        %v2126 = vadd.f32 %v2124, %v2125
        %v2127 = vrot.slane %v2126, 1
        %v2128 = vadd.f32 %v2126, %v2127
        %v2129 = vsel %vm613, %v2064, 0.0
        %v2130 = vsel %vm613, %v2065, 0.0
        %v2131 = vadd.f32 %v2129, %v2130
        %v2132 = vrot.slane %v2131, 4
        %v2133 = vadd.f32 %v2131, %v2132
        %v2134 = vrot.slane %v2133, 2
        %v2135 = vadd.f32 %v2133, %v2134
        %v2136 = vrot.slane %v2135, 1
        %v2137 = vadd.f32 %v2135, %v2136
        %s2138 = sld [smem:[#allocation6 + $0x1]]
        %v2139 = vstv %s2138
        %v2140 = vadd.f32 %v2074, %v2139
        %v2141 = vadd.f32 %v2083, %v2139
        %v2142 = vadd.f32 %v2092, %v2139
        %v2143 = vadd.f32 %v2101, %v2139
        %v2144 = vadd.f32 %v2110, %v2139
        %v2145 = vadd.f32 %v2119, %v2139
        %v2146 = vadd.f32 %v2128, %v2139
        %v2147 = vadd.f32 %v2137, %v2139
        %2148 = vset.pattern.permute.xlu0 2
        %2149 = vperm.xlu0 %2148, %v928
        %v2150 = vpop.permute.xlu0 %2149
        %2152 = vset.pattern.permute.xlu0 2
        %2153 = vperm.xlu0 %2152, %v929
        %v2154 = vpop.permute.xlu0 %2153
        %v2156 = vmul.f32 %v1918, %v2150
        %v2157 = vmul.f32 %v1919, %v2154
        %v2158 = vmul.f32 %v1920, %v2150
        %v2159 = vmul.f32 %v1921, %v2154
        %v2160 = vmul.f32 %v1922, %v2150
        %v2161 = vmul.f32 %v1923, %v2154
        %v2162 = vmul.f32 %v1924, %v2150
        %v2163 = vmul.f32 %v1925, %v2154
        %v2164 = vmul.f32 %v1926, %v2150
        %v2165 = vmul.f32 %v1927, %v2154
        %v2166 = vmul.f32 %v1928, %v2150
        %v2167 = vmul.f32 %v1929, %v2154
        %v2168 = vmul.f32 %v1930, %v2150
        %v2169 = vmul.f32 %v1931, %v2154
        %v2170 = vmul.f32 %v1932, %v2150
        %v2171 = vmul.f32 %v1933, %v2154
        %v2172 = vsel %vm613, %v2156, 0.0
        %v2173 = vsel %vm613, %v2157, 0.0
        %v2174 = vadd.f32 %v2172, %v2173
        %v2175 = vrot.slane %v2174, 4
        %v2176 = vadd.f32 %v2174, %v2175
        %v2177 = vrot.slane %v2176, 2
        %v2178 = vadd.f32 %v2176, %v2177
        %v2179 = vrot.slane %v2178, 1
        %v2180 = vadd.f32 %v2178, %v2179
        %v2181 = vsel %vm613, %v2158, 0.0
        %v2182 = vsel %vm613, %v2159, 0.0
        %v2183 = vadd.f32 %v2181, %v2182
        %v2184 = vrot.slane %v2183, 4
        %v2185 = vadd.f32 %v2183, %v2184
        %v2186 = vrot.slane %v2185, 2
        %v2187 = vadd.f32 %v2185, %v2186
        %v2188 = vrot.slane %v2187, 1
        %v2189 = vadd.f32 %v2187, %v2188
        %v2190 = vsel %vm613, %v2160, 0.0
        %v2191 = vsel %vm613, %v2161, 0.0
        %v2192 = vadd.f32 %v2190, %v2191
        %v2193 = vrot.slane %v2192, 4
        %v2194 = vadd.f32 %v2192, %v2193
        %v2195 = vrot.slane %v2194, 2
        %v2196 = vadd.f32 %v2194, %v2195
        %v2197 = vrot.slane %v2196, 1
        %v2198 = vadd.f32 %v2196, %v2197
        %v2199 = vsel %vm613, %v2162, 0.0
        %v2200 = vsel %vm613, %v2163, 0.0
        %v2201 = vadd.f32 %v2199, %v2200
        %v2202 = vrot.slane %v2201, 4
        %v2203 = vadd.f32 %v2201, %v2202
        %v2204 = vrot.slane %v2203, 2
        %v2205 = vadd.f32 %v2203, %v2204
        %v2206 = vrot.slane %v2205, 1
        %v2207 = vadd.f32 %v2205, %v2206
        %v2208 = vsel %vm613, %v2164, 0.0
        %v2209 = vsel %vm613, %v2165, 0.0
        %v2210 = vadd.f32 %v2208, %v2209
        %v2211 = vrot.slane %v2210, 4
        %v2212 = vadd.f32 %v2210, %v2211
        %v2213 = vrot.slane %v2212, 2
        %v2214 = vadd.f32 %v2212, %v2213
        %v2215 = vrot.slane %v2214, 1
        %v2216 = vadd.f32 %v2214, %v2215
        %v2217 = vsel %vm613, %v2166, 0.0
        %v2218 = vsel %vm613, %v2167, 0.0
        %v2219 = vadd.f32 %v2217, %v2218
        %v2220 = vrot.slane %v2219, 4
        %v2221 = vadd.f32 %v2219, %v2220
        %v2222 = vrot.slane %v2221, 2
        %v2223 = vadd.f32 %v2221, %v2222
        %v2224 = vrot.slane %v2223, 1
        %v2225 = vadd.f32 %v2223, %v2224
        %v2226 = vsel %vm613, %v2168, 0.0
        %v2227 = vsel %vm613, %v2169, 0.0
        %v2228 = vadd.f32 %v2226, %v2227
        %v2229 = vrot.slane %v2228, 4
        %v2230 = vadd.f32 %v2228, %v2229
        %v2231 = vrot.slane %v2230, 2
        %v2232 = vadd.f32 %v2230, %v2231
        %v2233 = vrot.slane %v2232, 1
        %v2234 = vadd.f32 %v2232, %v2233
        %v2235 = vsel %vm613, %v2170, 0.0
        %v2236 = vsel %vm613, %v2171, 0.0
        %v2237 = vadd.f32 %v2235, %v2236
        %v2238 = vrot.slane %v2237, 4
        %v2239 = vadd.f32 %v2237, %v2238
        %v2240 = vrot.slane %v2239, 2
        %v2241 = vadd.f32 %v2239, %v2240
        %v2242 = vrot.slane %v2241, 1
        %v2243 = vadd.f32 %v2241, %v2242
        %s2244 = sld [smem:[#allocation6 + $0x2]]
        %v2245 = vstv %s2244
        %v2246 = vadd.f32 %v2180, %v2245
        %v2247 = vadd.f32 %v2189, %v2245
        %v2248 = vadd.f32 %v2198, %v2245
        %v2249 = vadd.f32 %v2207, %v2245
        %v2250 = vadd.f32 %v2216, %v2245
        %v2251 = vadd.f32 %v2225, %v2245
        %v2252 = vadd.f32 %v2234, %v2245
        %v2253 = vadd.f32 %v2243, %v2245
        %2254 = vset.pattern.permute.xlu0 3
        %2255 = vperm.xlu0 %2254, %v928
        %v2256 = vpop.permute.xlu0 %2255
        %2258 = vset.pattern.permute.xlu0 3
        %2259 = vperm.xlu0 %2258, %v929
        %v2260 = vpop.permute.xlu0 %2259
        %v2262 = vmul.f32 %v1918, %v2256
        %v2263 = vmul.f32 %v1919, %v2260
        %v2264 = vmul.f32 %v1920, %v2256
        %v2265 = vmul.f32 %v1921, %v2260
        %v2266 = vmul.f32 %v1922, %v2256
        %v2267 = vmul.f32 %v1923, %v2260
        %v2268 = vmul.f32 %v1924, %v2256
        %v2269 = vmul.f32 %v1925, %v2260
        %v2270 = vmul.f32 %v1926, %v2256
        %v2271 = vmul.f32 %v1927, %v2260
        %v2272 = vmul.f32 %v1928, %v2256
        %v2273 = vmul.f32 %v1929, %v2260
        %v2274 = vmul.f32 %v1930, %v2256
        %v2275 = vmul.f32 %v1931, %v2260
        %v2276 = vmul.f32 %v1932, %v2256
        %v2277 = vmul.f32 %v1933, %v2260
        %v2278 = vsel %vm613, %v2262, 0.0
        %v2279 = vsel %vm613, %v2263, 0.0
        %v2280 = vadd.f32 %v2278, %v2279
        %v2281 = vrot.slane %v2280, 4
        %v2282 = vadd.f32 %v2280, %v2281
        %v2283 = vrot.slane %v2282, 2
        %v2284 = vadd.f32 %v2282, %v2283
        %v2285 = vrot.slane %v2284, 1
        %v2286 = vadd.f32 %v2284, %v2285
        %v2287 = vsel %vm613, %v2264, 0.0
        %v2288 = vsel %vm613, %v2265, 0.0
        %v2289 = vadd.f32 %v2287, %v2288
        %v2290 = vrot.slane %v2289, 4
        %v2291 = vadd.f32 %v2289, %v2290
        %v2292 = vrot.slane %v2291, 2
        %v2293 = vadd.f32 %v2291, %v2292
        %v2294 = vrot.slane %v2293, 1
        %v2295 = vadd.f32 %v2293, %v2294
        %v2296 = vsel %vm613, %v2266, 0.0
        %v2297 = vsel %vm613, %v2267, 0.0
        %v2298 = vadd.f32 %v2296, %v2297
        %v2299 = vrot.slane %v2298, 4
        %v2300 = vadd.f32 %v2298, %v2299
        %v2301 = vrot.slane %v2300, 2
        %v2302 = vadd.f32 %v2300, %v2301
        %v2303 = vrot.slane %v2302, 1
        %v2304 = vadd.f32 %v2302, %v2303
        %v2305 = vsel %vm613, %v2268, 0.0
        %v2306 = vsel %vm613, %v2269, 0.0
        %v2307 = vadd.f32 %v2305, %v2306
        %v2308 = vrot.slane %v2307, 4
        %v2309 = vadd.f32 %v2307, %v2308
        %v2310 = vrot.slane %v2309, 2
        %v2311 = vadd.f32 %v2309, %v2310
        %v2312 = vrot.slane %v2311, 1
        %v2313 = vadd.f32 %v2311, %v2312
        %v2314 = vsel %vm613, %v2270, 0.0
        %v2315 = vsel %vm613, %v2271, 0.0
        %v2316 = vadd.f32 %v2314, %v2315
        %v2317 = vrot.slane %v2316, 4
        %v2318 = vadd.f32 %v2316, %v2317
        %v2319 = vrot.slane %v2318, 2
        %v2320 = vadd.f32 %v2318, %v2319
        %v2321 = vrot.slane %v2320, 1
        %v2322 = vadd.f32 %v2320, %v2321
        %v2323 = vsel %vm613, %v2272, 0.0
        %v2324 = vsel %vm613, %v2273, 0.0
        %v2325 = vadd.f32 %v2323, %v2324
        %v2326 = vrot.slane %v2325, 4
        %v2327 = vadd.f32 %v2325, %v2326
        %v2328 = vrot.slane %v2327, 2
        %v2329 = vadd.f32 %v2327, %v2328
        %v2330 = vrot.slane %v2329, 1
        %v2331 = vadd.f32 %v2329, %v2330
        %v2332 = vsel %vm613, %v2274, 0.0
        %v2333 = vsel %vm613, %v2275, 0.0
        %v2334 = vadd.f32 %v2332, %v2333
        %v2335 = vrot.slane %v2334, 4
        %v2336 = vadd.f32 %v2334, %v2335
        %v2337 = vrot.slane %v2336, 2
        %v2338 = vadd.f32 %v2336, %v2337
        %v2339 = vrot.slane %v2338, 1
        %v2340 = vadd.f32 %v2338, %v2339
        %v2341 = vsel %vm613, %v2276, 0.0
        %v2342 = vsel %vm613, %v2277, 0.0
        %v2343 = vadd.f32 %v2341, %v2342
        %v2344 = vrot.slane %v2343, 4
        %v2345 = vadd.f32 %v2343, %v2344
        %v2346 = vrot.slane %v2345, 2
        %v2347 = vadd.f32 %v2345, %v2346
        %v2348 = vrot.slane %v2347, 1
        %v2349 = vadd.f32 %v2347, %v2348
        %s2350 = sld [smem:[#allocation6 + $0x3]]
        %v2351 = vstv %s2350
        %v2352 = vadd.f32 %v2286, %v2351
        %v2353 = vadd.f32 %v2295, %v2351
        %v2354 = vadd.f32 %v2304, %v2351
        %v2355 = vadd.f32 %v2313, %v2351
        %v2356 = vadd.f32 %v2322, %v2351
        %v2357 = vadd.f32 %v2331, %v2351
        %v2358 = vadd.f32 %v2340, %v2351
        %v2359 = vadd.f32 %v2349, %v2351
        %s2360 = smul.u32 %s30, 8
        %v2361 = vlaneseq
        %v2362 = vshrl.u32 %v2361, 7
        %v2363 = vstv %s2360
        %v2364 = vadd.s32 %v2363, %v2362
        %s2365 = smul.u32 %s31, 8
        %v2366 = vlaneseq
        %v2367 = vand.u32 %v2366, 127
        %v2368 = vstv %s2365
        %v2369 = vadd.s32 %v2368, %v2367
        %vm2370 = vcmp.ge.s32.totalorder %v2364, 1
        %vm2371 = vcmp.ge.s32.totalorder %v2369, 1
        %vm2372 = vmand %vm2370, %vm2371
        %v2373 = vsel %vm2372, 1, 0
        %vm2374 = vcmp.eq.s32.totalorder %v2373, 1
        %v2407 = vrot.slane %v2035, 7
        %vm2408 = vcmask 1041409
        %v2409 = vsel %vm2408, %v2407, %v2034
        %v2410 = vrot.slane %v2036, 6
        %vm2411 = vcmask 1042434
        %v2412 = vsel %vm2411, %v2410, %v2409
        %v2413 = vrot.slane %v2037, 5
        %vm2414 = vcmask 1043459
        %v2415 = vsel %vm2414, %v2413, %v2412
        %v2416 = vrot.slane %v2038, 4
        %vm2417 = vcmask 1044484
        %v2418 = vsel %vm2417, %v2416, %v2415
        %v2419 = vrot.slane %v2039, 3
        %vm2420 = vcmask 1045509
        %v2421 = vsel %vm2420, %v2419, %v2418
        %v2422 = vrot.slane %v2040, 2
        %vm2423 = vcmask 1046534
        %v2424 = vsel %vm2423, %v2422, %v2421
        %v2425 = vrot.slane %v2041, 1
        %vm2426 = vcmask 1047559
        %v2427 = vsel %vm2426, %v2425, %v2424
        %v2428 = vrot.slane %v2141, 7
        %v2429 = vsel %vm2408, %v2428, %v2140
        %v2430 = vrot.slane %v2142, 6
        %v2431 = vsel %vm2411, %v2430, %v2429
        %v2432 = vrot.slane %v2143, 5
        %v2433 = vsel %vm2414, %v2432, %v2431
        %v2434 = vrot.slane %v2144, 4
        %v2435 = vsel %vm2417, %v2434, %v2433
        %v2436 = vrot.slane %v2145, 3
        %v2437 = vsel %vm2420, %v2436, %v2435
        %v2438 = vrot.slane %v2146, 2
        %v2439 = vsel %vm2423, %v2438, %v2437
        %v2440 = vrot.slane %v2147, 1
        %v2441 = vsel %vm2426, %v2440, %v2439
        %v2442 = vrot.slane %v2247, 7
        %v2443 = vsel %vm2408, %v2442, %v2246
        %v2444 = vrot.slane %v2248, 6
        %v2445 = vsel %vm2411, %v2444, %v2443
        %v2446 = vrot.slane %v2249, 5
        %v2447 = vsel %vm2414, %v2446, %v2445
        %v2448 = vrot.slane %v2250, 4
        %v2449 = vsel %vm2417, %v2448, %v2447
        %v2450 = vrot.slane %v2251, 3
        %v2451 = vsel %vm2420, %v2450, %v2449
        %v2452 = vrot.slane %v2252, 2
        %v2453 = vsel %vm2423, %v2452, %v2451
        %v2454 = vrot.slane %v2253, 1
        %v2455 = vsel %vm2426, %v2454, %v2453
        %v2456 = vrot.slane %v2353, 7
        %v2457 = vsel %vm2408, %v2456, %v2352
        %v2458 = vrot.slane %v2354, 6
        %v2459 = vsel %vm2411, %v2458, %v2457
        %v2460 = vrot.slane %v2355, 5
        %v2461 = vsel %vm2414, %v2460, %v2459
        %v2462 = vrot.slane %v2356, 4
        %v2463 = vsel %vm2417, %v2462, %v2461
        %v2464 = vrot.slane %v2357, 3
        %v2465 = vsel %vm2420, %v2464, %v2463
        %v2466 = vrot.slane %v2358, 2
        %v2467 = vsel %vm2423, %v2466, %v2465
        %v2468 = vrot.slane %v2359, 1
        %v2469 = vsel %vm2426, %v2468, %v2467
        %v2474 = vsel %vm2374, %v2427, 0.0
        %v2475 = vsel %vm2374, %v2441, 0.0
        %v2476 = vsel %vm2374, %v2455, 0.0
        %v2477 = vsel %vm2374, %v2469, 0.0
        %s2478 = sld [smem:[#allocation5]]
        %v2479 = vstv %s2478
        %v2480 = vmul.f32 %v2479, %v2474
        %v2481 = vmul.f32 %v2479, %v2475
        %v2482 = vmul.f32 %v2479, %v2476
        %v2483 = vmul.f32 %v2479, %v2477
        %v2484 = vadd.f32 %v918, %v2480
        %v2485 = vadd.f32 %v919, %v2481
        %v2486 = vadd.f32 %v920, %v2482
        %v2487 = vadd.f32 %v921, %v2483
        %v2488 = vld [vmem:[%s574] sm:$0x1]
        %v2490 = vlaneseq
        %v2491 = vshrl.u32 %v2490, 7
        %v2492 = vsub.s32 0, %v2491
        %v2493 = vrot.slane %v2488, %v2492
        %v2495 = vadd.f32 %v2484, %v2493
        %v2496 = vadd.f32 %v2485, %v2493
        %v2497 = vadd.f32 %v2486, %v2493
        %v2498 = vadd.f32 %v2487, %v2493
        %v2499 = vld [vmem:[#allocation2] sm:$0xff]
        %v2500 = vld [vmem:[#allocation2 + $0x8] sm:$0xff]
        %v2501 = vld [vmem:[#allocation2 + $0x10] sm:$0xff]
        %v2502 = vld [vmem:[#allocation2 + $0x18] sm:$0xff]
        %v2503 = vsel %vm613, %v2495, -inf
        %2504 = vmax.xlane.f32.xlu0 %v2503
        %v2505 = vpop.xlane.xlu0 %2504
        %v2506 = vsel %vm613, %v2496, -inf
        %2507 = vmax.xlane.f32.xlu0 %v2506
        %v2508 = vpop.xlane.xlu0 %2507
        %v2509 = vsel %vm613, %v2497, -inf
        %2510 = vmax.xlane.f32.xlu0 %v2509
        %v2511 = vpop.xlane.xlu0 %2510
        %v2512 = vsel %vm613, %v2498, -inf
        %2513 = vmax.xlane.f32.xlu0 %v2512
        %v2514 = vpop.xlane.xlu0 %2513
        %v2515 = vmax.f32 %v2499, %v2505
        %v2516 = vmax.f32 %v2500, %v2508
        %v2517 = vmax.f32 %v2501, %v2511
        %v2518 = vmax.f32 %v2502, %v2514
        %v2519 = vsub.f32 %v2499, %v2515
        %v2520 = vsub.f32 %v2500, %v2516
        %v2521 = vsub.f32 %v2501, %v2517
        %v2522 = vsub.f32 %v2502, %v2518
        %v2523 = vmul.f32 %v2519, 1.442695
        %v2524 = vpow.pop %v2523
        %v2525 = vmul.f32 %v2520, 1.442695
        %v2526 = vpow.pop %v2525
        %v2527 = vmul.f32 %v2521, 1.442695
        %v2528 = vpow.pop %v2527
        %v2529 = vmul.f32 %v2522, 1.442695
        %v2530 = vpow.pop %v2529
        %2532 = vset.pattern.permute.xlu0 0
        %2533 = vperm.xlu0 %2532, %v2515
        %v2534 = vpop.permute.xlu0 %2533
        %2537 = vset.pattern.permute.xlu0 0
        %2538 = vperm.xlu0 %2537, %v2516
        %v2539 = vpop.permute.xlu0 %2538
        %2542 = vset.pattern.permute.xlu0 0
        %2543 = vperm.xlu0 %2542, %v2517
        %v2544 = vpop.permute.xlu0 %2543
        %2547 = vset.pattern.permute.xlu0 0
        %2548 = vperm.xlu0 %2547, %v2518
        %v2549 = vpop.permute.xlu0 %2548
        %v2551 = vsub.f32 %v2495, %v2534
        %v2552 = vsub.f32 %v2496, %v2539
        %v2553 = vsub.f32 %v2497, %v2544
        %v2554 = vsub.f32 %v2498, %v2549
        %v2555 = vmul.f32 %v2551, 1.442695
        %v2556 = vpow.pop %v2555
        %v2557 = vmul.f32 %v2552, 1.442695
        %v2558 = vpow.pop %v2557
        %v2559 = vmul.f32 %v2553, 1.442695
        %v2560 = vpow.pop %v2559
        %v2561 = vmul.f32 %v2554, 1.442695
        %v2562 = vpow.pop %v2561
        %v2563 = vld [vmem:[#allocation3] sm:$0xff]
        %v2564 = vld [vmem:[#allocation3 + $0x8] sm:$0xff]
        %v2565 = vld [vmem:[#allocation3 + $0x10] sm:$0xff]
        %v2566 = vld [vmem:[#allocation3 + $0x18] sm:$0xff]
        %v2567 = vmul.f32 %v2524, %v2563
        %v2568 = vmul.f32 %v2526, %v2564
        %v2569 = vmul.f32 %v2528, %v2565
        %v2570 = vmul.f32 %v2530, %v2566
        %v2571 = vsel %vm613, %v2556, 0.0
        %2572 = vadd.xlane.f32.xlu0 %v2571
        %v2573 = vpop.xlane.xlu0 %2572
        %v2574 = vsel %vm613, %v2558, 0.0
        %2575 = vadd.xlane.f32.xlu0 %v2574
        %v2576 = vpop.xlane.xlu0 %2575
        %v2577 = vsel %vm613, %v2560, 0.0
        %2578 = vadd.xlane.f32.xlu0 %v2577
        %v2579 = vpop.xlane.xlu0 %2578
        %v2580 = vsel %vm613, %v2562, 0.0
        %2581 = vadd.xlane.f32.xlu0 %v2580
        %v2582 = vpop.xlane.xlu0 %2581
        %v2583 = vadd.f32 %v2567, %v2573
        %v2584 = vadd.f32 %v2568, %v2576
        %v2585 = vadd.f32 %v2569, %v2579
        %v2586 = vadd.f32 %v2570, %v2582
        %vm2587 = vcmask 7168
        %2588 = vst.msk [vmem:[#allocation3] sm:$0xff] %vm2587, %v2583
        %2589 = vst.msk [vmem:[#allocation3 + $0x8] sm:$0xff] %vm2587, %v2584
        %2590 = vst.msk [vmem:[#allocation3 + $0x10] sm:$0xff] %vm2587, %v2585
        %2591 = vst.msk [vmem:[#allocation3 + $0x18] sm:$0xff] %vm2587, %v2586
        %v2592 = vld [vmem:[#allocation4] sm:$0xff]
        %v2593 = vld [vmem:[#allocation4 + $0x8] sm:$0xff]
        %v2594 = vld [vmem:[#allocation4 + $0x10] sm:$0xff]
        %v2595 = vld [vmem:[#allocation4 + $0x18] sm:$0xff]
        %2597 = vset.pattern.permute.xlu0 0
        %2598 = vperm.xlu0 %2597, %v2524
        %v2599 = vpop.permute.xlu0 %2598
        %2602 = vset.pattern.permute.xlu0 0
        %2603 = vperm.xlu0 %2602, %v2526
        %v2604 = vpop.permute.xlu0 %2603
        %2607 = vset.pattern.permute.xlu0 0
        %2608 = vperm.xlu0 %2607, %v2528
        %v2609 = vpop.permute.xlu0 %2608
        %2612 = vset.pattern.permute.xlu0 0
        %2613 = vperm.xlu0 %2612, %v2530
        %v2614 = vpop.permute.xlu0 %2613
        %v2616 = vmul.f32 %v2599, %v2592
        %v2617 = vmul.f32 %v2604, %v2593
        %v2618 = vmul.f32 %v2609, %v2594
        %v2619 = vmul.f32 %v2614, %v2595
        %v2621 = vsel %vm613, %v2556, 0
        %2623 = vmatprep.subr.mxu0 0.0
        %2624 = vmatpush1.msra.mxu0 %v609
        %2625 = vmatprep.subr.mxu0 0.0
        %2626 = vmatpush1.msra.mxu0 0.0
        %2627 = vmatprep.subr.mxu0 0.0
        %2628 = vmatpush1.msra.mxu0 0.0
        %2629 = vmatprep.subr.mxu0 0.0
        %2630 = vmatpush1.msra.mxu0 0.0
        %2631 = vmatprep.subr.mxu0 0.0
        %2632 = vmatpush1.msra.mxu0 0.0
        %2633 = vmatprep.subr.mxu0 0.0
        %2634 = vmatpush1.msra.mxu0 0.0
        %2635 = vmatprep.subr.mxu0 0.0
        %2636 = vmatpush1.msra.mxu0 0.0
        %2637 = vmatprep.subr.mxu0 0.0
        %2638 = vmatpush1.msra.mxu0 0.0
        %2639 = vmatprep.subr.mxu0 0.0
        %2640 = vmatpush1.msra.mxu0 0.0
        %2641 = vmatprep.subr.mxu0 0.0
        %2642 = vmatpush1.msra.mxu0 0.0
        %2643 = vmatprep.subr.mxu0 0.0
        %2644 = vmatpush1.msra.mxu0 0.0
        %2645 = vmatprep.subr.mxu0 0.0
        %2646 = vmatpush1.msra.mxu0 0.0
        %2647 = vmatprep.subr.mxu0 0.0
        %2648 = vmatpush1.msra.mxu0 0.0
        %2649 = vmatprep.subr.mxu0 0.0
        %2650 = vmatpush1.msra.mxu0 0.0
        %2651 = vmatprep.subr.mxu0 0.0
        %2652 = vmatpush1.msra.mxu0 0.0
        %2653 = vmatprep.subr.mxu0 0.0
        %2654 = vmatpush1.msra.mxu0 0.0
        %2655 = vmatprep.subr.mxu0 0.0
        %2656 = vmatpush1.msra.mxu0 0.0
        %2657 = vmatprep.subr.mxu0 0.0
        %2658 = vmatpush1.msra.mxu0 0.0
        %2659 = vmatprep.subr.mxu0 0.0
        %2660 = vmatpush1.msra.mxu0 0.0
        %2661 = vmatprep.subr.mxu0 0.0
        %2662 = vmatpush1.msra.mxu0 0.0
        %2663 = vmatprep.subr.mxu0 0.0
        %2664 = vmatpush1.msra.mxu0 0.0
        %2665 = vmatprep.subr.mxu0 0.0
        %2666 = vmatpush1.msra.mxu0 0.0
        %2667 = vmatprep.subr.mxu0 0.0
        %2668 = vmatpush1.msra.mxu0 0.0
        %2669 = vmatprep.subr.mxu0 0.0
        %2670 = vmatpush1.msra.mxu0 0.0
        %2671 = vmatprep.subr.mxu0 0.0
        %2672 = vmatpush1.msra.mxu0 0.0
        %2673 = vmatprep.subr.mxu0 0.0
        %2674 = vmatpush1.msra.mxu0 0.0
        %2675 = vmatprep.subr.mxu0 0.0
        %2676 = vmatpush1.msra.mxu0 0.0
        %2677 = vmatprep.subr.mxu0 0.0
        %2678 = vmatpush1.msra.mxu0 0.0
        %2679 = vmatprep.subr.mxu0 0.0
        %2680 = vmatpush1.msra.mxu0 0.0
        %2681 = vmatprep.subr.mxu0 0.0
        %2682 = vmatpush1.msra.mxu0 0.0
        %2683 = vmatprep.subr.mxu0 0.0
        %2684 = vmatpush1.msra.mxu0 0.0
        %2685 = vmatprep.subr.mxu0 0.0
        %2686 = vmatpush1.msra.mxu0 0.0
        %2687 = vmatprep.mubr.f32.mxu0 0.0
        %2688 = vmatmul.mubr.f32.gmra.mrb[0].mxu0 %v2621
        %v2689 = vpop.f32.mrb[0].mxu0
        %v2690 = vadd.f32 0.0, %v2689
        %v2691 = vpop.f32.mrb[0].mxu0
        %2692 = vdwg.mxu0
        %v2694 = vsel %vm613, %v2558, 0
        %2696 = vmatprep.subr.mxu0 0.0
        %2697 = vmatpush1.msra.mxu0 %v610
        %2698 = vmatprep.subr.mxu0 0.0
        %2699 = vmatpush1.msra.mxu0 0.0
        %2700 = vmatprep.subr.mxu0 0.0
        %2701 = vmatpush1.msra.mxu0 0.0
        %2702 = vmatprep.subr.mxu0 0.0
        %2703 = vmatpush1.msra.mxu0 0.0
        %2704 = vmatprep.subr.mxu0 0.0
        %2705 = vmatpush1.msra.mxu0 0.0
        %2706 = vmatprep.subr.mxu0 0.0
        %2707 = vmatpush1.msra.mxu0 0.0
        %2708 = vmatprep.subr.mxu0 0.0
        %2709 = vmatpush1.msra.mxu0 0.0
        %2710 = vmatprep.subr.mxu0 0.0
        %2711 = vmatpush1.msra.mxu0 0.0
        %2712 = vmatprep.subr.mxu0 0.0
        %2713 = vmatpush1.msra.mxu0 0.0
        %2714 = vmatprep.subr.mxu0 0.0
        %2715 = vmatpush1.msra.mxu0 0.0
        %2716 = vmatprep.subr.mxu0 0.0
        %2717 = vmatpush1.msra.mxu0 0.0
        %2718 = vmatprep.subr.mxu0 0.0
        %2719 = vmatpush1.msra.mxu0 0.0
        %2720 = vmatprep.subr.mxu0 0.0
        %2721 = vmatpush1.msra.mxu0 0.0
        %2722 = vmatprep.subr.mxu0 0.0
        %2723 = vmatpush1.msra.mxu0 0.0
        %2724 = vmatprep.subr.mxu0 0.0
        %2725 = vmatpush1.msra.mxu0 0.0
        %2726 = vmatprep.subr.mxu0 0.0
        %2727 = vmatpush1.msra.mxu0 0.0
        %2728 = vmatprep.subr.mxu0 0.0
        %2729 = vmatpush1.msra.mxu0 0.0
        %2730 = vmatprep.subr.mxu0 0.0
        %2731 = vmatpush1.msra.mxu0 0.0
        %2732 = vmatprep.subr.mxu0 0.0
        %2733 = vmatpush1.msra.mxu0 0.0
        %2734 = vmatprep.subr.mxu0 0.0
        %2735 = vmatpush1.msra.mxu0 0.0
        %2736 = vmatprep.subr.mxu0 0.0
        %2737 = vmatpush1.msra.mxu0 0.0
        %2738 = vmatprep.subr.mxu0 0.0
        %2739 = vmatpush1.msra.mxu0 0.0
        %2740 = vmatprep.subr.mxu0 0.0
        %2741 = vmatpush1.msra.mxu0 0.0
        %2742 = vmatprep.subr.mxu0 0.0
        %2743 = vmatpush1.msra.mxu0 0.0
        %2744 = vmatprep.subr.mxu0 0.0
        %2745 = vmatpush1.msra.mxu0 0.0
        %2746 = vmatprep.subr.mxu0 0.0
        %2747 = vmatpush1.msra.mxu0 0.0
        %2748 = vmatprep.subr.mxu0 0.0
        %2749 = vmatpush1.msra.mxu0 0.0
        %2750 = vmatprep.subr.mxu0 0.0
        %2751 = vmatpush1.msra.mxu0 0.0
        %2752 = vmatprep.subr.mxu0 0.0
        %2753 = vmatpush1.msra.mxu0 0.0
        %2754 = vmatprep.subr.mxu0 0.0
        %2755 = vmatpush1.msra.mxu0 0.0
        %2756 = vmatprep.subr.mxu0 0.0
        %2757 = vmatpush1.msra.mxu0 0.0
        %2758 = vmatprep.subr.mxu0 0.0
        %2759 = vmatpush1.msra.mxu0 0.0
        %2760 = vmatprep.mubr.f32.mxu0 0.0
        %2761 = vmatmul.mubr.f32.gmra.mrb[0].mxu0 %v2694
        %v2762 = vpop.f32.mrb[0].mxu0
        %v2763 = vadd.f32 0.0, %v2762
        %v2764 = vpop.f32.mrb[0].mxu0
        %2765 = vdwg.mxu0
        %v2767 = vsel %vm613, %v2560, 0
        %2769 = vmatprep.subr.mxu0 0.0
        %2770 = vmatpush1.msra.mxu0 %v611
        %2771 = vmatprep.subr.mxu0 0.0
        %2772 = vmatpush1.msra.mxu0 0.0
        %2773 = vmatprep.subr.mxu0 0.0
        %2774 = vmatpush1.msra.mxu0 0.0
        %2775 = vmatprep.subr.mxu0 0.0
        %2776 = vmatpush1.msra.mxu0 0.0
        %2777 = vmatprep.subr.mxu0 0.0
        %2778 = vmatpush1.msra.mxu0 0.0
        %2779 = vmatprep.subr.mxu0 0.0
        %2780 = vmatpush1.msra.mxu0 0.0
        %2781 = vmatprep.subr.mxu0 0.0
        %2782 = vmatpush1.msra.mxu0 0.0
        %2783 = vmatprep.subr.mxu0 0.0
        %2784 = vmatpush1.msra.mxu0 0.0
        %2785 = vmatprep.subr.mxu0 0.0
        %2786 = vmatpush1.msra.mxu0 0.0
        %2787 = vmatprep.subr.mxu0 0.0
        %2788 = vmatpush1.msra.mxu0 0.0
        %2789 = vmatprep.subr.mxu0 0.0
        %2790 = vmatpush1.msra.mxu0 0.0
        %2791 = vmatprep.subr.mxu0 0.0
        %2792 = vmatpush1.msra.mxu0 0.0
        %2793 = vmatprep.subr.mxu0 0.0
        %2794 = vmatpush1.msra.mxu0 0.0
        %2795 = vmatprep.subr.mxu0 0.0
        %2796 = vmatpush1.msra.mxu0 0.0
        %2797 = vmatprep.subr.mxu0 0.0
        %2798 = vmatpush1.msra.mxu0 0.0
        %2799 = vmatprep.subr.mxu0 0.0
        %2800 = vmatpush1.msra.mxu0 0.0
        %2801 = vmatprep.subr.mxu0 0.0
        %2802 = vmatpush1.msra.mxu0 0.0
        %2803 = vmatprep.subr.mxu0 0.0
        %2804 = vmatpush1.msra.mxu0 0.0
        %2805 = vmatprep.subr.mxu0 0.0
        %2806 = vmatpush1.msra.mxu0 0.0
        %2807 = vmatprep.subr.mxu0 0.0
        %2808 = vmatpush1.msra.mxu0 0.0
        %2809 = vmatprep.subr.mxu0 0.0
        %2810 = vmatpush1.msra.mxu0 0.0
        %2811 = vmatprep.subr.mxu0 0.0
        %2812 = vmatpush1.msra.mxu0 0.0
        %2813 = vmatprep.subr.mxu0 0.0
        %2814 = vmatpush1.msra.mxu0 0.0
        %2815 = vmatprep.subr.mxu0 0.0
        %2816 = vmatpush1.msra.mxu0 0.0
        %2817 = vmatprep.subr.mxu0 0.0
        %2818 = vmatpush1.msra.mxu0 0.0
        %2819 = vmatprep.subr.mxu0 0.0
        %2820 = vmatpush1.msra.mxu0 0.0
        %2821 = vmatprep.subr.mxu0 0.0
        %2822 = vmatpush1.msra.mxu0 0.0
        %2823 = vmatprep.subr.mxu0 0.0
        %2824 = vmatpush1.msra.mxu0 0.0
        %2825 = vmatprep.subr.mxu0 0.0
        %2826 = vmatpush1.msra.mxu0 0.0
        %2827 = vmatprep.subr.mxu0 0.0
        %2828 = vmatpush1.msra.mxu0 0.0
        %2829 = vmatprep.subr.mxu0 0.0
        %2830 = vmatpush1.msra.mxu0 0.0
        %2831 = vmatprep.subr.mxu0 0.0
        %2832 = vmatpush1.msra.mxu0 0.0
        %2833 = vmatprep.mubr.f32.mxu0 0.0
        %2834 = vmatmul.mubr.f32.gmra.mrb[0].mxu0 %v2767
        %v2835 = vpop.f32.mrb[0].mxu0
        %v2836 = vadd.f32 0.0, %v2835
        %v2837 = vpop.f32.mrb[0].mxu0
        %2838 = vdwg.mxu0
        %v2840 = vsel %vm613, %v2562, 0
        %2842 = vmatprep.subr.mxu0 0.0
        %2843 = vmatpush1.msra.mxu0 %v612
        %2844 = vmatprep.subr.mxu0 0.0
        %2845 = vmatpush1.msra.mxu0 0.0
        %2846 = vmatprep.subr.mxu0 0.0
        %2847 = vmatpush1.msra.mxu0 0.0
        %2848 = vmatprep.subr.mxu0 0.0
        %2849 = vmatpush1.msra.mxu0 0.0
        %2850 = vmatprep.subr.mxu0 0.0
        %2851 = vmatpush1.msra.mxu0 0.0
        %2852 = vmatprep.subr.mxu0 0.0
        %2853 = vmatpush1.msra.mxu0 0.0
        %2854 = vmatprep.subr.mxu0 0.0
        %2855 = vmatpush1.msra.mxu0 0.0
        %2856 = vmatprep.subr.mxu0 0.0
        %2857 = vmatpush1.msra.mxu0 0.0
        %2858 = vmatprep.subr.mxu0 0.0
        %2859 = vmatpush1.msra.mxu0 0.0
        %2860 = vmatprep.subr.mxu0 0.0
        %2861 = vmatpush1.msra.mxu0 0.0
        %2862 = vmatprep.subr.mxu0 0.0
        %2863 = vmatpush1.msra.mxu0 0.0
        %2864 = vmatprep.subr.mxu0 0.0
        %2865 = vmatpush1.msra.mxu0 0.0
        %2866 = vmatprep.subr.mxu0 0.0
        %2867 = vmatpush1.msra.mxu0 0.0
        %2868 = vmatprep.subr.mxu0 0.0
        %2869 = vmatpush1.msra.mxu0 0.0
        %2870 = vmatprep.subr.mxu0 0.0
        %2871 = vmatpush1.msra.mxu0 0.0
        %2872 = vmatprep.subr.mxu0 0.0
        %2873 = vmatpush1.msra.mxu0 0.0
        %2874 = vmatprep.subr.mxu0 0.0
        %2875 = vmatpush1.msra.mxu0 0.0
        %2876 = vmatprep.subr.mxu0 0.0
        %2877 = vmatpush1.msra.mxu0 0.0
        %2878 = vmatprep.subr.mxu0 0.0
        %2879 = vmatpush1.msra.mxu0 0.0
        %2880 = vmatprep.subr.mxu0 0.0
        %2881 = vmatpush1.msra.mxu0 0.0
        %2882 = vmatprep.subr.mxu0 0.0
        %2883 = vmatpush1.msra.mxu0 0.0
        %2884 = vmatprep.subr.mxu0 0.0
        %2885 = vmatpush1.msra.mxu0 0.0
        %2886 = vmatprep.subr.mxu0 0.0
        %2887 = vmatpush1.msra.mxu0 0.0
        %2888 = vmatprep.subr.mxu0 0.0
        %2889 = vmatpush1.msra.mxu0 0.0
        %2890 = vmatprep.subr.mxu0 0.0
        %2891 = vmatpush1.msra.mxu0 0.0
        %2892 = vmatprep.subr.mxu0 0.0
        %2893 = vmatpush1.msra.mxu0 0.0
        %2894 = vmatprep.subr.mxu0 0.0
        %2895 = vmatpush1.msra.mxu0 0.0
        %2896 = vmatprep.subr.mxu0 0.0
        %2897 = vmatpush1.msra.mxu0 0.0
        %2898 = vmatprep.subr.mxu0 0.0
        %2899 = vmatpush1.msra.mxu0 0.0
        %2900 = vmatprep.subr.mxu0 0.0
        %2901 = vmatpush1.msra.mxu0 0.0
        %2902 = vmatprep.subr.mxu0 0.0
        %2903 = vmatpush1.msra.mxu0 0.0
        %2904 = vmatprep.subr.mxu0 0.0
        %2905 = vmatpush1.msra.mxu0 0.0
        %2906 = vmatprep.mubr.f32.mxu0 0.0
        %2907 = vmatmul.mubr.f32.gmra.mrb[0].mxu0 %v2840
        %v2908 = vpop.f32.mrb[0].mxu0
        %v2909 = vadd.f32 0.0, %v2908
        %v2910 = vpop.f32.mrb[0].mxu0
        %2911 = vdwg.mxu0
        %v2912 = vadd.f32 %v2616, %v2690
        %v2913 = vadd.f32 %v2617, %v2763
        %v2914 = vadd.f32 %v2618, %v2836
        %v2915 = vadd.f32 %v2619, %v2909
        %2916 = vst.msk [vmem:[#allocation4] sm:$0xff] %vm613, %v2912
        %2917 = vst.msk [vmem:[#allocation4 + $0x8] sm:$0xff] %vm613, %v2913
        %2918 = vst.msk [vmem:[#allocation4 + $0x10] sm:$0xff] %vm613, %v2914
        %2919 = vst.msk [vmem:[#allocation4 + $0x18] sm:$0xff] %vm613, %v2915
        %2920 = vst.msk [vmem:[#allocation2] sm:$0xff] %vm2587, %v2515
        %2921 = vst.msk [vmem:[#allocation2 + $0x8] sm:$0xff] %vm2587, %v2516
        %2922 = vst.msk [vmem:[#allocation2 + $0x10] sm:$0xff] %vm2587, %v2517
        %2923 = vst.msk [vmem:[#allocation2 + $0x18] sm:$0xff] %vm2587, %v2518
        // Predicated region
        $region73: #{relpos_transformer.13} parent=63 // pred_check
          %p2924 = pneg %p583
        $region74: #{relpos_transformer.13} parent=63 // pred_check_branch
          %2926 = sbr.rel (%p2924) target = $region76
        $region75: #{relpos_transformer.13} parent=63 // pred_region
          %v2927 = vld [vmem:[#allocation3] sm:$0xff]
          %v2928 = vld [vmem:[#allocation3 + $0x8] sm:$0xff]
          %v2929 = vld [vmem:[#allocation3 + $0x10] sm:$0xff]
          %v2930 = vld [vmem:[#allocation3 + $0x18] sm:$0xff]
          %v2931 = vrcp.pop %v2927
          %v2932 = vrcp.pop %v2928
          %v2933 = vrcp.pop %v2929
          %v2934 = vrcp.pop %v2930
          %v2935 = vld [vmem:[#allocation4] sm:$0xff]
          %v2936 = vld [vmem:[#allocation4 + $0x8] sm:$0xff]
          %v2937 = vld [vmem:[#allocation4 + $0x10] sm:$0xff]
          %v2938 = vld [vmem:[#allocation4 + $0x18] sm:$0xff]
          %2940 = vset.pattern.permute.xlu0 0
          %2941 = vperm.xlu0 %2940, %v2931
          %v2942 = vpop.permute.xlu0 %2941
          %2945 = vset.pattern.permute.xlu0 0
          %2946 = vperm.xlu0 %2945, %v2932
          %v2947 = vpop.permute.xlu0 %2946
          %2950 = vset.pattern.permute.xlu0 0
          %2951 = vperm.xlu0 %2950, %v2933
          %v2952 = vpop.permute.xlu0 %2951
          %2955 = vset.pattern.permute.xlu0 0
          %2956 = vperm.xlu0 %2955, %v2934
          %v2957 = vpop.permute.xlu0 %2956
          %v2959 = vmul.f32 %v2935, %v2942
          %v2960 = vmul.f32 %v2936, %v2947
          %v2961 = vmul.f32 %v2937, %v2952
          %v2962 = vmul.f32 %v2938, %v2957
          %2963 = vst.msk [vmem:[%s582] sm:$0xff] %vm613, %v2959
          %2964 = vst.msk [vmem:[%s582 + $0x8] sm:$0xff] %vm613, %v2960
          %2965 = vst.msk [vmem:[%s582 + $0x10] sm:$0xff] %vm613, %v2961
          %2966 = vst.msk [vmem:[%s582 + $0x18] sm:$0xff] %vm613, %v2962
        $region76: #{relpos_transformer.13} parent=63 // pred_fallthru
          _
        %p2967 = scmp.lt.s32.totalorder %s29, 1
        %s2968 = scalar_select %p2967, %s29, 1
        %p2969 = scmp.lt.s32.totalorder %s30, 0
        %s2970 = scalar_select %p2969, %s30, 0
        %s2971 = smul.addr %s2968, 4
        %s2972 = sadd.s32 %s2970, %s2971
        %s2973 = smul.addr %s2972, 8
        %s2974 = scalar_lea.vmem %s11, %s2973
        // Predicated region
        $region77: #{relpos_transformer.13} parent=63 // pred_check
          %p2975 = pneg %p336
        $region78: #{relpos_transformer.13} parent=63 // pred_check_branch
          %2977 = sbr.rel (%p2975) target = $region80
        $region79: #{relpos_transformer.13} parent=63 // pred_region
          _
        $region80: #{relpos_transformer.13} parent=63 // pred_fallthru
          _
      $region64: #{relpos_transformer.13} parent=5 // pred_fallthru
        _
      %p2978 = scmp.le.s32.totalorder 2, %s19
      // Predicated region
      $region81: #{relpos_transformer.13} parent=5 // pred_check
        %p2979 = pneg %p2978
      $region82: #{relpos_transformer.13} parent=5 // pred_check_branch
        %2981 = sbr.rel (%p2979) target = $region84
      $region83: #{relpos_transformer.13} parent=5 // pred_region
        %s2982 = ssub.s32 %s19, 2
        // Predicated region
        $region85: #{relpos_transformer.13} parent=83 // pred_check
          %p2983 = pneg %p342
        $region86: #{relpos_transformer.13} parent=83 // pred_check_branch
          %2985 = sbr.rel (%p2983) target = $region88
        $region87: #{relpos_transformer.13} parent=83 // pred_region
          %p2986 = scmp.lt.s32.totalorder %s32, 1
          %s2987 = scalar_select %p2986, %s32, 1
          %p2988 = scmp.lt.s32.totalorder %s33, 0
          %s2989 = scalar_select %p2988, %s33, 0
          %s2990 = smul.addr %s2987, 4
          %s2991 = sadd.s32 %s2989, %s2990
          %s2992 = smul.addr %s2991, 8
          %s2993 = scalar_lea.vmem %s11, %s2992
        $region88: #{relpos_transformer.13} parent=83 // pred_fallthru
          _
      $region84: #{relpos_transformer.13} parent=5 // pred_fallthru
        _
    $region6: #{relpos_transformer.13} parent=1 // loop_footer
      %s23 = sadd.s32 1, %s19
    $region7: #{relpos_transformer.13} parent=1 // loop_footer_branch
      %18 = sbr.rel target = $region3
    $region8: #{relpos_transformer.13} parent=1 // loop_exit
      _
    %2994 = vsyncpa [#allocation7], 1
    %s2995 = scalar_lea.sflag [#allocation7], 1
    %2996 = vsyncpa %s2995, 1

</llo_original>
